<compile_context>
chip_gen: v7x
topology: tpu7x:2x2x1
jax: 0.10.0
libtpu: 0.0.40
codegen_flags: <defaults>
</compile_context>

<pallas_src>
import functools

import jax
import jax.numpy as jnp
from jax import lax
from jax.experimental import pallas as pl
from jax.experimental.pallas import tpu as pltpu


def _round_up(n, m):
    return ((n + m - 1) // m) * m


def _pick_time_chunk(t):
    for c in (16, 8, 4, 2, 1):
        if t % c == 0:
            return c
    return 1


# =============================================================================
# Kernel 1: fused bidirectional GRU recurrence (time-chunked grid).
#   gi_* : precomputed input gates (T, B, 3H)   [r|z|n lanes], biases folded in
#   whh_*: (H, 3H) pre-transposed hidden weights
#   bn_* : (1, 3H) = [0 | 0 | b_hn]  (only the n-gate hidden bias stays inside)
# =============================================================================
def _bigru_kernel(gi_f_ref, gi_b_ref, whh_f_ref, whh_b_ref, bn_f_ref, bn_b_ref,
                  out_f_ref, out_b_ref, hf_scr, hb_scr, *, tc, hidden):
    @pl.when(pl.program_id(0) == 0)
    def _():
        hf_scr[...] = jnp.zeros_like(hf_scr)
        hb_scr[...] = jnp.zeros_like(hb_scr)

    whh_f = whh_f_ref[...]
    whh_b = whh_b_ref[...]
    bn_f = bn_f_ref[...]
    bn_b = bn_b_ref[...]
    H = hidden

    def cell(h, gi, whh, bn):
        # single fused (B,H)x(H,3H) MXU matmul for all three gates
        gh = jnp.dot(h, whh, preferred_element_type=jnp.float32) + bn
        r = jax.nn.sigmoid(gi[:, 0:H] + gh[:, 0:H])
        z = jax.nn.sigmoid(gi[:, H:2 * H] + gh[:, H:2 * H])
        n = jnp.tanh(gi[:, 2 * H:] + r * gh[:, 2 * H:])
        return (1.0 - z) * n + z * h

    h_f = hf_scr[...]
    h_b = hb_scr[...]
    # Static (fully unrolled) inner loop over the time chunk; tc <= 16.
    for t in range(tc):
        h_f = cell(h_f, gi_f_ref[t].astype(jnp.float32), whh_f, bn_f)
        out_f_ref[t] = h_f.astype(out_f_ref.dtype)
        tb = tc - 1 - t  # reverse direction walks the (mirrored) chunk backwards
        h_b = cell(h_b, gi_b_ref[tb].astype(jnp.float32), whh_b, bn_b)
        out_b_ref[tb] = h_b.astype(out_b_ref.dtype)

    hf_scr[...] = h_f
    hb_scr[...] = h_b


def bigru_layer(gi_f, gi_b, whh2_f, whh2_b, bn_f, bn_b, *, hidden, tc):
    T, B, three_h = gi_f.shape
    nchunks = T // tc
    kernel = functools.partial(_bigru_kernel, tc=tc, hidden=hidden)
    out_f, out_b = pl.pallas_call(
        kernel,
        out_shape=(
            jax.ShapeDtypeStruct((T, B, hidden), jnp.float32),
            jax.ShapeDtypeStruct((T, B, hidden), jnp.float32),
        ),
        grid=(nchunks,),
        in_specs=[
            pl.BlockSpec((tc, B, three_h), lambda c: (c, 0, 0)),
            pl.BlockSpec((tc, B, three_h), lambda c: (nchunks - 1 - c, 0, 0)),
            pl.BlockSpec((hidden, three_h), lambda c: (0, 0)),
            pl.BlockSpec((hidden, three_h), lambda c: (0, 0)),
            pl.BlockSpec((1, three_h), lambda c: (0, 0)),
            pl.BlockSpec((1, three_h), lambda c: (0, 0)),
        ],
        out_specs=(
            pl.BlockSpec((tc, B, hidden), lambda c: (c, 0, 0)),
            pl.BlockSpec((tc, B, hidden), lambda c: (nchunks - 1 - c, 0, 0)),
        ),
        scratch_shapes=[
            pltpu.VMEM((B, hidden), jnp.float32),
            pltpu.VMEM((B, hidden), jnp.float32),
        ],
        compiler_params=pltpu.CompilerParams(dimension_semantics=("arbitrary",)),
    )(gi_f, gi_b, whh2_f, whh2_b, bn_f, bn_b)
    return out_f, out_b


# =============================================================================
# Kernel 2: row-tiled fused affine stack ("rowwise MLP").
#   Layer 0 may take the input split into several parts (sum of matmuls) so the
#   bidirectional concat never has to be materialized. Intermediates of deeper
#   layers stay in VMEM (fused head).
# =============================================================================
def _make_mlp_kernel(n_parts, n_layers, relus):
    def kernel(*refs):
        xs = refs[:n_parts]
        o_ref = refs[-1]
        idx = n_parts
        y = None
        for p in range(n_parts):
            t = jnp.dot(xs[p][...], refs[idx][...],
                        preferred_element_type=jnp.float32)
            y = t if y is None else y + t
            idx += 1
        y = y + refs[idx][...]
        idx += 1
        if relus[0]:
            y = jnp.maximum(y, 0.0)
        for l in range(1, n_layers):
            y = jnp.dot(y, refs[idx][...],
                        preferred_element_type=jnp.float32) + refs[idx + 1][...]
            idx += 2
            if relus[l]:
                y = jnp.maximum(y, 0.0)
        o_ref[...] = y.astype(o_ref.dtype)

    return kernel


def rowwise_mlp(x_parts, layers, relus, *, row_tile=256, out_dtype=jnp.float32):
    """layers[0] = ([w per part], bias(1,M0)); layers[l>0] = ([w], bias(1,Ml))."""
    n = x_parts[0].shape[0]
    tr = min(row_tile, _round_up(n, 8))
    n_pad = _round_up(n, tr)
    xs = [jnp.pad(x, ((0, n_pad - n), (0, 0))) if n_pad != n else x
          for x in x_parts]
    out_dim = layers[-1][1].shape[1]

    operands = list(xs)
    in_specs = [pl.BlockSpec((tr, x.shape[1]), lambda i: (i, 0)) for x in xs]
    for ws, b in layers:
        for w in ws:
            operands.append(w)
            in_specs.append(pl.BlockSpec(w.shape, lambda i: (0, 0)))
        operands.append(b)
        in_specs.append(pl.BlockSpec(b.shape, lambda i: (0, 0)))

    kernel = _make_mlp_kernel(len(xs), len(layers), tuple(relus))
    out = pl.pallas_call(
        kernel,
        out_shape=jax.ShapeDtypeStruct((n_pad, out_dim), out_dtype),
        grid=(n_pad // tr,),
        in_specs=in_specs,
        out_specs=pl.BlockSpec((tr, out_dim), lambda i: (i, 0)),
        compiler_params=pltpu.CompilerParams(dimension_semantics=("parallel",)),
    )(*operands)
    return out[:n]


# =============================================================================
# Parameter init (PyTorch layout; matches param.data.normal_(0.0, 0.1))
# =============================================================================
def init_params(key, gru_cfg, dense_cfgs, bidirectional=True):
    in_ch, hidden, num_layers = gru_cfg
    dirs = 2 if bidirectional else 1
    params = {"gru": [], "dense": []}
    for layer in range(num_layers):
        layer_in = in_ch if layer == 0 else hidden * dirs
        dir_params = []
        for _ in range(dirs):
            key, k1, k2, k3, k4 = jax.random.split(key, 5)
            wih = 0.1 * jax.random.normal(k1, (3 * hidden, layer_in), jnp.float32)
            whh = 0.1 * jax.random.normal(k2, (3 * hidden, hidden), jnp.float32)
            bih = 0.1 * jax.random.normal(k3, (3 * hidden,), jnp.float32)
            bhh = 0.1 * jax.random.normal(k4, (3 * hidden,), jnp.float32)
            dir_params.append((wih, whh, bih, bhh))
        params["gru"].append(dir_params)
    for fin, fout in dense_cfgs:
        key, k1, k2 = jax.random.split(key, 3)
        w = 0.1 * jax.random.normal(k1, (fin, fout), jnp.float32)
        b = 0.1 * jax.random.normal(k2, (fout,), jnp.float32)
        params["dense"].append((w, b))
    return params


# =============================================================================
# Full forward (mirrors gru_network.forward with h0 = zeros, bidirectional)
# =============================================================================
def gru_network_forward(params, x_btf):
    B, T, _ = x_btf.shape
    x_tbf = jnp.transpose(x_btf, (1, 0, 2))  # time-major
    tc = _pick_time_chunk(T)

    # `parts` = the current activation, kept split by direction (never concat'd)
    parts = [x_tbf.reshape(T * B, x_tbf.shape[-1])]

    for layer in params["gru"]:
        H = layer[0][1].shape[1]
        gi, bns, whh2 = [], [], []
        for d in range(2):
            wih, whh, bih, bhh = layer[d]
            wih_t = wih.T  # (in, 3H) -> MXU-native (K, N) orientation
            if len(parts) == 1:
                w_parts = [wih_t]
            else:  # previous layer is bidirectional: [fwd | bwd] input channels
                w_parts = [wih_t[:H], wih_t[H:]]
            # fold b_ih + (b_hr, b_hz) into the precomputed input gates
            bias_gi = (bih + jnp.concatenate(
                [bhh[:2 * H], jnp.zeros((H,), bhh.dtype)]))[None, :]
            gi_flat = rowwise_mlp(parts, [(w_parts, bias_gi)], [False])
            gi.append(gi_flat.reshape(T, B, 3 * H))
            # only b_hn stays inside the recurrence (inside r * (.))
            bns.append(jnp.concatenate(
                [jnp.zeros((2 * H,), bhh.dtype), bhh[2 * H:]])[None, :])
            whh2.append(whh.T)  # (H, 3H)
        out_f, out_b = bigru_layer(gi[0], gi[1], whh2[0], whh2[1],
                                   bns[0], bns[1], hidden=H, tc=tc)
        parts = [out_f.reshape(T * B, H), out_b.reshape(T * B, H)]

    # Fused dense head; first-layer weight split so no concat is materialized.
    dense = params["dense"]
    w0, b0 = dense[0]
    if len(parts) == 2:
        hh = parts[0].shape[1]
        first_ws = [w0[:hh], w0[hh:]]
    else:
        first_ws = [w0]
    layers = [(first_ws, b0[None, :])] + [([w], b[None, :]) for w, b in dense[1:]]
    relus = [i < len(dense) - 1 for i in range(len(dense))]
    y_flat = rowwise_mlp(parts, layers, relus)

    out_dim = dense[-1][0].shape[1]
    return jnp.transpose(y_flat.reshape(T, B, out_dim), (1, 0, 2))


# =============================================================================
# Pure-JAX reference (PyTorch-layout params, lax.scan) for correctness check.
# =============================================================================
def _ref_gru_direction(x_tbf, wih, whh, bih, bhh, reverse):
    _, B, _ = x_tbf.shape
    H = whh.shape[1]
    xs = x_tbf[::-1] if reverse else x_tbf

    def step(h, xt):
        gi = xt @ wih.T + bih
        gh = h @ whh.T + bhh
        r = jax.nn.sigmoid(gi[:, :H] + gh[:, :H])
        z = jax.nn.sigmoid(gi[:, H:2 * H] + gh[:, H:2 * H])
        n = jnp.tanh(gi[:, 2 * H:] + r * gh[:, 2 * H:])
        h_new = (1.0 - z) * n + z * h
        return h_new, h_new

    h0 = jnp.zeros((B, H), jnp.float32)
    _, ys = lax.scan(step, h0, xs)
    return ys[::-1] if reverse else ys


def _ref_forward(params, x_btf):
    x = jnp.transpose(x_btf, (1, 0, 2))
    for dir_params in params["gru"]:
        outs = [_ref_gru_direction(x, *p, reverse=(d == 1))
                for d, p in enumerate(dir_params)]
        x = jnp.concatenate(outs, axis=-1)
    y = jnp.transpose(x, (1, 0, 2))
    B, T, F = y.shape
    flat = y.reshape(B * T, F)
    nd = len(params["dense"])
    for i, (w, b) in enumerate(params["dense"]):
        flat = flat @ w + b
        if i < nd - 1:
            flat = jnp.maximum(flat, 0.0)
    return flat.reshape(B, T, -1)


if __name__ == "__main__":
    B, T, F, H, L = 2, 8, 16, 32, 2  # batch, seq, input, hidden, gru layers
    # layer_configurations: first = GRU [in, hidden, num_layers]; rest = dense [in, out]
    layer_configurations = [[F, H, L], [2 * H, 32], [32, 8]]

    key = jax.random.PRNGKey(0)
    kp, kx = jax.random.split(key)
    params = init_params(kp, layer_configurations[0], layer_configurations[1:])
    x = jax.random.normal(kx, (B, T, F), jnp.float32)

    out = jax.jit(gru_network_forward)(params, x)
    out = jax.block_until_ready(out)

    ref = _ref_forward(params, x)
    assert out.shape == (B, T, layer_configurations[-1][1]), out.shape
    err = float(jnp.max(jnp.abs(out - ref)))
    assert err < 1e-4, err
    print("KERNEL_OK")
</pallas_src>

<mosaic_0001>
module attributes {stable_mosaic.version = 11 : i64} {
  func.func @kernel(%arg0: i32, %arg1: memref<16x16xf32, #tpu.memory_space<vmem>>, %arg2: memref<16x96xf32, #tpu.memory_space<vmem>>, %arg3: memref<1x96xf32, #tpu.memory_space<vmem>>, %arg4: memref<16x96xf32, #tpu.memory_space<vmem>>) attributes {dimension_semantics = [#tpu.dimension_semantics<parallel>], iteration_bounds = array<i64: 1>, scalar_prefetch = 0 : i64, scratch_operands = 0 : i64, tpu.core_type = #tpu.core_type<tc>, window_params = [{transform_indices = @transform_0, window_bounds = array<i64: 16, 16>}, {pipeline_mode = #tpu.pipeline_mode<synchronous>, transform_indices = @transform_1, window_bounds = array<i64: 16, 96>}, {pipeline_mode = #tpu.pipeline_mode<synchronous>, transform_indices = @transform_2, window_bounds = array<i64: 1, 96>}, {transform_indices = @transform_3, window_bounds = array<i64: 16, 96>}]} {
    %c0 = arith.constant 0 : index
    %c0_0 = arith.constant 0 : index
    %0 = vector.load %arg1[%c0, %c0_0] : memref<16x16xf32, #tpu.memory_space<vmem>>, vector<16x16xf32>
    %c0_1 = arith.constant 0 : index
    %c0_2 = arith.constant 0 : index
    %1 = vector.load %arg2[%c0_1, %c0_2] : memref<16x96xf32, #tpu.memory_space<vmem>>, vector<16x96xf32>
    %cst = arith.constant dense<0.000000e+00> : vector<16x96xf32>
    %2 = tpu.matmul %0, %1, %cst {dimension_numbers = #tpu.dot_dimension_numbers<[1], [0], [0], [1], [0, 0, 1, 1], [], []>} : vector<16x16xf32>, vector<16x96xf32>, vector<16x96xf32> -> vector<16x96xf32>
    %c0_3 = arith.constant 0 : index
    %c0_4 = arith.constant 0 : index
    %3 = vector.load %arg3[%c0_3, %c0_4] : memref<1x96xf32, #tpu.memory_space<vmem>>, vector<1x96xf32>
    %4 = vector.broadcast %3 : vector<1x96xf32> to vector<16x96xf32>
    %5 = arith.addf %2, %4 : vector<16x96xf32>
    %c0_5 = arith.constant 0 : index
    %c0_6 = arith.constant 0 : index
    %6 = vector.load %arg4[%c0_5, %c0_6] : memref<16x96xf32, #tpu.memory_space<vmem>>, vector<16x96xf32>
    tpu.vector_store %arg4[%c0_5, %c0_6], %5 {strides = array<i32>} : memref<16x96xf32, #tpu.memory_space<vmem>>, vector<16x96xf32>,
    return
  }
  func.func @transform_0(%arg0: i32) -> (i32, i32) {
    %c0_i32 = arith.constant 0 : i32
    %c0_i32_0 = arith.constant 0 : i32
    return %arg0, %c0_i32 : i32, i32
  }
  func.func @transform_1(%arg0: i32) -> (i32, i32) {
    %c0_i32 = arith.constant 0 : i32
    %c0_i32_0 = arith.constant 0 : i32
    %c0_i32_1 = arith.constant 0 : i32
    return %c0_i32, %c0_i32_0 : i32, i32
  }
  func.func @transform_2(%arg0: i32) -> (i32, i32) {
    %c0_i32 = arith.constant 0 : i32
    %c0_i32_0 = arith.constant 0 : i32
    %c0_i32_1 = arith.constant 0 : i32
    return %c0_i32, %c0_i32_0 : i32, i32
  }
  func.func @transform_3(%arg0: i32) -> (i32, i32) {
    %c0_i32 = arith.constant 0 : i32
    %c0_i32_0 = arith.constant 0 : i32
    return %arg0, %c0_i32 : i32, i32
  }
}

module attributes {stable_mosaic.version = 11 : i64} {
  func.func @_bigru_kernel(%arg0: i32, %arg1: memref<8x2x96xf32, #tpu.memory_space<vmem>>, %arg2: memref<8x2x96xf32, #tpu.memory_space<vmem>>, %arg3: memref<32x96xf32, #tpu.memory_space<vmem>>, %arg4: memref<32x96xf32, #tpu.memory_space<vmem>>, %arg5: memref<1x96xf32, #tpu.memory_space<vmem>>, %arg6: memref<1x96xf32, #tpu.memory_space<vmem>>, %arg7: memref<8x2x32xf32, #tpu.memory_space<vmem>>, %arg8: memref<8x2x32xf32, #tpu.memory_space<vmem>>, %arg9: memref<2x32xf32, #tpu.memory_space<vmem>>, %arg10: memref<2x32xf32, #tpu.memory_space<vmem>>) attributes {dimension_semantics = [#tpu.dimension_semantics<arbitrary>], iteration_bounds = array<i64: 1>, scalar_prefetch = 0 : i64, scratch_operands = 2 : i64, tpu.core_type = #tpu.core_type<tc>, window_params = [{transform_indices = @transform_0, window_bounds = array<i64: 8, 2, 96>}, {transform_indices = @transform_1, window_bounds = array<i64: 8, 2, 96>}, {pipeline_mode = #tpu.pipeline_mode<synchronous>, transform_indices = @transform_2, window_bounds = array<i64: 32, 96>}, {pipeline_mode = #tpu.pipeline_mode<synchronous>, transform_indices = @transform_3, window_bounds = array<i64: 32, 96>}, {pipeline_mode = #tpu.pipeline_mode<synchronous>, transform_indices = @transform_4, window_bounds = array<i64: 1, 96>}, {pipeline_mode = #tpu.pipeline_mode<synchronous>, transform_indices = @transform_5, window_bounds = array<i64: 1, 96>}, {transform_indices = @transform_6, window_bounds = array<i64: 8, 2, 32>}, {transform_indices = @transform_7, window_bounds = array<i64: 8, 2, 32>}]} {
    %c0_i32 = arith.constant 0 : i32
    %0 = arith.cmpi eq, %arg0, %c0_i32 : i32
    %1 = arith.extui %0 : i1 to i32
    %c0_i32_0 = arith.constant 0 : i32
    %2 = arith.cmpi ne, %1, %c0_i32_0 : i32
    scf.if %2 {
      %cst_168 = arith.constant 0.000000e+00 : f32
      %555 = vector.broadcast %cst_168 : f32 to vector<2x32xf32>
      %c0_169 = arith.constant 0 : index
      %c0_170 = arith.constant 0 : index
      %556 = vector.load %arg9[%c0_169, %c0_170] : memref<2x32xf32, #tpu.memory_space<vmem>>, vector<2x32xf32>
      tpu.vector_store %arg9[%c0_169, %c0_170], %555 {strides = array<i32>} : memref<2x32xf32, #tpu.memory_space<vmem>>, vector<2x32xf32>,
      %cst_171 = arith.constant 0.000000e+00 : f32
      %557 = vector.broadcast %cst_171 : f32 to vector<2x32xf32>
      %c0_172 = arith.constant 0 : index
      %c0_173 = arith.constant 0 : index
      %558 = vector.load %arg10[%c0_172, %c0_173] : memref<2x32xf32, #tpu.memory_space<vmem>>, vector<2x32xf32>
      tpu.vector_store %arg10[%c0_172, %c0_173], %557 {strides = array<i32>} : memref<2x32xf32, #tpu.memory_space<vmem>>, vector<2x32xf32>,
    } else {
    }
    %c0 = arith.constant 0 : index
    %c0_1 = arith.constant 0 : index
    %3 = vector.load %arg3[%c0, %c0_1] : memref<32x96xf32, #tpu.memory_space<vmem>>, vector<32x96xf32>
    %c0_2 = arith.constant 0 : index
    %c0_3 = arith.constant 0 : index
    %4 = vector.load %arg4[%c0_2, %c0_3] : memref<32x96xf32, #tpu.memory_space<vmem>>, vector<32x96xf32>
    %c0_4 = arith.constant 0 : index
    %c0_5 = arith.constant 0 : index
    %5 = vector.load %arg5[%c0_4, %c0_5] : memref<1x96xf32, #tpu.memory_space<vmem>>, vector<1x96xf32>
    %c0_6 = arith.constant 0 : index
    %c0_7 = arith.constant 0 : index
    %6 = vector.load %arg6[%c0_6, %c0_7] : memref<1x96xf32, #tpu.memory_space<vmem>>, vector<1x96xf32>
    %c0_8 = arith.constant 0 : index
    %c0_9 = arith.constant 0 : index
    %7 = vector.load %arg9[%c0_8, %c0_9] : memref<2x32xf32, #tpu.memory_space<vmem>>, vector<2x32xf32>
    %c0_10 = arith.constant 0 : index
    %c0_11 = arith.constant 0 : index
    %8 = vector.load %arg10[%c0_10, %c0_11] : memref<2x32xf32, #tpu.memory_space<vmem>>, vector<2x32xf32>
    %c0_12 = arith.constant 0 : index
    %c0_13 = arith.constant 0 : index
    %c0_14 = arith.constant 0 : index
    %9 = vector.load %arg1[%c0_12, %c0_13, %c0_14] : memref<8x2x96xf32, #tpu.memory_space<vmem>>, vector<1x2x96xf32>
    %10 = vector.shape_cast %9 : vector<1x2x96xf32> to vector<2x96xf32>
    %cst = arith.constant dense<0.000000e+00> : vector<2x96xf32>
    %11 = tpu.matmul %7, %3, %cst {dimension_numbers = #tpu.dot_dimension_numbers<[1], [0], [0], [1], [0, 0, 1, 1], [], []>} : vector<2x32xf32>, vector<32x96xf32>, vector<2x96xf32> -> vector<2x96xf32>
    %12 = vector.broadcast %5 : vector<1x96xf32> to vector<2x96xf32>
    %13 = arith.addf %11, %12 : vector<2x96xf32>
    %14 = vector.extract_strided_slice %10 {offsets = [0, 0], sizes = [2, 32], strides = [1, 1]} : vector<2x96xf32> to vector<2x32xf32>
    %15 = vector.extract_strided_slice %13 {offsets = [0, 0], sizes = [2, 32], strides = [1, 1]} : vector<2x96xf32> to vector<2x32xf32>
    %16 = arith.addf %14, %15 : vector<2x32xf32>
    %17 = arith.negf %16 : vector<2x32xf32>
    %18 = math.exp %17 : vector<2x32xf32>
    %cst_15 = arith.constant 1.000000e+00 : f32
    %19 = vector.broadcast %cst_15 : f32 to vector<2x32xf32>
    %20 = arith.addf %19, %18 : vector<2x32xf32>
    %21 = arith.divf %19, %20 : vector<2x32xf32>
    %22 = vector.extract_strided_slice %10 {offsets = [0, 32], sizes = [2, 32], strides = [1, 1]} : vector<2x96xf32> to vector<2x32xf32>
    %23 = vector.extract_strided_slice %13 {offsets = [0, 32], sizes = [2, 32], strides = [1, 1]} : vector<2x96xf32> to vector<2x32xf32>
    %24 = arith.addf %22, %23 : vector<2x32xf32>
    %25 = arith.negf %24 : vector<2x32xf32>
    %26 = math.exp %25 : vector<2x32xf32>
    %cst_16 = arith.constant 1.000000e+00 : f32
    %27 = vector.broadcast %cst_16 : f32 to vector<2x32xf32>
    %28 = arith.addf %27, %26 : vector<2x32xf32>
    %29 = arith.divf %27, %28 : vector<2x32xf32>
    %30 = vector.extract_strided_slice %10 {offsets = [0, 64], sizes = [2, 32], strides = [1, 1]} : vector<2x96xf32> to vector<2x32xf32>
    %31 = vector.extract_strided_slice %13 {offsets = [0, 64], sizes = [2, 32], strides = [1, 1]} : vector<2x96xf32> to vector<2x32xf32>
    %32 = arith.mulf %21, %31 : vector<2x32xf32>
    %33 = arith.addf %30, %32 : vector<2x32xf32>
    %34 = math.tanh %33 : vector<2x32xf32>
    %cst_17 = arith.constant 1.000000e+00 : f32
    %35 = vector.broadcast %cst_17 : f32 to vector<2x32xf32>
    %36 = arith.subf %35, %29 : vector<2x32xf32>
    %37 = arith.mulf %36, %34 : vector<2x32xf32>
    %38 = arith.mulf %29, %7 : vector<2x32xf32>
    %39 = arith.addf %37, %38 : vector<2x32xf32>
    %c0_18 = arith.constant 0 : index
    %c0_19 = arith.constant 0 : index
    %c0_20 = arith.constant 0 : index
    %40 = vector.load %arg7[%c0_18, %c0_19, %c0_20] : memref<8x2x32xf32, #tpu.memory_space<vmem>>, vector<1x2x32xf32>
    %41 = vector.shape_cast %40 : vector<1x2x32xf32> to vector<2x32xf32>
    %42 = vector.shape_cast %39 : vector<2x32xf32> to vector<1x2x32xf32>
    tpu.vector_store %arg7[%c0_18, %c0_19, %c0_20], %42 {strides = array<i32>} : memref<8x2x32xf32, #tpu.memory_space<vmem>>, vector<1x2x32xf32>,
    %c7 = arith.constant 7 : index
    %c0_21 = arith.constant 0 : index
    %c0_22 = arith.constant 0 : index
    %43 = vector.load %arg2[%c7, %c0_21, %c0_22] : memref<8x2x96xf32, #tpu.memory_space<vmem>>, vector<1x2x96xf32>
    %44 = vector.shape_cast %43 : vector<1x2x96xf32> to vector<2x96xf32>
    %cst_23 = arith.constant dense<0.000000e+00> : vector<2x96xf32>
    %45 = tpu.matmul %8, %4, %cst_23 {dimension_numbers = #tpu.dot_dimension_numbers<[1], [0], [0], [1], [0, 0, 1, 1], [], []>} : vector<2x32xf32>, vector<32x96xf32>, vector<2x96xf32> -> vector<2x96xf32>
    %46 = vector.broadcast %6 : vector<1x96xf32> to vector<2x96xf32>
    %47 = arith.addf %45, %46 : vector<2x96xf32>
    %48 = vector.extract_strided_slice %44 {offsets = [0, 0], sizes = [2, 32], strides = [1, 1]} : vector<2x96xf32> to vector<2x32xf32>
    %49 = vector.extract_strided_slice %47 {offsets = [0, 0], sizes = [2, 32], strides = [1, 1]} : vector<2x96xf32> to vector<2x32xf32>
    %50 = arith.addf %48, %49 : vector<2x32xf32>
    %51 = arith.negf %50 : vector<2x32xf32>
    %52 = math.exp %51 : vector<2x32xf32>
    %cst_24 = arith.constant 1.000000e+00 : f32
    %53 = vector.broadcast %cst_24 : f32 to vector<2x32xf32>
    %54 = arith.addf %53, %52 : vector<2x32xf32>
    %55 = arith.divf %53, %54 : vector<2x32xf32>
    %56 = vector.extract_strided_slice %44 {offsets = [0, 32], sizes = [2, 32], strides = [1, 1]} : vector<2x96xf32> to vector<2x32xf32>
    %57 = vector.extract_strided_slice %47 {offsets = [0, 32], sizes = [2, 32], strides = [1, 1]} : vector<2x96xf32> to vector<2x32xf32>
    %58 = arith.addf %56, %57 : vector<2x32xf32>
    %59 = arith.negf %58 : vector<2x32xf32>
    %60 = math.exp %59 : vector<2x32xf32>
    %cst_25 = arith.constant 1.000000e+00 : f32
    %61 = vector.broadcast %cst_25 : f32 to vector<2x32xf32>
    %62 = arith.addf %61, %60 : vector<2x32xf32>
    %63 = arith.divf %61, %62 : vector<2x32xf32>
    %64 = vector.extract_strided_slice %44 {offsets = [0, 64], sizes = [2, 32], strides = [1, 1]} : vector<2x96xf32> to vector<2x32xf32>
    %65 = vector.extract_strided_slice %47 {offsets = [0, 64], sizes = [2, 32], strides = [1, 1]} : vector<2x96xf32> to vector<2x32xf32>
    %66 = arith.mulf %55, %65 : vector<2x32xf32>
    %67 = arith.addf %64, %66 : vector<2x32xf32>
    %68 = math.tanh %67 : vector<2x32xf32>
    %cst_26 = arith.constant 1.000000e+00 : f32
    %69 = vector.broadcast %cst_26 : f32 to vector<2x32xf32>
    %70 = arith.subf %69, %63 : vector<2x32xf32>
    %71 = arith.mulf %70, %68 : vector<2x32xf32>
    %72 = arith.mulf %63, %8 : vector<2x32xf32>
    %73 = arith.addf %71, %72 : vector<2x32xf32>
    %c7_27 = arith.constant 7 : index
    %c0_28 = arith.constant 0 : index
    %c0_29 = arith.constant 0 : index
    %74 = vector.load %arg8[%c7_27, %c0_28, %c0_29] : memref<8x2x32xf32, #tpu.memory_space<vmem>>, vector<1x2x32xf32>
    %75 = vector.shape_cast %74 : vector<1x2x32xf32> to vector<2x32xf32>
    %76 = vector.shape_cast %73 : vector<2x32xf32> to vector<1x2x32xf32>
    tpu.vector_store %arg8[%c7_27, %c0_28, %c0_29], %76 {strides = array<i32>} : memref<8x2x32xf32, #tpu.memory_space<vmem>>, vector<1x2x32xf32>,
    %c1 = arith.constant 1 : index
    %c0_30 = arith.constant 0 : index
    %c0_31 = arith.constant 0 : index
    %77 = vector.load %arg1[%c1, %c0_30, %c0_31] : memref<8x2x96xf32, #tpu.memory_space<vmem>>, vector<1x2x96xf32>
    %78 = vector.shape_cast %77 : vector<1x2x96xf32> to vector<2x96xf32>
    %cst_32 = arith.constant dense<0.000000e+00> : vector<2x96xf32>
    %79 = tpu.matmul %39, %3, %cst_32 {dimension_numbers = #tpu.dot_dimension_numbers<[1], [0], [0], [1], [0, 0, 1, 1], [], []>} : vector<2x32xf32>, vector<32x96xf32>, vector<2x96xf32> -> vector<2x96xf32>
    %80 = vector.broadcast %5 : vector<1x96xf32> to vector<2x96xf32>
    %81 = arith.addf %79, %80 : vector<2x96xf32>
    %82 = vector.extract_strided_slice %78 {offsets = [0, 0], sizes = [2, 32], strides = [1, 1]} : vector<2x96xf32> to vector<2x32xf32>
    %83 = vector.extract_strided_slice %81 {offsets = [0, 0], sizes = [2, 32], strides = [1, 1]} : vector<2x96xf32> to vector<2x32xf32>
    %84 = arith.addf %82, %83 : vector<2x32xf32>
    %85 = arith.negf %84 : vector<2x32xf32>
    %86 = math.exp %85 : vector<2x32xf32>
    %cst_33 = arith.constant 1.000000e+00 : f32
    %87 = vector.broadcast %cst_33 : f32 to vector<2x32xf32>
    %88 = arith.addf %87, %86 : vector<2x32xf32>
    %89 = arith.divf %87, %88 : vector<2x32xf32>
    %90 = vector.extract_strided_slice %78 {offsets = [0, 32], sizes = [2, 32], strides = [1, 1]} : vector<2x96xf32> to vector<2x32xf32>
    %91 = vector.extract_strided_slice %81 {offsets = [0, 32], sizes = [2, 32], strides = [1, 1]} : vector<2x96xf32> to vector<2x32xf32>
    %92 = arith.addf %90, %91 : vector<2x32xf32>
    %93 = arith.negf %92 : vector<2x32xf32>
    %94 = math.exp %93 : vector<2x32xf32>
    %cst_34 = arith.constant 1.000000e+00 : f32
    %95 = vector.broadcast %cst_34 : f32 to vector<2x32xf32>
    %96 = arith.addf %95, %94 : vector<2x32xf32>
    %97 = arith.divf %95, %96 : vector<2x32xf32>
    %98 = vector.extract_strided_slice %78 {offsets = [0, 64], sizes = [2, 32], strides = [1, 1]} : vector<2x96xf32> to vector<2x32xf32>
    %99 = vector.extract_strided_slice %81 {offsets = [0, 64], sizes = [2, 32], strides = [1, 1]} : vector<2x96xf32> to vector<2x32xf32>
    %100 = arith.mulf %89, %99 : vector<2x32xf32>
    %101 = arith.addf %98, %100 : vector<2x32xf32>
    %102 = math.tanh %101 : vector<2x32xf32>
    %cst_35 = arith.constant 1.000000e+00 : f32
    %103 = vector.broadcast %cst_35 : f32 to vector<2x32xf32>
    %104 = arith.subf %103, %97 : vector<2x32xf32>
    %105 = arith.mulf %104, %102 : vector<2x32xf32>
    %106 = arith.mulf %97, %39 : vector<2x32xf32>
    %107 = arith.addf %105, %106 : vector<2x32xf32>
    %c1_36 = arith.constant 1 : index
    %c0_37 = arith.constant 0 : index
    %c0_38 = arith.constant 0 : index
    %108 = vector.load %arg7[%c1_36, %c0_37, %c0_38] : memref<8x2x32xf32, #tpu.memory_space<vmem>>, vector<1x2x32xf32>
    %109 = vector.shape_cast %108 : vector<1x2x32xf32> to vector<2x32xf32>
    %110 = vector.shape_cast %107 : vector<2x32xf32> to vector<1x2x32xf32>
    tpu.vector_store %arg7[%c1_36, %c0_37, %c0_38], %110 {strides = array<i32>} : memref<8x2x32xf32, #tpu.memory_space<vmem>>, vector<1x2x32xf32>,
    %c6 = arith.constant 6 : index
    %c0_39 = arith.constant 0 : index
    %c0_40 = arith.constant 0 : index
    %111 = vector.load %arg2[%c6, %c0_39, %c0_40] : memref<8x2x96xf32, #tpu.memory_space<vmem>>, vector<1x2x96xf32>
    %112 = vector.shape_cast %111 : vector<1x2x96xf32> to vector<2x96xf32>
    %cst_41 = arith.constant dense<0.000000e+00> : vector<2x96xf32>
    %113 = tpu.matmul %73, %4, %cst_41 {dimension_numbers = #tpu.dot_dimension_numbers<[1], [0], [0], [1], [0, 0, 1, 1], [], []>} : vector<2x32xf32>, vector<32x96xf32>, vector<2x96xf32> -> vector<2x96xf32>
    %114 = vector.broadcast %6 : vector<1x96xf32> to vector<2x96xf32>
    %115 = arith.addf %113, %114 : vector<2x96xf32>
    %116 = vector.extract_strided_slice %112 {offsets = [0, 0], sizes = [2, 32], strides = [1, 1]} : vector<2x96xf32> to vector<2x32xf32>
    %117 = vector.extract_strided_slice %115 {offsets = [0, 0], sizes = [2, 32], strides = [1, 1]} : vector<2x96xf32> to vector<2x32xf32>
    %118 = arith.addf %116, %117 : vector<2x32xf32>
    %119 = arith.negf %118 : vector<2x32xf32>
    %120 = math.exp %119 : vector<2x32xf32>
    %cst_42 = arith.constant 1.000000e+00 : f32
    %121 = vector.broadcast %cst_42 : f32 to vector<2x32xf32>
    %122 = arith.addf %121, %120 : vector<2x32xf32>
    %123 = arith.divf %121, %122 : vector<2x32xf32>
    %124 = vector.extract_strided_slice %112 {offsets = [0, 32], sizes = [2, 32], strides = [1, 1]} : vector<2x96xf32> to vector<2x32xf32>
    %125 = vector.extract_strided_slice %115 {offsets = [0, 32], sizes = [2, 32], strides = [1, 1]} : vector<2x96xf32> to vector<2x32xf32>
    %126 = arith.addf %124, %125 : vector<2x32xf32>
    %127 = arith.negf %126 : vector<2x32xf32>
    %128 = math.exp %127 : vector<2x32xf32>
    %cst_43 = arith.constant 1.000000e+00 : f32
    %129 = vector.broadcast %cst_43 : f32 to vector<2x32xf32>
    %130 = arith.addf %129, %128 : vector<2x32xf32>
    %131 = arith.divf %129, %130 : vector<2x32xf32>
    %132 = vector.extract_strided_slice %112 {offsets = [0, 64], sizes = [2, 32], strides = [1, 1]} : vector<2x96xf32> to vector<2x32xf32>
    %133 = vector.extract_strided_slice %115 {offsets = [0, 64], sizes = [2, 32], strides = [1, 1]} : vector<2x96xf32> to vector<2x32xf32>
    %134 = arith.mulf %123, %133 : vector<2x32xf32>
    %135 = arith.addf %132, %134 : vector<2x32xf32>
    %136 = math.tanh %135 : vector<2x32xf32>
    %cst_44 = arith.constant 1.000000e+00 : f32
    %137 = vector.broadcast %cst_44 : f32 to vector<2x32xf32>
    %138 = arith.subf %137, %131 : vector<2x32xf32>
    %139 = arith.mulf %138, %136 : vector<2x32xf32>
    %140 = arith.mulf %131, %73 : vector<2x32xf32>
    %141 = arith.addf %139, %140 : vector<2x32xf32>
    %c6_45 = arith.constant 6 : index
    %c0_46 = arith.constant 0 : index
    %c0_47 = arith.constant 0 : index
    %142 = vector.load %arg8[%c6_45, %c0_46, %c0_47] : memref<8x2x32xf32, #tpu.memory_space<vmem>>, vector<1x2x32xf32>
    %143 = vector.shape_cast %142 : vector<1x2x32xf32> to vector<2x32xf32>
    %144 = vector.shape_cast %141 : vector<2x32xf32> to vector<1x2x32xf32>
    tpu.vector_store %arg8[%c6_45, %c0_46, %c0_47], %144 {strides = array<i32>} : memref<8x2x32xf32, #tpu.memory_space<vmem>>, vector<1x2x32xf32>,
    %c2 = arith.constant 2 : index
    %c0_48 = arith.constant 0 : index
    %c0_49 = arith.constant 0 : index
    %145 = vector.load %arg1[%c2, %c0_48, %c0_49] : memref<8x2x96xf32, #tpu.memory_space<vmem>>, vector<1x2x96xf32>
    %146 = vector.shape_cast %145 : vector<1x2x96xf32> to vector<2x96xf32>
    %cst_50 = arith.constant dense<0.000000e+00> : vector<2x96xf32>
    %147 = tpu.matmul %107, %3, %cst_50 {dimension_numbers = #tpu.dot_dimension_numbers<[1], [0], [0], [1], [0, 0, 1, 1], [], []>} : vector<2x32xf32>, vector<32x96xf32>, vector<2x96xf32> -> vector<2x96xf32>
    %148 = vector.broadcast %5 : vector<1x96xf32> to vector<2x96xf32>
    %149 = arith.addf %147, %148 : vector<2x96xf32>
    %150 = vector.extract_strided_slice %146 {offsets = [0, 0], sizes = [2, 32], strides = [1, 1]} : vector<2x96xf32> to vector<2x32xf32>
    %151 = vector.extract_strided_slice %149 {offsets = [0, 0], sizes = [2, 32], strides = [1, 1]} : vector<2x96xf32> to vector<2x32xf32>
    %152 = arith.addf %150, %151 : vector<2x32xf32>
    %153 = arith.negf %152 : vector<2x32xf32>
    %154 = math.exp %153 : vector<2x32xf32>
    %cst_51 = arith.constant 1.000000e+00 : f32
    %155 = vector.broadcast %cst_51 : f32 to vector<2x32xf32>
    %156 = arith.addf %155, %154 : vector<2x32xf32>
    %157 = arith.divf %155, %156 : vector<2x32xf32>
    %158 = vector.extract_strided_slice %146 {offsets = [0, 32], sizes = [2, 32], strides = [1, 1]} : vector<2x96xf32> to vector<2x32xf32>
    %159 = vector.extract_strided_slice %149 {offsets = [0, 32], sizes = [2, 32], strides = [1, 1]} : vector<2x96xf32> to vector<2x32xf32>
    %160 = arith.addf %158, %159 : vector<2x32xf32>
    %161 = arith.negf %160 : vector<2x32xf32>
    %162 = math.exp %161 : vector<2x32xf32>
    %cst_52 = arith.constant 1.000000e+00 : f32
    %163 = vector.broadcast %cst_52 : f32 to vector<2x32xf32>
    %164 = arith.addf %163, %162 : vector<2x32xf32>
    %165 = arith.divf %163, %164 : vector<2x32xf32>
    %166 = vector.extract_strided_slice %146 {offsets = [0, 64], sizes = [2, 32], strides = [1, 1]} : vector<2x96xf32> to vector<2x32xf32>
    %167 = vector.extract_strided_slice %149 {offsets = [0, 64], sizes = [2, 32], strides = [1, 1]} : vector<2x96xf32> to vector<2x32xf32>
    %168 = arith.mulf %157, %167 : vector<2x32xf32>
    %169 = arith.addf %166, %168 : vector<2x32xf32>
    %170 = math.tanh %169 : vector<2x32xf32>
    %cst_53 = arith.constant 1.000000e+00 : f32
    %171 = vector.broadcast %cst_53 : f32 to vector<2x32xf32>
    %172 = arith.subf %171, %165 : vector<2x32xf32>
    %173 = arith.mulf %172, %170 : vector<2x32xf32>
    %174 = arith.mulf %165, %107 : vector<2x32xf32>
    %175 = arith.addf %173, %174 : vector<2x32xf32>
    %c2_54 = arith.constant 2 : index
    %c0_55 = arith.constant 0 : index
    %c0_56 = arith.constant 0 : index
    %176 = vector.load %arg7[%c2_54, %c0_55, %c0_56] : memref<8x2x32xf32, #tpu.memory_space<vmem>>, vector<1x2x32xf32>
    %177 = vector.shape_cast %176 : vector<1x2x32xf32> to vector<2x32xf32>
    %178 = vector.shape_cast %175 : vector<2x32xf32> to vector<1x2x32xf32>
    tpu.vector_store %arg7[%c2_54, %c0_55, %c0_56], %178 {strides = array<i32>} : memref<8x2x32xf32, #tpu.memory_space<vmem>>, vector<1x2x32xf32>,
    %c5 = arith.constant 5 : index
    %c0_57 = arith.constant 0 : index
    %c0_58 = arith.constant 0 : index
    %179 = vector.load %arg2[%c5, %c0_57, %c0_58] : memref<8x2x96xf32, #tpu.memory_space<vmem>>, vector<1x2x96xf32>
    %180 = vector.shape_cast %179 : vector<1x2x96xf32> to vector<2x96xf32>
    %cst_59 = arith.constant dense<0.000000e+00> : vector<2x96xf32>
    %181 = tpu.matmul %141, %4, %cst_59 {dimension_numbers = #tpu.dot_dimension_numbers<[1], [0], [0], [1], [0, 0, 1, 1], [], []>} : vector<2x32xf32>, vector<32x96xf32>, vector<2x96xf32> -> vector<2x96xf32>
    %182 = vector.broadcast %6 : vector<1x96xf32> to vector<2x96xf32>
    %183 = arith.addf %181, %182 : vector<2x96xf32>
    %184 = vector.extract_strided_slice %180 {offsets = [0, 0], sizes = [2, 32], strides = [1, 1]} : vector<2x96xf32> to vector<2x32xf32>
    %185 = vector.extract_strided_slice %183 {offsets = [0, 0], sizes = [2, 32], strides = [1, 1]} : vector<2x96xf32> to vector<2x32xf32>
    %186 = arith.addf %184, %185 : vector<2x32xf32>
    %187 = arith.negf %186 : vector<2x32xf32>
    %188 = math.exp %187 : vector<2x32xf32>
    %cst_60 = arith.constant 1.000000e+00 : f32
    %189 = vector.broadcast %cst_60 : f32 to vector<2x32xf32>
    %190 = arith.addf %189, %188 : vector<2x32xf32>
    %191 = arith.divf %189, %190 : vector<2x32xf32>
    %192 = vector.extract_strided_slice %180 {offsets = [0, 32], sizes = [2, 32], strides = [1, 1]} : vector<2x96xf32> to vector<2x32xf32>
    %193 = vector.extract_strided_slice %183 {offsets = [0, 32], sizes = [2, 32], strides = [1, 1]} : vector<2x96xf32> to vector<2x32xf32>
    %194 = arith.addf %192, %193 : vector<2x32xf32>
    %195 = arith.negf %194 : vector<2x32xf32>
    %196 = math.exp %195 : vector<2x32xf32>
    %cst_61 = arith.constant 1.000000e+00 : f32
    %197 = vector.broadcast %cst_61 : f32 to vector<2x32xf32>
    %198 = arith.addf %197, %196 : vector<2x32xf32>
    %199 = arith.divf %197, %198 : vector<2x32xf32>
    %200 = vector.extract_strided_slice %180 {offsets = [0, 64], sizes = [2, 32], strides = [1, 1]} : vector<2x96xf32> to vector<2x32xf32>
    %201 = vector.extract_strided_slice %183 {offsets = [0, 64], sizes = [2, 32], strides = [1, 1]} : vector<2x96xf32> to vector<2x32xf32>
    %202 = arith.mulf %191, %201 : vector<2x32xf32>
    %203 = arith.addf %200, %202 : vector<2x32xf32>
    %204 = math.tanh %203 : vector<2x32xf32>
    %cst_62 = arith.constant 1.000000e+00 : f32
    %205 = vector.broadcast %cst_62 : f32 to vector<2x32xf32>
    %206 = arith.subf %205, %199 : vector<2x32xf32>
    %207 = arith.mulf %206, %204 : vector<2x32xf32>
    %208 = arith.mulf %199, %141 : vector<2x32xf32>
    %209 = arith.addf %207, %208 : vector<2x32xf32>
    %c5_63 = arith.constant 5 : index
    %c0_64 = arith.constant 0 : index
    %c0_65 = arith.constant 0 : index
    %210 = vector.load %arg8[%c5_63, %c0_64, %c0_65] : memref<8x2x32xf32, #tpu.memory_space<vmem>>, vector<1x2x32xf32>
    %211 = vector.shape_cast %210 : vector<1x2x32xf32> to vector<2x32xf32>
    %212 = vector.shape_cast %209 : vector<2x32xf32> to vector<1x2x32xf32>
    tpu.vector_store %arg8[%c5_63, %c0_64, %c0_65], %212 {strides = array<i32>} : memref<8x2x32xf32, #tpu.memory_space<vmem>>, vector<1x2x32xf32>,
    %c3 = arith.constant 3 : index
    %c0_66 = arith.constant 0 : index
    %c0_67 = arith.constant 0 : index
    %213 = vector.load %arg1[%c3, %c0_66, %c0_67] : memref<8x2x96xf32, #tpu.memory_space<vmem>>, vector<1x2x96xf32>
    %214 = vector.shape_cast %213 : vector<1x2x96xf32> to vector<2x96xf32>
    %cst_68 = arith.constant dense<0.000000e+00> : vector<2x96xf32>
    %215 = tpu.matmul %175, %3, %cst_68 {dimension_numbers = #tpu.dot_dimension_numbers<[1], [0], [0], [1], [0, 0, 1, 1], [], []>} : vector<2x32xf32>, vector<32x96xf32>, vector<2x96xf32> -> vector<2x96xf32>
    %216 = vector.broadcast %5 : vector<1x96xf32> to vector<2x96xf32>
    %217 = arith.addf %215, %216 : vector<2x96xf32>
    %218 = vector.extract_strided_slice %214 {offsets = [0, 0], sizes = [2, 32], strides = [1, 1]} : vector<2x96xf32> to vector<2x32xf32>
    %219 = vector.extract_strided_slice %217 {offsets = [0, 0], sizes = [2, 32], strides = [1, 1]} : vector<2x96xf32> to vector<2x32xf32>
    %220 = arith.addf %218, %219 : vector<2x32xf32>
    %221 = arith.negf %220 : vector<2x32xf32>
    %222 = math.exp %221 : vector<2x32xf32>
    %cst_69 = arith.constant 1.000000e+00 : f32
    %223 = vector.broadcast %cst_69 : f32 to vector<2x32xf32>
    %224 = arith.addf %223, %222 : vector<2x32xf32>
    %225 = arith.divf %223, %224 : vector<2x32xf32>
    %226 = vector.extract_strided_slice %214 {offsets = [0, 32], sizes = [2, 32], strides = [1, 1]} : vector<2x96xf32> to vector<2x32xf32>
    %227 = vector.extract_strided_slice %217 {offsets = [0, 32], sizes = [2, 32], strides = [1, 1]} : vector<2x96xf32> to vector<2x32xf32>
    %228 = arith.addf %226, %227 : vector<2x32xf32>
    %229 = arith.negf %228 : vector<2x32xf32>
    %230 = math.exp %229 : vector<2x32xf32>
    %cst_70 = arith.constant 1.000000e+00 : f32
    %231 = vector.broadcast %cst_70 : f32 to vector<2x32xf32>
    %232 = arith.addf %231, %230 : vector<2x32xf32>
    %233 = arith.divf %231, %232 : vector<2x32xf32>
    %234 = vector.extract_strided_slice %214 {offsets = [0, 64], sizes = [2, 32], strides = [1, 1]} : vector<2x96xf32> to vector<2x32xf32>
    %235 = vector.extract_strided_slice %217 {offsets = [0, 64], sizes = [2, 32], strides = [1, 1]} : vector<2x96xf32> to vector<2x32xf32>
    %236 = arith.mulf %225, %235 : vector<2x32xf32>
    %237 = arith.addf %234, %236 : vector<2x32xf32>
    %238 = math.tanh %237 : vector<2x32xf32>
    %cst_71 = arith.constant 1.000000e+00 : f32
    %239 = vector.broadcast %cst_71 : f32 to vector<2x32xf32>
    %240 = arith.subf %239, %233 : vector<2x32xf32>
    %241 = arith.mulf %240, %238 : vector<2x32xf32>
    %242 = arith.mulf %233, %175 : vector<2x32xf32>
    %243 = arith.addf %241, %242 : vector<2x32xf32>
    %c3_72 = arith.constant 3 : index
    %c0_73 = arith.constant 0 : index
    %c0_74 = arith.constant 0 : index
    %244 = vector.load %arg7[%c3_72, %c0_73, %c0_74] : memref<8x2x32xf32, #tpu.memory_space<vmem>>, vector<1x2x32xf32>
    %245 = vector.shape_cast %244 : vector<1x2x32xf32> to vector<2x32xf32>
    %246 = vector.shape_cast %243 : vector<2x32xf32> to vector<1x2x32xf32>
    tpu.vector_store %arg7[%c3_72, %c0_73, %c0_74], %246 {strides = array<i32>} : memref<8x2x32xf32, #tpu.memory_space<vmem>>, vector<1x2x32xf32>,
    %c4 = arith.constant 4 : index
    %c0_75 = arith.constant 0 : index
    %c0_76 = arith.constant 0 : index
    %247 = vector.load %arg2[%c4, %c0_75, %c0_76] : memref<8x2x96xf32, #tpu.memory_space<vmem>>, vector<1x2x96xf32>
    %248 = vector.shape_cast %247 : vector<1x2x96xf32> to vector<2x96xf32>
    %cst_77 = arith.constant dense<0.000000e+00> : vector<2x96xf32>
    %249 = tpu.matmul %209, %4, %cst_77 {dimension_numbers = #tpu.dot_dimension_numbers<[1], [0], [0], [1], [0, 0, 1, 1], [], []>} : vector<2x32xf32>, vector<32x96xf32>, vector<2x96xf32> -> vector<2x96xf32>
    %250 = vector.broadcast %6 : vector<1x96xf32> to vector<2x96xf32>
    %251 = arith.addf %249, %250 : vector<2x96xf32>
    %252 = vector.extract_strided_slice %248 {offsets = [0, 0], sizes = [2, 32], strides = [1, 1]} : vector<2x96xf32> to vector<2x32xf32>
    %253 = vector.extract_strided_slice %251 {offsets = [0, 0], sizes = [2, 32], strides = [1, 1]} : vector<2x96xf32> to vector<2x32xf32>
    %254 = arith.addf %252, %253 : vector<2x32xf32>
    %255 = arith.negf %254 : vector<2x32xf32>
    %256 = math.exp %255 : vector<2x32xf32>
    %cst_78 = arith.constant 1.000000e+00 : f32
    %257 = vector.broadcast %cst_78 : f32 to vector<2x32xf32>
    %258 = arith.addf %257, %256 : vector<2x32xf32>
    %259 = arith.divf %257, %258 : vector<2x32xf32>
    %260 = vector.extract_strided_slice %248 {offsets = [0, 32], sizes = [2, 32], strides = [1, 1]} : vector<2x96xf32> to vector<2x32xf32>
    %261 = vector.extract_strided_slice %251 {offsets = [0, 32], sizes = [2, 32], strides = [1, 1]} : vector<2x96xf32> to vector<2x32xf32>
    %262 = arith.addf %260, %261 : vector<2x32xf32>
    %263 = arith.negf %262 : vector<2x32xf32>
    %264 = math.exp %263 : vector<2x32xf32>
    %cst_79 = arith.constant 1.000000e+00 : f32
    %265 = vector.broadcast %cst_79 : f32 to vector<2x32xf32>
    %266 = arith.addf %265, %264 : vector<2x32xf32>
    %267 = arith.divf %265, %266 : vector<2x32xf32>
    %268 = vector.extract_strided_slice %248 {offsets = [0, 64], sizes = [2, 32], strides = [1, 1]} : vector<2x96xf32> to vector<2x32xf32>
    %269 = vector.extract_strided_slice %251 {offsets = [0, 64], sizes = [2, 32], strides = [1, 1]} : vector<2x96xf32> to vector<2x32xf32>
    %270 = arith.mulf %259, %269 : vector<2x32xf32>
    %271 = arith.addf %268, %270 : vector<2x32xf32>
    %272 = math.tanh %271 : vector<2x32xf32>
    %cst_80 = arith.constant 1.000000e+00 : f32
    %273 = vector.broadcast %cst_80 : f32 to vector<2x32xf32>
    %274 = arith.subf %273, %267 : vector<2x32xf32>
    %275 = arith.mulf %274, %272 : vector<2x32xf32>
    %276 = arith.mulf %267, %209 : vector<2x32xf32>
    %277 = arith.addf %275, %276 : vector<2x32xf32>
    %c4_81 = arith.constant 4 : index
    %c0_82 = arith.constant 0 : index
    %c0_83 = arith.constant 0 : index
    %278 = vector.load %arg8[%c4_81, %c0_82, %c0_83] : memref<8x2x32xf32, #tpu.memory_space<vmem>>, vector<1x2x32xf32>
    %279 = vector.shape_cast %278 : vector<1x2x32xf32> to vector<2x32xf32>
    %280 = vector.shape_cast %277 : vector<2x32xf32> to vector<1x2x32xf32>
    tpu.vector_store %arg8[%c4_81, %c0_82, %c0_83], %280 {strides = array<i32>} : memref<8x2x32xf32, #tpu.memory_space<vmem>>, vector<1x2x32xf32>,
    %c4_84 = arith.constant 4 : index
    %c0_85 = arith.constant 0 : index
    %c0_86 = arith.constant 0 : index
    %281 = vector.load %arg1[%c4_84, %c0_85, %c0_86] : memref<8x2x96xf32, #tpu.memory_space<vmem>>, vector<1x2x96xf32>
    %282 = vector.shape_cast %281 : vector<1x2x96xf32> to vector<2x96xf32>
    %cst_87 = arith.constant dense<0.000000e+00> : vector<2x96xf32>
    %283 = tpu.matmul %243, %3, %cst_87 {dimension_numbers = #tpu.dot_dimension_numbers<[1], [0], [0], [1], [0, 0, 1, 1], [], []>} : vector<2x32xf32>, vector<32x96xf32>, vector<2x96xf32> -> vector<2x96xf32>
    %284 = vector.broadcast %5 : vector<1x96xf32> to vector<2x96xf32>
    %285 = arith.addf %283, %284 : vector<2x96xf32>
    %286 = vector.extract_strided_slice %282 {offsets = [0, 0], sizes = [2, 32], strides = [1, 1]} : vector<2x96xf32> to vector<2x32xf32>
    %287 = vector.extract_strided_slice %285 {offsets = [0, 0], sizes = [2, 32], strides = [1, 1]} : vector<2x96xf32> to vector<2x32xf32>
    %288 = arith.addf %286, %287 : vector<2x32xf32>
    %289 = arith.negf %288 : vector<2x32xf32>
    %290 = math.exp %289 : vector<2x32xf32>
    %cst_88 = arith.constant 1.000000e+00 : f32
    %291 = vector.broadcast %cst_88 : f32 to vector<2x32xf32>
    %292 = arith.addf %291, %290 : vector<2x32xf32>
    %293 = arith.divf %291, %292 : vector<2x32xf32>
    %294 = vector.extract_strided_slice %282 {offsets = [0, 32], sizes = [2, 32], strides = [1, 1]} : vector<2x96xf32> to vector<2x32xf32>
    %295 = vector.extract_strided_slice %285 {offsets = [0, 32], sizes = [2, 32], strides = [1, 1]} : vector<2x96xf32> to vector<2x32xf32>
    %296 = arith.addf %294, %295 : vector<2x32xf32>
    %297 = arith.negf %296 : vector<2x32xf32>
    %298 = math.exp %297 : vector<2x32xf32>
    %cst_89 = arith.constant 1.000000e+00 : f32
    %299 = vector.broadcast %cst_89 : f32 to vector<2x32xf32>
    %300 = arith.addf %299, %298 : vector<2x32xf32>
    %301 = arith.divf %299, %300 : vector<2x32xf32>
    %302 = vector.extract_strided_slice %282 {offsets = [0, 64], sizes = [2, 32], strides = [1, 1]} : vector<2x96xf32> to vector<2x32xf32>
    %303 = vector.extract_strided_slice %285 {offsets = [0, 64], sizes = [2, 32], strides = [1, 1]} : vector<2x96xf32> to vector<2x32xf32>
    %304 = arith.mulf %293, %303 : vector<2x32xf32>
    %305 = arith.addf %302, %304 : vector<2x32xf32>
    %306 = math.tanh %305 : vector<2x32xf32>
    %cst_90 = arith.constant 1.000000e+00 : f32
    %307 = vector.broadcast %cst_90 : f32 to vector<2x32xf32>
    %308 = arith.subf %307, %301 : vector<2x32xf32>
    %309 = arith.mulf %308, %306 : vector<2x32xf32>
    %310 = arith.mulf %301, %243 : vector<2x32xf32>
    %311 = arith.addf %309, %310 : vector<2x32xf32>
    %c4_91 = arith.constant 4 : index
    %c0_92 = arith.constant 0 : index
    %c0_93 = arith.constant 0 : index
    %312 = vector.load %arg7[%c4_91, %c0_92, %c0_93] : memref<8x2x32xf32, #tpu.memory_space<vmem>>, vector<1x2x32xf32>
    %313 = vector.shape_cast %312 : vector<1x2x32xf32> to vector<2x32xf32>
    %314 = vector.shape_cast %311 : vector<2x32xf32> to vector<1x2x32xf32>
    tpu.vector_store %arg7[%c4_91, %c0_92, %c0_93], %314 {strides = array<i32>} : memref<8x2x32xf32, #tpu.memory_space<vmem>>, vector<1x2x32xf32>,
    %c3_94 = arith.constant 3 : index
    %c0_95 = arith.constant 0 : index
    %c0_96 = arith.constant 0 : index
    %315 = vector.load %arg2[%c3_94, %c0_95, %c0_96] : memref<8x2x96xf32, #tpu.memory_space<vmem>>, vector<1x2x96xf32>
    %316 = vector.shape_cast %315 : vector<1x2x96xf32> to vector<2x96xf32>
    %cst_97 = arith.constant dense<0.000000e+00> : vector<2x96xf32>
    %317 = tpu.matmul %277, %4, %cst_97 {dimension_numbers = #tpu.dot_dimension_numbers<[1], [0], [0], [1], [0, 0, 1, 1], [], []>} : vector<2x32xf32>, vector<32x96xf32>, vector<2x96xf32> -> vector<2x96xf32>
    %318 = vector.broadcast %6 : vector<1x96xf32> to vector<2x96xf32>
    %319 = arith.addf %317, %318 : vector<2x96xf32>
    %320 = vector.extract_strided_slice %316 {offsets = [0, 0], sizes = [2, 32], strides = [1, 1]} : vector<2x96xf32> to vector<2x32xf32>
    %321 = vector.extract_strided_slice %319 {offsets = [0, 0], sizes = [2, 32], strides = [1, 1]} : vector<2x96xf32> to vector<2x32xf32>
    %322 = arith.addf %320, %321 : vector<2x32xf32>
    %323 = arith.negf %322 : vector<2x32xf32>
    %324 = math.exp %323 : vector<2x32xf32>
    %cst_98 = arith.constant 1.000000e+00 : f32
    %325 = vector.broadcast %cst_98 : f32 to vector<2x32xf32>
    %326 = arith.addf %325, %324 : vector<2x32xf32>
    %327 = arith.divf %325, %326 : vector<2x32xf32>
    %328 = vector.extract_strided_slice %316 {offsets = [0, 32], sizes = [2, 32], strides = [1, 1]} : vector<2x96xf32> to vector<2x32xf32>
    %329 = vector.extract_strided_slice %319 {offsets = [0, 32], sizes = [2, 32], strides = [1, 1]} : vector<2x96xf32> to vector<2x32xf32>
    %330 = arith.addf %328, %329 : vector<2x32xf32>
    %331 = arith.negf %330 : vector<2x32xf32>
    %332 = math.exp %331 : vector<2x32xf32>
    %cst_99 = arith.constant 1.000000e+00 : f32
    %333 = vector.broadcast %cst_99 : f32 to vector<2x32xf32>
    %334 = arith.addf %333, %332 : vector<2x32xf32>
    %335 = arith.divf %333, %334 : vector<2x32xf32>
    %336 = vector.extract_strided_slice %316 {offsets = [0, 64], sizes = [2, 32], strides = [1, 1]} : vector<2x96xf32> to vector<2x32xf32>
    %337 = vector.extract_strided_slice %319 {offsets = [0, 64], sizes = [2, 32], strides = [1, 1]} : vector<2x96xf32> to vector<2x32xf32>
    %338 = arith.mulf %327, %337 : vector<2x32xf32>
    %339 = arith.addf %336, %338 : vector<2x32xf32>
    %340 = math.tanh %339 : vector<2x32xf32>
    %cst_100 = arith.constant 1.000000e+00 : f32
    %341 = vector.broadcast %cst_100 : f32 to vector<2x32xf32>
    %342 = arith.subf %341, %335 : vector<2x32xf32>
    %343 = arith.mulf %342, %340 : vector<2x32xf32>
    %344 = arith.mulf %335, %277 : vector<2x32xf32>
    %345 = arith.addf %343, %344 : vector<2x32xf32>
    %c3_101 = arith.constant 3 : index
    %c0_102 = arith.constant 0 : index
    %c0_103 = arith.constant 0 : index
    %346 = vector.load %arg8[%c3_101, %c0_102, %c0_103] : memref<8x2x32xf32, #tpu.memory_space<vmem>>, vector<1x2x32xf32>
    %347 = vector.shape_cast %346 : vector<1x2x32xf32> to vector<2x32xf32>
    %348 = vector.shape_cast %345 : vector<2x32xf32> to vector<1x2x32xf32>
    tpu.vector_store %arg8[%c3_101, %c0_102, %c0_103], %348 {strides = array<i32>} : memref<8x2x32xf32, #tpu.memory_space<vmem>>, vector<1x2x32xf32>,
    %c5_104 = arith.constant 5 : index
    %c0_105 = arith.constant 0 : index
    %c0_106 = arith.constant 0 : index
    %349 = vector.load %arg1[%c5_104, %c0_105, %c0_106] : memref<8x2x96xf32, #tpu.memory_space<vmem>>, vector<1x2x96xf32>
    %350 = vector.shape_cast %349 : vector<1x2x96xf32> to vector<2x96xf32>
    %cst_107 = arith.constant dense<0.000000e+00> : vector<2x96xf32>
    %351 = tpu.matmul %311, %3, %cst_107 {dimension_numbers = #tpu.dot_dimension_numbers<[1], [0], [0], [1], [0, 0, 1, 1], [], []>} : vector<2x32xf32>, vector<32x96xf32>, vector<2x96xf32> -> vector<2x96xf32>
    %352 = vector.broadcast %5 : vector<1x96xf32> to vector<2x96xf32>
    %353 = arith.addf %351, %352 : vector<2x96xf32>
    %354 = vector.extract_strided_slice %350 {offsets = [0, 0], sizes = [2, 32], strides = [1, 1]} : vector<2x96xf32> to vector<2x32xf32>
    %355 = vector.extract_strided_slice %353 {offsets = [0, 0], sizes = [2, 32], strides = [1, 1]} : vector<2x96xf32> to vector<2x32xf32>
    %356 = arith.addf %354, %355 : vector<2x32xf32>
    %357 = arith.negf %356 : vector<2x32xf32>
    %358 = math.exp %357 : vector<2x32xf32>
    %cst_108 = arith.constant 1.000000e+00 : f32
    %359 = vector.broadcast %cst_108 : f32 to vector<2x32xf32>
    %360 = arith.addf %359, %358 : vector<2x32xf32>
    %361 = arith.divf %359, %360 : vector<2x32xf32>
    %362 = vector.extract_strided_slice %350 {offsets = [0, 32], sizes = [2, 32], strides = [1, 1]} : vector<2x96xf32> to vector<2x32xf32>
    %363 = vector.extract_strided_slice %353 {offsets = [0, 32], sizes = [2, 32], strides = [1, 1]} : vector<2x96xf32> to vector<2x32xf32>
    %364 = arith.addf %362, %363 : vector<2x32xf32>
    %365 = arith.negf %364 : vector<2x32xf32>
    %366 = math.exp %365 : vector<2x32xf32>
    %cst_109 = arith.constant 1.000000e+00 : f32
    %367 = vector.broadcast %cst_109 : f32 to vector<2x32xf32>
    %368 = arith.addf %367, %366 : vector<2x32xf32>
    %369 = arith.divf %367, %368 : vector<2x32xf32>
    %370 = vector.extract_strided_slice %350 {offsets = [0, 64], sizes = [2, 32], strides = [1, 1]} : vector<2x96xf32> to vector<2x32xf32>
    %371 = vector.extract_strided_slice %353 {offsets = [0, 64], sizes = [2, 32], strides = [1, 1]} : vector<2x96xf32> to vector<2x32xf32>
    %372 = arith.mulf %361, %371 : vector<2x32xf32>
    %373 = arith.addf %370, %372 : vector<2x32xf32>
    %374 = math.tanh %373 : vector<2x32xf32>
    %cst_110 = arith.constant 1.000000e+00 : f32
    %375 = vector.broadcast %cst_110 : f32 to vector<2x32xf32>
    %376 = arith.subf %375, %369 : vector<2x32xf32>
    %377 = arith.mulf %376, %374 : vector<2x32xf32>
    %378 = arith.mulf %369, %311 : vector<2x32xf32>
    %379 = arith.addf %377, %378 : vector<2x32xf32>
    %c5_111 = arith.constant 5 : index
    %c0_112 = arith.constant 0 : index
    %c0_113 = arith.constant 0 : index
    %380 = vector.load %arg7[%c5_111, %c0_112, %c0_113] : memref<8x2x32xf32, #tpu.memory_space<vmem>>, vector<1x2x32xf32>
    %381 = vector.shape_cast %380 : vector<1x2x32xf32> to vector<2x32xf32>
    %382 = vector.shape_cast %379 : vector<2x32xf32> to vector<1x2x32xf32>
    tpu.vector_store %arg7[%c5_111, %c0_112, %c0_113], %382 {strides = array<i32>} : memref<8x2x32xf32, #tpu.memory_space<vmem>>, vector<1x2x32xf32>,
    %c2_114 = arith.constant 2 : index
    %c0_115 = arith.constant 0 : index
    %c0_116 = arith.constant 0 : index
    %383 = vector.load %arg2[%c2_114, %c0_115, %c0_116] : memref<8x2x96xf32, #tpu.memory_space<vmem>>, vector<1x2x96xf32>
    %384 = vector.shape_cast %383 : vector<1x2x96xf32> to vector<2x96xf32>
    %cst_117 = arith.constant dense<0.000000e+00> : vector<2x96xf32>
    %385 = tpu.matmul %345, %4, %cst_117 {dimension_numbers = #tpu.dot_dimension_numbers<[1], [0], [0], [1], [0, 0, 1, 1], [], []>} : vector<2x32xf32>, vector<32x96xf32>, vector<2x96xf32> -> vector<2x96xf32>
    %386 = vector.broadcast %6 : vector<1x96xf32> to vector<2x96xf32>
    %387 = arith.addf %385, %386 : vector<2x96xf32>
    %388 = vector.extract_strided_slice %384 {offsets = [0, 0], sizes = [2, 32], strides = [1, 1]} : vector<2x96xf32> to vector<2x32xf32>
    %389 = vector.extract_strided_slice %387 {offsets = [0, 0], sizes = [2, 32], strides = [1, 1]} : vector<2x96xf32> to vector<2x32xf32>
    %390 = arith.addf %388, %389 : vector<2x32xf32>
    %391 = arith.negf %390 : vector<2x32xf32>
    %392 = math.exp %391 : vector<2x32xf32>
    %cst_118 = arith.constant 1.000000e+00 : f32
    %393 = vector.broadcast %cst_118 : f32 to vector<2x32xf32>
    %394 = arith.addf %393, %392 : vector<2x32xf32>
    %395 = arith.divf %393, %394 : vector<2x32xf32>
    %396 = vector.extract_strided_slice %384 {offsets = [0, 32], sizes = [2, 32], strides = [1, 1]} : vector<2x96xf32> to vector<2x32xf32>
    %397 = vector.extract_strided_slice %387 {offsets = [0, 32], sizes = [2, 32], strides = [1, 1]} : vector<2x96xf32> to vector<2x32xf32>
    %398 = arith.addf %396, %397 : vector<2x32xf32>
    %399 = arith.negf %398 : vector<2x32xf32>
    %400 = math.exp %399 : vector<2x32xf32>
    %cst_119 = arith.constant 1.000000e+00 : f32
    %401 = vector.broadcast %cst_119 : f32 to vector<2x32xf32>
    %402 = arith.addf %401, %400 : vector<2x32xf32>
    %403 = arith.divf %401, %402 : vector<2x32xf32>
    %404 = vector.extract_strided_slice %384 {offsets = [0, 64], sizes = [2, 32], strides = [1, 1]} : vector<2x96xf32> to vector<2x32xf32>
    %405 = vector.extract_strided_slice %387 {offsets = [0, 64], sizes = [2, 32], strides = [1, 1]} : vector<2x96xf32> to vector<2x32xf32>
    %406 = arith.mulf %395, %405 : vector<2x32xf32>
    %407 = arith.addf %404, %406 : vector<2x32xf32>
    %408 = math.tanh %407 : vector<2x32xf32>
    %cst_120 = arith.constant 1.000000e+00 : f32
    %409 = vector.broadcast %cst_120 : f32 to vector<2x32xf32>
    %410 = arith.subf %409, %403 : vector<2x32xf32>
    %411 = arith.mulf %410, %408 : vector<2x32xf32>
    %412 = arith.mulf %403, %345 : vector<2x32xf32>
    %413 = arith.addf %411, %412 : vector<2x32xf32>
    %c2_121 = arith.constant 2 : index
    %c0_122 = arith.constant 0 : index
    %c0_123 = arith.constant 0 : index
    %414 = vector.load %arg8[%c2_121, %c0_122, %c0_123] : memref<8x2x32xf32, #tpu.memory_space<vmem>>, vector<1x2x32xf32>
    %415 = vector.shape_cast %414 : vector<1x2x32xf32> to vector<2x32xf32>
    %416 = vector.shape_cast %413 : vector<2x32xf32> to vector<1x2x32xf32>
    tpu.vector_store %arg8[%c2_121, %c0_122, %c0_123], %416 {strides = array<i32>} : memref<8x2x32xf32, #tpu.memory_space<vmem>>, vector<1x2x32xf32>,
    %c6_124 = arith.constant 6 : index
    %c0_125 = arith.constant 0 : index
    %c0_126 = arith.constant 0 : index
    %417 = vector.load %arg1[%c6_124, %c0_125, %c0_126] : memref<8x2x96xf32, #tpu.memory_space<vmem>>, vector<1x2x96xf32>
    %418 = vector.shape_cast %417 : vector<1x2x96xf32> to vector<2x96xf32>
    %cst_127 = arith.constant dense<0.000000e+00> : vector<2x96xf32>
    %419 = tpu.matmul %379, %3, %cst_127 {dimension_numbers = #tpu.dot_dimension_numbers<[1], [0], [0], [1], [0, 0, 1, 1], [], []>} : vector<2x32xf32>, vector<32x96xf32>, vector<2x96xf32> -> vector<2x96xf32>
    %420 = vector.broadcast %5 : vector<1x96xf32> to vector<2x96xf32>
    %421 = arith.addf %419, %420 : vector<2x96xf32>
    %422 = vector.extract_strided_slice %418 {offsets = [0, 0], sizes = [2, 32], strides = [1, 1]} : vector<2x96xf32> to vector<2x32xf32>
    %423 = vector.extract_strided_slice %421 {offsets = [0, 0], sizes = [2, 32], strides = [1, 1]} : vector<2x96xf32> to vector<2x32xf32>
    %424 = arith.addf %422, %423 : vector<2x32xf32>
    %425 = arith.negf %424 : vector<2x32xf32>
    %426 = math.exp %425 : vector<2x32xf32>
    %cst_128 = arith.constant 1.000000e+00 : f32
    %427 = vector.broadcast %cst_128 : f32 to vector<2x32xf32>
    %428 = arith.addf %427, %426 : vector<2x32xf32>
    %429 = arith.divf %427, %428 : vector<2x32xf32>
    %430 = vector.extract_strided_slice %418 {offsets = [0, 32], sizes = [2, 32], strides = [1, 1]} : vector<2x96xf32> to vector<2x32xf32>
    %431 = vector.extract_strided_slice %421 {offsets = [0, 32], sizes = [2, 32], strides = [1, 1]} : vector<2x96xf32> to vector<2x32xf32>
    %432 = arith.addf %430, %431 : vector<2x32xf32>
    %433 = arith.negf %432 : vector<2x32xf32>
    %434 = math.exp %433 : vector<2x32xf32>
    %cst_129 = arith.constant 1.000000e+00 : f32
    %435 = vector.broadcast %cst_129 : f32 to vector<2x32xf32>
    %436 = arith.addf %435, %434 : vector<2x32xf32>
    %437 = arith.divf %435, %436 : vector<2x32xf32>
    %438 = vector.extract_strided_slice %418 {offsets = [0, 64], sizes = [2, 32], strides = [1, 1]} : vector<2x96xf32> to vector<2x32xf32>
    %439 = vector.extract_strided_slice %421 {offsets = [0, 64], sizes = [2, 32], strides = [1, 1]} : vector<2x96xf32> to vector<2x32xf32>
    %440 = arith.mulf %429, %439 : vector<2x32xf32>
    %441 = arith.addf %438, %440 : vector<2x32xf32>
    %442 = math.tanh %441 : vector<2x32xf32>
    %cst_130 = arith.constant 1.000000e+00 : f32
    %443 = vector.broadcast %cst_130 : f32 to vector<2x32xf32>
    %444 = arith.subf %443, %437 : vector<2x32xf32>
    %445 = arith.mulf %444, %442 : vector<2x32xf32>
    %446 = arith.mulf %437, %379 : vector<2x32xf32>
    %447 = arith.addf %445, %446 : vector<2x32xf32>
    %c6_131 = arith.constant 6 : index
    %c0_132 = arith.constant 0 : index
    %c0_133 = arith.constant 0 : index
    %448 = vector.load %arg7[%c6_131, %c0_132, %c0_133] : memref<8x2x32xf32, #tpu.memory_space<vmem>>, vector<1x2x32xf32>
    %449 = vector.shape_cast %448 : vector<1x2x32xf32> to vector<2x32xf32>
    %450 = vector.shape_cast %447 : vector<2x32xf32> to vector<1x2x32xf32>
    tpu.vector_store %arg7[%c6_131, %c0_132, %c0_133], %450 {strides = array<i32>} : memref<8x2x32xf32, #tpu.memory_space<vmem>>, vector<1x2x32xf32>,
    %c1_134 = arith.constant 1 : index
    %c0_135 = arith.constant 0 : index
    %c0_136 = arith.constant 0 : index
    %451 = vector.load %arg2[%c1_134, %c0_135, %c0_136] : memref<8x2x96xf32, #tpu.memory_space<vmem>>, vector<1x2x96xf32>
    %452 = vector.shape_cast %451 : vector<1x2x96xf32> to vector<2x96xf32>
    %cst_137 = arith.constant dense<0.000000e+00> : vector<2x96xf32>
    %453 = tpu.matmul %413, %4, %cst_137 {dimension_numbers = #tpu.dot_dimension_numbers<[1], [0], [0], [1], [0, 0, 1, 1], [], []>} : vector<2x32xf32>, vector<32x96xf32>, vector<2x96xf32> -> vector<2x96xf32>
    %454 = vector.broadcast %6 : vector<1x96xf32> to vector<2x96xf32>
    %455 = arith.addf %453, %454 : vector<2x96xf32>
    %456 = vector.extract_strided_slice %452 {offsets = [0, 0], sizes = [2, 32], strides = [1, 1]} : vector<2x96xf32> to vector<2x32xf32>
    %457 = vector.extract_strided_slice %455 {offsets = [0, 0], sizes = [2, 32], strides = [1, 1]} : vector<2x96xf32> to vector<2x32xf32>
    %458 = arith.addf %456, %457 : vector<2x32xf32>
    %459 = arith.negf %458 : vector<2x32xf32>
    %460 = math.exp %459 : vector<2x32xf32>
    %cst_138 = arith.constant 1.000000e+00 : f32
    %461 = vector.broadcast %cst_138 : f32 to vector<2x32xf32>
    %462 = arith.addf %461, %460 : vector<2x32xf32>
    %463 = arith.divf %461, %462 : vector<2x32xf32>
    %464 = vector.extract_strided_slice %452 {offsets = [0, 32], sizes = [2, 32], strides = [1, 1]} : vector<2x96xf32> to vector<2x32xf32>
    %465 = vector.extract_strided_slice %455 {offsets = [0, 32], sizes = [2, 32], strides = [1, 1]} : vector<2x96xf32> to vector<2x32xf32>
    %466 = arith.addf %464, %465 : vector<2x32xf32>
    %467 = arith.negf %466 : vector<2x32xf32>
    %468 = math.exp %467 : vector<2x32xf32>
    %cst_139 = arith.constant 1.000000e+00 : f32
    %469 = vector.broadcast %cst_139 : f32 to vector<2x32xf32>
    %470 = arith.addf %469, %468 : vector<2x32xf32>
    %471 = arith.divf %469, %470 : vector<2x32xf32>
    %472 = vector.extract_strided_slice %452 {offsets = [0, 64], sizes = [2, 32], strides = [1, 1]} : vector<2x96xf32> to vector<2x32xf32>
    %473 = vector.extract_strided_slice %455 {offsets = [0, 64], sizes = [2, 32], strides = [1, 1]} : vector<2x96xf32> to vector<2x32xf32>
    %474 = arith.mulf %463, %473 : vector<2x32xf32>
    %475 = arith.addf %472, %474 : vector<2x32xf32>
    %476 = math.tanh %475 : vector<2x32xf32>
    %cst_140 = arith.constant 1.000000e+00 : f32
    %477 = vector.broadcast %cst_140 : f32 to vector<2x32xf32>
    %478 = arith.subf %477, %471 : vector<2x32xf32>
    %479 = arith.mulf %478, %476 : vector<2x32xf32>
    %480 = arith.mulf %471, %413 : vector<2x32xf32>
    %481 = arith.addf %479, %480 : vector<2x32xf32>
    %c1_141 = arith.constant 1 : index
    %c0_142 = arith.constant 0 : index
    %c0_143 = arith.constant 0 : index
    %482 = vector.load %arg8[%c1_141, %c0_142, %c0_143] : memref<8x2x32xf32, #tpu.memory_space<vmem>>, vector<1x2x32xf32>
    %483 = vector.shape_cast %482 : vector<1x2x32xf32> to vector<2x32xf32>
    %484 = vector.shape_cast %481 : vector<2x32xf32> to vector<1x2x32xf32>
    tpu.vector_store %arg8[%c1_141, %c0_142, %c0_143], %484 {strides = array<i32>} : memref<8x2x32xf32, #tpu.memory_space<vmem>>, vector<1x2x32xf32>,
    %c7_144 = arith.constant 7 : index
    %c0_145 = arith.constant 0 : index
    %c0_146 = arith.constant 0 : index
    %485 = vector.load %arg1[%c7_144, %c0_145, %c0_146] : memref<8x2x96xf32, #tpu.memory_space<vmem>>, vector<1x2x96xf32>
    %486 = vector.shape_cast %485 : vector<1x2x96xf32> to vector<2x96xf32>
    %cst_147 = arith.constant dense<0.000000e+00> : vector<2x96xf32>
    %487 = tpu.matmul %447, %3, %cst_147 {dimension_numbers = #tpu.dot_dimension_numbers<[1], [0], [0], [1], [0, 0, 1, 1], [], []>} : vector<2x32xf32>, vector<32x96xf32>, vector<2x96xf32> -> vector<2x96xf32>
    %488 = vector.broadcast %5 : vector<1x96xf32> to vector<2x96xf32>
    %489 = arith.addf %487, %488 : vector<2x96xf32>
    %490 = vector.extract_strided_slice %486 {offsets = [0, 0], sizes = [2, 32], strides = [1, 1]} : vector<2x96xf32> to vector<2x32xf32>
    %491 = vector.extract_strided_slice %489 {offsets = [0, 0], sizes = [2, 32], strides = [1, 1]} : vector<2x96xf32> to vector<2x32xf32>
    %492 = arith.addf %490, %491 : vector<2x32xf32>
    %493 = arith.negf %492 : vector<2x32xf32>
    %494 = math.exp %493 : vector<2x32xf32>
    %cst_148 = arith.constant 1.000000e+00 : f32
    %495 = vector.broadcast %cst_148 : f32 to vector<2x32xf32>
    %496 = arith.addf %495, %494 : vector<2x32xf32>
    %497 = arith.divf %495, %496 : vector<2x32xf32>
    %498 = vector.extract_strided_slice %486 {offsets = [0, 32], sizes = [2, 32], strides = [1, 1]} : vector<2x96xf32> to vector<2x32xf32>
    %499 = vector.extract_strided_slice %489 {offsets = [0, 32], sizes = [2, 32], strides = [1, 1]} : vector<2x96xf32> to vector<2x32xf32>
    %500 = arith.addf %498, %499 : vector<2x32xf32>
    %501 = arith.negf %500 : vector<2x32xf32>
    %502 = math.exp %501 : vector<2x32xf32>
    %cst_149 = arith.constant 1.000000e+00 : f32
    %503 = vector.broadcast %cst_149 : f32 to vector<2x32xf32>
    %504 = arith.addf %503, %502 : vector<2x32xf32>
    %505 = arith.divf %503, %504 : vector<2x32xf32>
    %506 = vector.extract_strided_slice %486 {offsets = [0, 64], sizes = [2, 32], strides = [1, 1]} : vector<2x96xf32> to vector<2x32xf32>
    %507 = vector.extract_strided_slice %489 {offsets = [0, 64], sizes = [2, 32], strides = [1, 1]} : vector<2x96xf32> to vector<2x32xf32>
    %508 = arith.mulf %497, %507 : vector<2x32xf32>
    %509 = arith.addf %506, %508 : vector<2x32xf32>
    %510 = math.tanh %509 : vector<2x32xf32>
    %cst_150 = arith.constant 1.000000e+00 : f32
    %511 = vector.broadcast %cst_150 : f32 to vector<2x32xf32>
    %512 = arith.subf %511, %505 : vector<2x32xf32>
    %513 = arith.mulf %512, %510 : vector<2x32xf32>
    %514 = arith.mulf %505, %447 : vector<2x32xf32>
    %515 = arith.addf %513, %514 : vector<2x32xf32>
    %c7_151 = arith.constant 7 : index
    %c0_152 = arith.constant 0 : index
    %c0_153 = arith.constant 0 : index
    %516 = vector.load %arg7[%c7_151, %c0_152, %c0_153] : memref<8x2x32xf32, #tpu.memory_space<vmem>>, vector<1x2x32xf32>
    %517 = vector.shape_cast %516 : vector<1x2x32xf32> to vector<2x32xf32>
    %518 = vector.shape_cast %515 : vector<2x32xf32> to vector<1x2x32xf32>
    tpu.vector_store %arg7[%c7_151, %c0_152, %c0_153], %518 {strides = array<i32>} : memref<8x2x32xf32, #tpu.memory_space<vmem>>, vector<1x2x32xf32>,
    %c0_154 = arith.constant 0 : index
    %c0_155 = arith.constant 0 : index
    %c0_156 = arith.constant 0 : index
    %519 = vector.load %arg2[%c0_154, %c0_155, %c0_156] : memref<8x2x96xf32, #tpu.memory_space<vmem>>, vector<1x2x96xf32>
    %520 = vector.shape_cast %519 : vector<1x2x96xf32> to vector<2x96xf32>
    %cst_157 = arith.constant dense<0.000000e+00> : vector<2x96xf32>
    %521 = tpu.matmul %481, %4, %cst_157 {dimension_numbers = #tpu.dot_dimension_numbers<[1], [0], [0], [1], [0, 0, 1, 1], [], []>} : vector<2x32xf32>, vector<32x96xf32>, vector<2x96xf32> -> vector<2x96xf32>
    %522 = vector.broadcast %6 : vector<1x96xf32> to vector<2x96xf32>
    %523 = arith.addf %521, %522 : vector<2x96xf32>
    %524 = vector.extract_strided_slice %520 {offsets = [0, 0], sizes = [2, 32], strides = [1, 1]} : vector<2x96xf32> to vector<2x32xf32>
    %525 = vector.extract_strided_slice %523 {offsets = [0, 0], sizes = [2, 32], strides = [1, 1]} : vector<2x96xf32> to vector<2x32xf32>
    %526 = arith.addf %524, %525 : vector<2x32xf32>
    %527 = arith.negf %526 : vector<2x32xf32>
    %528 = math.exp %527 : vector<2x32xf32>
    %cst_158 = arith.constant 1.000000e+00 : f32
    %529 = vector.broadcast %cst_158 : f32 to vector<2x32xf32>
    %530 = arith.addf %529, %528 : vector<2x32xf32>
    %531 = arith.divf %529, %530 : vector<2x32xf32>
    %532 = vector.extract_strided_slice %520 {offsets = [0, 32], sizes = [2, 32], strides = [1, 1]} : vector<2x96xf32> to vector<2x32xf32>
    %533 = vector.extract_strided_slice %523 {offsets = [0, 32], sizes = [2, 32], strides = [1, 1]} : vector<2x96xf32> to vector<2x32xf32>
    %534 = arith.addf %532, %533 : vector<2x32xf32>
    %535 = arith.negf %534 : vector<2x32xf32>
    %536 = math.exp %535 : vector<2x32xf32>
    %cst_159 = arith.constant 1.000000e+00 : f32
    %537 = vector.broadcast %cst_159 : f32 to vector<2x32xf32>
    %538 = arith.addf %537, %536 : vector<2x32xf32>
    %539 = arith.divf %537, %538 : vector<2x32xf32>
    %540 = vector.extract_strided_slice %520 {offsets = [0, 64], sizes = [2, 32], strides = [1, 1]} : vector<2x96xf32> to vector<2x32xf32>
    %541 = vector.extract_strided_slice %523 {offsets = [0, 64], sizes = [2, 32], strides = [1, 1]} : vector<2x96xf32> to vector<2x32xf32>
    %542 = arith.mulf %531, %541 : vector<2x32xf32>
    %543 = arith.addf %540, %542 : vector<2x32xf32>
    %544 = math.tanh %543 : vector<2x32xf32>
    %cst_160 = arith.constant 1.000000e+00 : f32
    %545 = vector.broadcast %cst_160 : f32 to vector<2x32xf32>
    %546 = arith.subf %545, %539 : vector<2x32xf32>
    %547 = arith.mulf %546, %544 : vector<2x32xf32>
    %548 = arith.mulf %539, %481 : vector<2x32xf32>
    %549 = arith.addf %547, %548 : vector<2x32xf32>
    %c0_161 = arith.constant 0 : index
    %c0_162 = arith.constant 0 : index
    %c0_163 = arith.constant 0 : index
    %550 = vector.load %arg8[%c0_161, %c0_162, %c0_163] : memref<8x2x32xf32, #tpu.memory_space<vmem>>, vector<1x2x32xf32>
    %551 = vector.shape_cast %550 : vector<1x2x32xf32> to vector<2x32xf32>
    %552 = vector.shape_cast %549 : vector<2x32xf32> to vector<1x2x32xf32>
    tpu.vector_store %arg8[%c0_161, %c0_162, %c0_163], %552 {strides = array<i32>} : memref<8x2x32xf32, #tpu.memory_space<vmem>>, vector<1x2x32xf32>,
    %c0_164 = arith.constant 0 : index
    %c0_165 = arith.constant 0 : index
    %553 = vector.load %arg9[%c0_164, %c0_165] : memref<2x32xf32, #tpu.memory_space<vmem>>, vector<2x32xf32>
    tpu.vector_store %arg9[%c0_164, %c0_165], %515 {strides = array<i32>} : memref<2x32xf32, #tpu.memory_space<vmem>>, vector<2x32xf32>,
    %c0_166 = arith.constant 0 : index
    %c0_167 = arith.constant 0 : index
    %554 = vector.load %arg10[%c0_166, %c0_167] : memref<2x32xf32, #tpu.memory_space<vmem>>, vector<2x32xf32>
    tpu.vector_store %arg10[%c0_166, %c0_167], %549 {strides = array<i32>} : memref<2x32xf32, #tpu.memory_space<vmem>>, vector<2x32xf32>,
    return
  }
  func.func @transform_0(%arg0: i32) -> (i32, i32, i32) {
    %c0_i32 = arith.constant 0 : i32
    %c0_i32_0 = arith.constant 0 : i32
    %c0_i32_1 = arith.constant 0 : i32
    return %arg0, %c0_i32, %c0_i32_0 : i32, i32, i32
  }
  func.func @transform_1(%arg0: i32) -> (i32, i32, i32) {
    %c0_i32 = arith.constant 0 : i32
    %0 = arith.subi %c0_i32, %arg0 : i32
    %c0_i32_0 = arith.constant 0 : i32
    %c0_i32_1 = arith.constant 0 : i32
    %c0_i32_2 = arith.constant 0 : i32
    return %0, %c0_i32_0, %c0_i32_1 : i32, i32, i32
  }
  func.func @transform_2(%arg0: i32) -> (i32, i32) {
    %c0_i32 = arith.constant 0 : i32
    %c0_i32_0 = arith.constant 0 : i32
    %c0_i32_1 = arith.constant 0 : i32
    return %c0_i32, %c0_i32_0 : i32, i32
  }
  func.func @transform_3(%arg0: i32) -> (i32, i32) {
    %c0_i32 = arith.constant 0 : i32
    %c0_i32_0 = arith.constant 0 : i32
    %c0_i32_1 = arith.constant 0 : i32
    return %c0_i32, %c0_i32_0 : i32, i32
  }
  func.func @transform_4(%arg0: i32) -> (i32, i32) {
    %c0_i32 = arith.constant 0 : i32
    %c0_i32_0 = arith.constant 0 : i32
    %c0_i32_1 = arith.constant 0 : i32
    return %c0_i32, %c0_i32_0 : i32, i32
  }
  func.func @transform_5(%arg0: i32) -> (i32, i32) {
    %c0_i32 = arith.constant 0 : i32
    %c0_i32_0 = arith.constant 0 : i32
    %c0_i32_1 = arith.constant 0 : i32
    return %c0_i32, %c0_i32_0 : i32, i32
  }
  func.func @transform_6(%arg0: i32) -> (i32, i32, i32) {
    %c0_i32 = arith.constant 0 : i32
    %c0_i32_0 = arith.constant 0 : i32
    %c0_i32_1 = arith.constant 0 : i32
    return %arg0, %c0_i32, %c0_i32_0 : i32, i32, i32
  }
  func.func @transform_7(%arg0: i32) -> (i32, i32, i32) {
    %c0_i32 = arith.constant 0 : i32
    %0 = arith.subi %c0_i32, %arg0 : i32
    %c0_i32_0 = arith.constant 0 : i32
    %c0_i32_1 = arith.constant 0 : i32
    %c0_i32_2 = arith.constant 0 : i32
    return %0, %c0_i32_0, %c0_i32_1 : i32, i32, i32
  }
}

module attributes {stable_mosaic.version = 11 : i64} {
  func.func @kernel(%arg0: i32, %arg1: memref<16x32xf32, #tpu.memory_space<vmem>>, %arg2: memref<16x32xf32, #tpu.memory_space<vmem>>, %arg3: memref<32x96xf32, #tpu.memory_space<vmem>>, %arg4: memref<32x96xf32, #tpu.memory_space<vmem>>, %arg5: memref<1x96xf32, #tpu.memory_space<vmem>>, %arg6: memref<16x96xf32, #tpu.memory_space<vmem>>) attributes {dimension_semantics = [#tpu.dimension_semantics<parallel>], iteration_bounds = array<i64: 1>, scalar_prefetch = 0 : i64, scratch_operands = 0 : i64, tpu.core_type = #tpu.core_type<tc>, window_params = [{transform_indices = @transform_0, window_bounds = array<i64: 16, 32>}, {transform_indices = @transform_1, window_bounds = array<i64: 16, 32>}, {pipeline_mode = #tpu.pipeline_mode<synchronous>, transform_indices = @transform_2, window_bounds = array<i64: 32, 96>}, {pipeline_mode = #tpu.pipeline_mode<synchronous>, transform_indices = @transform_3, window_bounds = array<i64: 32, 96>}, {pipeline_mode = #tpu.pipeline_mode<synchronous>, transform_indices = @transform_4, window_bounds = array<i64: 1, 96>}, {transform_indices = @transform_5, window_bounds = array<i64: 16, 96>}]} {
    %c0 = arith.constant 0 : index
    %c0_0 = arith.constant 0 : index
    %0 = vector.load %arg1[%c0, %c0_0] : memref<16x32xf32, #tpu.memory_space<vmem>>, vector<16x32xf32>
    %c0_1 = arith.constant 0 : index
    %c0_2 = arith.constant 0 : index
    %1 = vector.load %arg3[%c0_1, %c0_2] : memref<32x96xf32, #tpu.memory_space<vmem>>, vector<32x96xf32>
    %cst = arith.constant dense<0.000000e+00> : vector<16x96xf32>
    %2 = tpu.matmul %0, %1, %cst {dimension_numbers = #tpu.dot_dimension_numbers<[1], [0], [0], [1], [0, 0, 1, 1], [], []>} : vector<16x32xf32>, vector<32x96xf32>, vector<16x96xf32> -> vector<16x96xf32>
    %c0_3 = arith.constant 0 : index
    %c0_4 = arith.constant 0 : index
    %3 = vector.load %arg2[%c0_3, %c0_4] : memref<16x32xf32, #tpu.memory_space<vmem>>, vector<16x32xf32>
    %c0_5 = arith.constant 0 : index
    %c0_6 = arith.constant 0 : index
    %4 = vector.load %arg4[%c0_5, %c0_6] : memref<32x96xf32, #tpu.memory_space<vmem>>, vector<32x96xf32>
    %cst_7 = arith.constant dense<0.000000e+00> : vector<16x96xf32>
    %5 = tpu.matmul %3, %4, %cst_7 {dimension_numbers = #tpu.dot_dimension_numbers<[1], [0], [0], [1], [0, 0, 1, 1], [], []>} : vector<16x32xf32>, vector<32x96xf32>, vector<16x96xf32> -> vector<16x96xf32>
    %6 = arith.addf %2, %5 : vector<16x96xf32>
    %c0_8 = arith.constant 0 : index
    %c0_9 = arith.constant 0 : index
    %7 = vector.load %arg5[%c0_8, %c0_9] : memref<1x96xf32, #tpu.memory_space<vmem>>, vector<1x96xf32>
    %8 = vector.broadcast %7 : vector<1x96xf32> to vector<16x96xf32>
    %9 = arith.addf %6, %8 : vector<16x96xf32>
    %c0_10 = arith.constant 0 : index
    %c0_11 = arith.constant 0 : index
    %10 = vector.load %arg6[%c0_10, %c0_11] : memref<16x96xf32, #tpu.memory_space<vmem>>, vector<16x96xf32>
    tpu.vector_store %arg6[%c0_10, %c0_11], %9 {strides = array<i32>} : memref<16x96xf32, #tpu.memory_space<vmem>>, vector<16x96xf32>,
    return
  }
  func.func @transform_0(%arg0: i32) -> (i32, i32) {
    %c0_i32 = arith.constant 0 : i32
    %c0_i32_0 = arith.constant 0 : i32
    return %arg0, %c0_i32 : i32, i32
  }
  func.func @transform_1(%arg0: i32) -> (i32, i32) {
    %c0_i32 = arith.constant 0 : i32
    %c0_i32_0 = arith.constant 0 : i32
    return %arg0, %c0_i32 : i32, i32
  }
  func.func @transform_2(%arg0: i32) -> (i32, i32) {
    %c0_i32 = arith.constant 0 : i32
    %c0_i32_0 = arith.constant 0 : i32
    %c0_i32_1 = arith.constant 0 : i32
    return %c0_i32, %c0_i32_0 : i32, i32
  }
  func.func @transform_3(%arg0: i32) -> (i32, i32) {
    %c0_i32 = arith.constant 0 : i32
    %c0_i32_0 = arith.constant 0 : i32
    %c0_i32_1 = arith.constant 0 : i32
    return %c0_i32, %c0_i32_0 : i32, i32
  }
  func.func @transform_4(%arg0: i32) -> (i32, i32) {
    %c0_i32 = arith.constant 0 : i32
    %c0_i32_0 = arith.constant 0 : i32
    %c0_i32_1 = arith.constant 0 : i32
    return %c0_i32, %c0_i32_0 : i32, i32
  }
  func.func @transform_5(%arg0: i32) -> (i32, i32) {
    %c0_i32 = arith.constant 0 : i32
    %c0_i32_0 = arith.constant 0 : i32
    return %arg0, %c0_i32 : i32, i32
  }
}

module attributes {stable_mosaic.version = 11 : i64} {
  func.func @kernel(%arg0: i32, %arg1: memref<16x32xf32, #tpu.memory_space<vmem>>, %arg2: memref<16x32xf32, #tpu.memory_space<vmem>>, %arg3: memref<32x32xf32, #tpu.memory_space<vmem>>, %arg4: memref<32x32xf32, #tpu.memory_space<vmem>>, %arg5: memref<1x32xf32, #tpu.memory_space<vmem>>, %arg6: memref<32x8xf32, #tpu.memory_space<vmem>>, %arg7: memref<1x8xf32, #tpu.memory_space<vmem>>, %arg8: memref<16x8xf32, #tpu.memory_space<vmem>>) attributes {dimension_semantics = [#tpu.dimension_semantics<parallel>], iteration_bounds = array<i64: 1>, scalar_prefetch = 0 : i64, scratch_operands = 0 : i64, tpu.core_type = #tpu.core_type<tc>, window_params = [{transform_indices = @transform_0, window_bounds = array<i64: 16, 32>}, {transform_indices = @transform_1, window_bounds = array<i64: 16, 32>}, {pipeline_mode = #tpu.pipeline_mode<synchronous>, transform_indices = @transform_2, window_bounds = array<i64: 32, 32>}, {pipeline_mode = #tpu.pipeline_mode<synchronous>, transform_indices = @transform_3, window_bounds = array<i64: 32, 32>}, {pipeline_mode = #tpu.pipeline_mode<synchronous>, transform_indices = @transform_4, window_bounds = array<i64: 1, 32>}, {pipeline_mode = #tpu.pipeline_mode<synchronous>, transform_indices = @transform_5, window_bounds = array<i64: 32, 8>}, {pipeline_mode = #tpu.pipeline_mode<synchronous>, transform_indices = @transform_6, window_bounds = array<i64: 1, 8>}, {transform_indices = @transform_7, window_bounds = array<i64: 16, 8>}]} {
    %c0 = arith.constant 0 : index
    %c0_0 = arith.constant 0 : index
    %0 = vector.load %arg1[%c0, %c0_0] : memref<16x32xf32, #tpu.memory_space<vmem>>, vector<16x32xf32>
    %c0_1 = arith.constant 0 : index
    %c0_2 = arith.constant 0 : index
    %1 = vector.load %arg3[%c0_1, %c0_2] : memref<32x32xf32, #tpu.memory_space<vmem>>, vector<32x32xf32>
    %cst = arith.constant dense<0.000000e+00> : vector<16x32xf32>
    %2 = tpu.matmul %0, %1, %cst {dimension_numbers = #tpu.dot_dimension_numbers<[1], [0], [0], [1], [0, 0, 1, 1], [], []>} : vector<16x32xf32>, vector<32x32xf32>, vector<16x32xf32> -> vector<16x32xf32>
    %c0_3 = arith.constant 0 : index
    %c0_4 = arith.constant 0 : index
    %3 = vector.load %arg2[%c0_3, %c0_4] : memref<16x32xf32, #tpu.memory_space<vmem>>, vector<16x32xf32>
    %c0_5 = arith.constant 0 : index
    %c0_6 = arith.constant 0 : index
    %4 = vector.load %arg4[%c0_5, %c0_6] : memref<32x32xf32, #tpu.memory_space<vmem>>, vector<32x32xf32>
    %cst_7 = arith.constant dense<0.000000e+00> : vector<16x32xf32>
    %5 = tpu.matmul %3, %4, %cst_7 {dimension_numbers = #tpu.dot_dimension_numbers<[1], [0], [0], [1], [0, 0, 1, 1], [], []>} : vector<16x32xf32>, vector<32x32xf32>, vector<16x32xf32> -> vector<16x32xf32>
    %6 = arith.addf %2, %5 : vector<16x32xf32>
    %c0_8 = arith.constant 0 : index
    %c0_9 = arith.constant 0 : index
    %7 = vector.load %arg5[%c0_8, %c0_9] : memref<1x32xf32, #tpu.memory_space<vmem>>, vector<1x32xf32>
    %8 = vector.broadcast %7 : vector<1x32xf32> to vector<16x32xf32>
    %9 = arith.addf %6, %8 : vector<16x32xf32>
    %cst_10 = arith.constant 0.000000e+00 : f32
    %10 = vector.broadcast %cst_10 : f32 to vector<16x32xf32>
    %11 = arith.maximumf %9, %10 : vector<16x32xf32>
    %c0_11 = arith.constant 0 : index
    %c0_12 = arith.constant 0 : index
    %12 = vector.load %arg6[%c0_11, %c0_12] : memref<32x8xf32, #tpu.memory_space<vmem>>, vector<32x8xf32>
    %cst_13 = arith.constant dense<0.000000e+00> : vector<16x8xf32>
    %13 = tpu.matmul %11, %12, %cst_13 {dimension_numbers = #tpu.dot_dimension_numbers<[1], [0], [0], [1], [0, 0, 1, 1], [], []>} : vector<16x32xf32>, vector<32x8xf32>, vector<16x8xf32> -> vector<16x8xf32>
    %c0_14 = arith.constant 0 : index
    %c0_15 = arith.constant 0 : index
    %14 = vector.load %arg7[%c0_14, %c0_15] : memref<1x8xf32, #tpu.memory_space<vmem>>, vector<1x8xf32>
    %15 = vector.broadcast %14 : vector<1x8xf32> to vector<16x8xf32>
    %16 = arith.addf %13, %15 : vector<16x8xf32>
    %c0_16 = arith.constant 0 : index
    %c0_17 = arith.constant 0 : index
    %17 = vector.load %arg8[%c0_16, %c0_17] : memref<16x8xf32, #tpu.memory_space<vmem>>, vector<16x8xf32>
    tpu.vector_store %arg8[%c0_16, %c0_17], %16 {strides = array<i32>} : memref<16x8xf32, #tpu.memory_space<vmem>>, vector<16x8xf32>,
    return
  }
  func.func @transform_0(%arg0: i32) -> (i32, i32) {
    %c0_i32 = arith.constant 0 : i32
    %c0_i32_0 = arith.constant 0 : i32
    return %arg0, %c0_i32 : i32, i32
  }
  func.func @transform_1(%arg0: i32) -> (i32, i32) {
    %c0_i32 = arith.constant 0 : i32
    %c0_i32_0 = arith.constant 0 : i32
    return %arg0, %c0_i32 : i32, i32
  }
  func.func @transform_2(%arg0: i32) -> (i32, i32) {
    %c0_i32 = arith.constant 0 : i32
    %c0_i32_0 = arith.constant 0 : i32
    %c0_i32_1 = arith.constant 0 : i32
    return %c0_i32, %c0_i32_0 : i32, i32
  }
  func.func @transform_3(%arg0: i32) -> (i32, i32) {
    %c0_i32 = arith.constant 0 : i32
    %c0_i32_0 = arith.constant 0 : i32
    %c0_i32_1 = arith.constant 0 : i32
    return %c0_i32, %c0_i32_0 : i32, i32
  }
  func.func @transform_4(%arg0: i32) -> (i32, i32) {
    %c0_i32 = arith.constant 0 : i32
    %c0_i32_0 = arith.constant 0 : i32
    %c0_i32_1 = arith.constant 0 : i32
    return %c0_i32, %c0_i32_0 : i32, i32
  }
  func.func @transform_5(%arg0: i32) -> (i32, i32) {
    %c0_i32 = arith.constant 0 : i32
    %c0_i32_0 = arith.constant 0 : i32
    %c0_i32_1 = arith.constant 0 : i32
    return %c0_i32, %c0_i32_0 : i32, i32
  }
  func.func @transform_6(%arg0: i32) -> (i32, i32) {
    %c0_i32 = arith.constant 0 : i32
    %c0_i32_0 = arith.constant 0 : i32
    %c0_i32_1 = arith.constant 0 : i32
    return %c0_i32, %c0_i32_0 : i32, i32
  }
  func.func @transform_7(%arg0: i32) -> (i32, i32) {
    %c0_i32 = arith.constant 0 : i32
    %c0_i32_0 = arith.constant 0 : i32
    return %arg0, %c0_i32 : i32, i32
  }
}

</mosaic_0001>

<llo_original>
// kernel: gru_network_forward.7
$region0: #{gru_network_forward.7}
  #allocation0 [shape = 'u32[]', space=smem, size = 0x4, offset = 0x4, fixed_abs, tag = 'smem constant byte address 0x4 - core index']
  #allocation1 [shape = 'u32[144,128]{1,0:T(1,128)}', space=vmem, size = 0x12000, scoped, tag = 'internal scratch']
  %s0 = inlined_call_operand.vmem [shape: f32[16,16], index: 0, kind: input, shape index: {}]
  %s1 = inlined_call_operand.vmem [shape: f32[16,96], index: 1, kind: input, shape index: {}]
  %s2 = inlined_call_operand.vmem [shape: f32[1,96], index: 2, kind: input, shape index: {}]
  %s3 = inlined_call_operand.vmem [shape: f32[16,96], index: 3, kind: output, shape index: {}]
  %s4 = sld [smem:[#allocation0]]
  $region22: #{gru_network_forward.7} parent=0
    _
  %s6 = ssub.s32 1, %s4
  %s7 = scalar_select 0, %s6, %s4
  // Predicated region
  $region2: #{gru_network_forward.7} parent=0 // pred_check
    _
  $region3: #{gru_network_forward.7} parent=0 // pred_check_branch
    %9 = sbr.rel (0) target = $region5
  $region4: #{gru_network_forward.7} parent=0 // pred_region
    _
  $region5: #{gru_network_forward.7} parent=0 // pred_fallthru
    _
  // Predicated region
  $region6: #{gru_network_forward.7} parent=0 // pred_check
    _
  $region7: #{gru_network_forward.7} parent=0 // pred_check_branch
    %11 = sbr.rel (0) target = $region9
  $region8: #{gru_network_forward.7} parent=0 // pred_region
    _
  $region9: #{gru_network_forward.7} parent=0 // pred_fallthru
    _
  // Predicated region
  $region10: #{gru_network_forward.7} parent=0 // pred_check
    _
  $region11: #{gru_network_forward.7} parent=0 // pred_check_branch
    %13 = sbr.rel (0) target = $region13
  $region12: #{gru_network_forward.7} parent=0 // pred_region
    _
  $region13: #{gru_network_forward.7} parent=0 // pred_fallthru
    _
  %v14 = vld [vmem:[%s0] sm:$0xff]
  %v15 = vld [vmem:[%s0 + $0x8] sm:$0xff]
  %v16 = vld [vmem:[%s1] sm:$0xff]
  %v17 = vld [vmem:[%s1 + $0x8] sm:$0xff]
  %v18 = vld [vmem:[%s2] sm:$0x1]
  %v20 = vlaneseq
  %v21 = vshrl.u32 %v20, 7
  %v22 = vsub.s32 0, %v21
  %v23 = vrot.slane %v18, %v22
  %vm25 = vcmask 130048
  %v27 = vsel %vm25, %v14, 0
  %v30 = vsel %vm25, %v15, 0
  %32 = vmatprep.subr.mxu0 0.0
  %33 = vmatpush1.msra.mxu0 %v16
  %34 = vmatprep.subr.mxu0 0.0
  %35 = vmatpush1.msra.mxu0 %v17
  %36 = vmatprep.subr.mxu0 0.0
  %37 = vmatpush1.msra.mxu0 0.0
  %38 = vmatprep.subr.mxu0 0.0
  %39 = vmatpush1.msra.mxu0 0.0
  %40 = vmatprep.subr.mxu0 0.0
  %41 = vmatpush1.msra.mxu0 0.0
  %42 = vmatprep.subr.mxu0 0.0
  %43 = vmatpush1.msra.mxu0 0.0
  %44 = vmatprep.subr.mxu0 0.0
  %45 = vmatpush1.msra.mxu0 0.0
  %46 = vmatprep.subr.mxu0 0.0
  %47 = vmatpush1.msra.mxu0 0.0
  %48 = vmatprep.subr.mxu0 0.0
  %49 = vmatpush1.msra.mxu0 0.0
  %50 = vmatprep.subr.mxu0 0.0
  %51 = vmatpush1.msra.mxu0 0.0
  %52 = vmatprep.subr.mxu0 0.0
  %53 = vmatpush1.msra.mxu0 0.0
  %54 = vmatprep.subr.mxu0 0.0
  %55 = vmatpush1.msra.mxu0 0.0
  %56 = vmatprep.subr.mxu0 0.0
  %57 = vmatpush1.msra.mxu0 0.0
  %58 = vmatprep.subr.mxu0 0.0
  %59 = vmatpush1.msra.mxu0 0.0
  %60 = vmatprep.subr.mxu0 0.0
  %61 = vmatpush1.msra.mxu0 0.0
  %62 = vmatprep.subr.mxu0 0.0
  %63 = vmatpush1.msra.mxu0 0.0
  %64 = vmatprep.subr.mxu0 0.0
  %65 = vmatpush1.msra.mxu0 0.0
  %66 = vmatprep.subr.mxu0 0.0
  %67 = vmatpush1.msra.mxu0 0.0
  %68 = vmatprep.subr.mxu0 0.0
  %69 = vmatpush1.msra.mxu0 0.0
  %70 = vmatprep.subr.mxu0 0.0
  %71 = vmatpush1.msra.mxu0 0.0
  %72 = vmatprep.subr.mxu0 0.0
  %73 = vmatpush1.msra.mxu0 0.0
  %74 = vmatprep.subr.mxu0 0.0
  %75 = vmatpush1.msra.mxu0 0.0
  %76 = vmatprep.subr.mxu0 0.0
  %77 = vmatpush1.msra.mxu0 0.0
  %78 = vmatprep.subr.mxu0 0.0
  %79 = vmatpush1.msra.mxu0 0.0
  %80 = vmatprep.subr.mxu0 0.0
  %81 = vmatpush1.msra.mxu0 0.0
  %82 = vmatprep.subr.mxu0 0.0
  %83 = vmatpush1.msra.mxu0 0.0
  %84 = vmatprep.subr.mxu0 0.0
  %85 = vmatpush1.msra.mxu0 0.0
  %86 = vmatprep.subr.mxu0 0.0
  %87 = vmatpush1.msra.mxu0 0.0
  %88 = vmatprep.subr.mxu0 0.0
  %89 = vmatpush1.msra.mxu0 0.0
  %90 = vmatprep.subr.mxu0 0.0
  %91 = vmatpush1.msra.mxu0 0.0
  %92 = vmatprep.subr.mxu0 0.0
  %93 = vmatpush1.msra.mxu0 0.0
  %94 = vmatprep.subr.mxu0 0.0
  %95 = vmatpush1.msra.mxu0 0.0
  %96 = vmatprep.mubr.f32.mxu0 0.0
  %97 = vmatmul.mubr.f32.gmra.mrb[0].mxu0 %v27
  %v98 = vpop.f32.mrb[0].mxu0
  %v99 = vadd.f32 %v23, %v98
  %v100 = vpop.f32.mrb[0].mxu0
  %101 = vmatprep.mubr.f32.mxu0 0.0
  %102 = vmatmul.mubr.f32.gmra.mrb[0].mxu0 %v30
  %v103 = vpop.f32.mrb[0].mxu0
  %v104 = vadd.f32 %v23, %v103
  %v105 = vpop.f32.mrb[0].mxu0
  %106 = vdwg.mxu0
  %vm107 = vcmask 785408
  %108 = vst.msk [vmem:[%s3] sm:$0xff] %vm107, %v99
  %109 = vst.msk [vmem:[%s3 + $0x8] sm:$0xff] %vm107, %v104
  // Predicated region
  $region14: #{gru_network_forward.7} parent=0 // pred_check
    _
  $region15: #{gru_network_forward.7} parent=0 // pred_check_branch
    %111 = sbr.rel (0) target = $region17
  $region16: #{gru_network_forward.7} parent=0 // pred_region
    _
  $region17: #{gru_network_forward.7} parent=0 // pred_fallthru
    _
  // Predicated region
  $region18: #{gru_network_forward.7} parent=0 // pred_check
    _
  $region19: #{gru_network_forward.7} parent=0 // pred_check_branch
    %113 = sbr.rel (0) target = $region21
  $region20: #{gru_network_forward.7} parent=0 // pred_region
    _
  $region21: #{gru_network_forward.7} parent=0 // pred_fallthru
    _

// kernel: gru_network_forward.11
$region0: #{gru_network_forward.11}
  #allocation0 [shape = 'u32[]', space=smem, size = 0x4, offset = 0x4, fixed_abs, tag = 'smem constant byte address 0x4 - core index']
  #allocation1 [shape = 'u32[144,128]{1,0:T(1,128)}', space=vmem, size = 0x12000, scoped, tag = 'internal scratch']
  %s0 = inlined_call_operand.vmem [shape: f32[16,32], index: 0, kind: input, shape index: {}]
  %s1 = inlined_call_operand.vmem [shape: f32[16,32], index: 1, kind: input, shape index: {}]
  %s2 = inlined_call_operand.vmem [shape: f32[32,96], index: 2, kind: input, shape index: {}]
  %s3 = inlined_call_operand.vmem [shape: f32[32,96], index: 3, kind: input, shape index: {}]
  %s4 = inlined_call_operand.vmem [shape: f32[1,96], index: 4, kind: input, shape index: {}]
  %s5 = inlined_call_operand.vmem [shape: f32[16,96], index: 5, kind: output, shape index: {}]
  %s6 = sld [smem:[#allocation0]]
  $region30: #{gru_network_forward.11} parent=0
    _
  %s8 = ssub.s32 1, %s6
  %s9 = scalar_select 0, %s8, %s6
  // Predicated region
  $region2: #{gru_network_forward.11} parent=0 // pred_check
    _
  $region3: #{gru_network_forward.11} parent=0 // pred_check_branch
    %11 = sbr.rel (0) target = $region5
  $region4: #{gru_network_forward.11} parent=0 // pred_region
    _
  $region5: #{gru_network_forward.11} parent=0 // pred_fallthru
    _
  // Predicated region
  $region6: #{gru_network_forward.11} parent=0 // pred_check
    _
  $region7: #{gru_network_forward.11} parent=0 // pred_check_branch
    %13 = sbr.rel (0) target = $region9
  $region8: #{gru_network_forward.11} parent=0 // pred_region
    _
  $region9: #{gru_network_forward.11} parent=0 // pred_fallthru
    _
  // Predicated region
  $region10: #{gru_network_forward.11} parent=0 // pred_check
    _
  $region11: #{gru_network_forward.11} parent=0 // pred_check_branch
    %15 = sbr.rel (0) target = $region13
  $region12: #{gru_network_forward.11} parent=0 // pred_region
    _
  $region13: #{gru_network_forward.11} parent=0 // pred_fallthru
    _
  // Predicated region
  $region14: #{gru_network_forward.11} parent=0 // pred_check
    _
  $region15: #{gru_network_forward.11} parent=0 // pred_check_branch
    %17 = sbr.rel (0) target = $region17
  $region16: #{gru_network_forward.11} parent=0 // pred_region
    _
  $region17: #{gru_network_forward.11} parent=0 // pred_fallthru
    _
  // Predicated region
  $region18: #{gru_network_forward.11} parent=0 // pred_check
    _
  $region19: #{gru_network_forward.11} parent=0 // pred_check_branch
    %19 = sbr.rel (0) target = $region21
  $region20: #{gru_network_forward.11} parent=0 // pred_region
    _
  $region21: #{gru_network_forward.11} parent=0 // pred_fallthru
    _
  %v20 = vld [vmem:[%s0] sm:$0xff]
  %v21 = vld [vmem:[%s0 + $0x8] sm:$0xff]
  %v22 = vld [vmem:[%s2] sm:$0xff]
  %v23 = vld [vmem:[%s2 + $0x8] sm:$0xff]
  %v24 = vld [vmem:[%s2 + $0x10] sm:$0xff]
  %v25 = vld [vmem:[%s2 + $0x18] sm:$0xff]
  %v26 = vld [vmem:[%s1] sm:$0xff]
  %v27 = vld [vmem:[%s1 + $0x8] sm:$0xff]
  %v28 = vld [vmem:[%s3] sm:$0xff]
  %v29 = vld [vmem:[%s3 + $0x8] sm:$0xff]
  %v30 = vld [vmem:[%s3 + $0x10] sm:$0xff]
  %v31 = vld [vmem:[%s3 + $0x18] sm:$0xff]
  %vm32 = vcmask 261120
  %v34 = vsel %vm32, %v26, 0
  %v37 = vsel %vm32, %v27, 0
  %39 = vmatprep.subr.mxu0 0.0
  %40 = vmatpush1.msra.mxu0 %v28
  %41 = vmatprep.subr.mxu0 0.0
  %42 = vmatpush1.msra.mxu0 %v29
  %43 = vmatprep.subr.mxu0 0.0
  %44 = vmatpush1.msra.mxu0 %v30
  %45 = vmatprep.subr.mxu0 0.0
  %46 = vmatpush1.msra.mxu0 %v31
  %47 = vmatprep.subr.mxu0 0.0
  %48 = vmatpush1.msra.mxu0 0.0
  %49 = vmatprep.subr.mxu0 0.0
  %50 = vmatpush1.msra.mxu0 0.0
  %51 = vmatprep.subr.mxu0 0.0
  %52 = vmatpush1.msra.mxu0 0.0
  %53 = vmatprep.subr.mxu0 0.0
  %54 = vmatpush1.msra.mxu0 0.0
  %55 = vmatprep.subr.mxu0 0.0
  %56 = vmatpush1.msra.mxu0 0.0
  %57 = vmatprep.subr.mxu0 0.0
  %58 = vmatpush1.msra.mxu0 0.0
  %59 = vmatprep.subr.mxu0 0.0
  %60 = vmatpush1.msra.mxu0 0.0
  %61 = vmatprep.subr.mxu0 0.0
  %62 = vmatpush1.msra.mxu0 0.0
  %63 = vmatprep.subr.mxu0 0.0
  %64 = vmatpush1.msra.mxu0 0.0
  %65 = vmatprep.subr.mxu0 0.0
  %66 = vmatpush1.msra.mxu0 0.0
  %67 = vmatprep.subr.mxu0 0.0
  %68 = vmatpush1.msra.mxu0 0.0
  %69 = vmatprep.subr.mxu0 0.0
  %70 = vmatpush1.msra.mxu0 0.0
  %71 = vmatprep.subr.mxu0 0.0
  %72 = vmatpush1.msra.mxu0 0.0
  %73 = vmatprep.subr.mxu0 0.0
  %74 = vmatpush1.msra.mxu0 0.0
  %75 = vmatprep.subr.mxu0 0.0
  %76 = vmatpush1.msra.mxu0 0.0
  %77 = vmatprep.subr.mxu0 0.0
  %78 = vmatpush1.msra.mxu0 0.0
  %79 = vmatprep.subr.mxu0 0.0
  %80 = vmatpush1.msra.mxu0 0.0
  %81 = vmatprep.subr.mxu0 0.0
  %82 = vmatpush1.msra.mxu0 0.0
  %83 = vmatprep.subr.mxu0 0.0
  %84 = vmatpush1.msra.mxu0 0.0
  %85 = vmatprep.subr.mxu0 0.0
  %86 = vmatpush1.msra.mxu0 0.0
  %87 = vmatprep.subr.mxu0 0.0
  %88 = vmatpush1.msra.mxu0 0.0
  %89 = vmatprep.subr.mxu0 0.0
  %90 = vmatpush1.msra.mxu0 0.0
  %91 = vmatprep.subr.mxu0 0.0
  %92 = vmatpush1.msra.mxu0 0.0
  %93 = vmatprep.subr.mxu0 0.0
  %94 = vmatpush1.msra.mxu0 0.0
  %95 = vmatprep.subr.mxu0 0.0
  %96 = vmatpush1.msra.mxu0 0.0
  %97 = vmatprep.subr.mxu0 0.0
  %98 = vmatpush1.msra.mxu0 0.0
  %99 = vmatprep.subr.mxu0 0.0
  %100 = vmatpush1.msra.mxu0 0.0
  %101 = vmatprep.subr.mxu0 0.0
  %102 = vmatpush1.msra.mxu0 0.0
  %103 = vmatprep.mubr.f32.mxu0 0.0
  %104 = vmatmul.mubr.f32.gmra.mrb[0].mxu0 %v34
  %v105 = vpop.f32.mrb[0].mxu0
  %v106 = vadd.f32 0.0, %v105
  %v107 = vpop.f32.mrb[0].mxu0
  %108 = vmatprep.mubr.f32.mxu0 0.0
  %109 = vmatmul.mubr.f32.gmra.mrb[0].mxu0 %v37
  %v110 = vpop.f32.mrb[0].mxu0
  %v111 = vadd.f32 0.0, %v110
  %v112 = vpop.f32.mrb[0].mxu0
  %113 = vdwg.mxu0
  %v115 = vsel %vm32, %v20, 0
  %v118 = vsel %vm32, %v21, 0
  %120 = vmatprep.subr.mxu0 0.0
  %121 = vmatpush1.msra.mxu0 %v22
  %122 = vmatprep.subr.mxu0 0.0
  %123 = vmatpush1.msra.mxu0 %v23
  %124 = vmatprep.subr.mxu0 0.0
  %125 = vmatpush1.msra.mxu0 %v24
  %126 = vmatprep.subr.mxu0 0.0
  %127 = vmatpush1.msra.mxu0 %v25
  %128 = vmatprep.subr.mxu0 0.0
  %129 = vmatpush1.msra.mxu0 0.0
  %130 = vmatprep.subr.mxu0 0.0
  %131 = vmatpush1.msra.mxu0 0.0
  %132 = vmatprep.subr.mxu0 0.0
  %133 = vmatpush1.msra.mxu0 0.0
  %134 = vmatprep.subr.mxu0 0.0
  %135 = vmatpush1.msra.mxu0 0.0
  %136 = vmatprep.subr.mxu0 0.0
  %137 = vmatpush1.msra.mxu0 0.0
  %138 = vmatprep.subr.mxu0 0.0
  %139 = vmatpush1.msra.mxu0 0.0
  %140 = vmatprep.subr.mxu0 0.0
  %141 = vmatpush1.msra.mxu0 0.0
  %142 = vmatprep.subr.mxu0 0.0
  %143 = vmatpush1.msra.mxu0 0.0
  %144 = vmatprep.subr.mxu0 0.0
  %145 = vmatpush1.msra.mxu0 0.0
  %146 = vmatprep.subr.mxu0 0.0
  %147 = vmatpush1.msra.mxu0 0.0
  %148 = vmatprep.subr.mxu0 0.0
  %149 = vmatpush1.msra.mxu0 0.0
  %150 = vmatprep.subr.mxu0 0.0
  %151 = vmatpush1.msra.mxu0 0.0
  %152 = vmatprep.subr.mxu0 0.0
  %153 = vmatpush1.msra.mxu0 0.0
  %154 = vmatprep.subr.mxu0 0.0
  %155 = vmatpush1.msra.mxu0 0.0
  %156 = vmatprep.subr.mxu0 0.0
  %157 = vmatpush1.msra.mxu0 0.0
  %158 = vmatprep.subr.mxu0 0.0
  %159 = vmatpush1.msra.mxu0 0.0
  %160 = vmatprep.subr.mxu0 0.0
  %161 = vmatpush1.msra.mxu0 0.0
  %162 = vmatprep.subr.mxu0 0.0
  %163 = vmatpush1.msra.mxu0 0.0
  %164 = vmatprep.subr.mxu0 0.0
  %165 = vmatpush1.msra.mxu0 0.0
  %166 = vmatprep.subr.mxu0 0.0
  %167 = vmatpush1.msra.mxu0 0.0
  %168 = vmatprep.subr.mxu0 0.0
  %169 = vmatpush1.msra.mxu0 0.0
  %170 = vmatprep.subr.mxu0 0.0
  %171 = vmatpush1.msra.mxu0 0.0
  %172 = vmatprep.subr.mxu0 0.0
  %173 = vmatpush1.msra.mxu0 0.0
  %174 = vmatprep.subr.mxu0 0.0
  %175 = vmatpush1.msra.mxu0 0.0
  %176 = vmatprep.subr.mxu0 0.0
  %177 = vmatpush1.msra.mxu0 0.0
  %178 = vmatprep.subr.mxu0 0.0
  %179 = vmatpush1.msra.mxu0 0.0
  %180 = vmatprep.subr.mxu0 0.0
  %181 = vmatpush1.msra.mxu0 0.0
  %182 = vmatprep.subr.mxu0 0.0
  %183 = vmatpush1.msra.mxu0 0.0
  %184 = vmatprep.mubr.f32.mxu0 0.0
  %185 = vmatmul.mubr.f32.gmra.mrb[0].mxu0 %v115
  %v186 = vpop.f32.mrb[0].mxu0
  %v187 = vadd.f32 %v106, %v186
  %v188 = vpop.f32.mrb[0].mxu0
  %189 = vmatprep.mubr.f32.mxu0 0.0
  %190 = vmatmul.mubr.f32.gmra.mrb[0].mxu0 %v118
  %v191 = vpop.f32.mrb[0].mxu0
  %v192 = vadd.f32 %v111, %v191
  %v193 = vpop.f32.mrb[0].mxu0
  %194 = vdwg.mxu0
  %v195 = vld [vmem:[%s4] sm:$0x1]
  %v197 = vlaneseq
  %v198 = vshrl.u32 %v197, 7
  %v199 = vsub.s32 0, %v198
  %v200 = vrot.slane %v195, %v199
  %v202 = vadd.f32 %v187, %v200
  %v203 = vadd.f32 %v192, %v200
  %vm204 = vcmask 785408
  %205 = vst.msk [vmem:[%s5] sm:$0xff] %vm204, %v202
  %206 = vst.msk [vmem:[%s5 + $0x8] sm:$0xff] %vm204, %v203
  // Predicated region
  $region22: #{gru_network_forward.11} parent=0 // pred_check
    _
  $region23: #{gru_network_forward.11} parent=0 // pred_check_branch
    %208 = sbr.rel (0) target = $region25
  $region24: #{gru_network_forward.11} parent=0 // pred_region
    _
  $region25: #{gru_network_forward.11} parent=0 // pred_fallthru
    _
  // Predicated region
  $region26: #{gru_network_forward.11} parent=0 // pred_check
    _
  $region27: #{gru_network_forward.11} parent=0 // pred_check_branch
    %210 = sbr.rel (0) target = $region29
  $region28: #{gru_network_forward.11} parent=0 // pred_region
    _
  $region29: #{gru_network_forward.11} parent=0 // pred_fallthru
    _

// kernel: gru_network_forward.13
$region0: #{gru_network_forward.13}
  #allocation0 [shape = 'u32[]', space=smem, size = 0x4, offset = 0x4, fixed_abs, tag = 'smem constant byte address 0x4 - core index']
  #allocation1 [shape = 'u32[144,128]{1,0:T(1,128)}', space=vmem, size = 0x12000, scoped, tag = 'internal scratch']
  %s0 = inlined_call_operand.vmem [shape: f32[16,32], index: 0, kind: input, shape index: {}]
  %s1 = inlined_call_operand.vmem [shape: f32[16,32], index: 1, kind: input, shape index: {}]
  %s2 = inlined_call_operand.vmem [shape: f32[32,32], index: 2, kind: input, shape index: {}]
  %s3 = inlined_call_operand.vmem [shape: f32[32,32], index: 3, kind: input, shape index: {}]
  %s4 = inlined_call_operand.vmem [shape: f32[1,32], index: 4, kind: input, shape index: {}]
  %s5 = inlined_call_operand.vmem [shape: f32[32,8], index: 5, kind: input, shape index: {}]
  %s6 = inlined_call_operand.vmem [shape: f32[1,8], index: 6, kind: input, shape index: {}]
  %s7 = inlined_call_operand.vmem [shape: f32[16,8], index: 7, kind: output, shape index: {}]
  %s8 = sld [smem:[#allocation0]]
  $region38: #{gru_network_forward.13} parent=0
    _
  %s10 = ssub.s32 1, %s8
  %s11 = scalar_select 0, %s10, %s8
  // Predicated region
  $region2: #{gru_network_forward.13} parent=0 // pred_check
    _
  $region3: #{gru_network_forward.13} parent=0 // pred_check_branch
    %13 = sbr.rel (0) target = $region5
  $region4: #{gru_network_forward.13} parent=0 // pred_region
    _
  $region5: #{gru_network_forward.13} parent=0 // pred_fallthru
    _
  // Predicated region
  $region6: #{gru_network_forward.13} parent=0 // pred_check
    _
  $region7: #{gru_network_forward.13} parent=0 // pred_check_branch
    %15 = sbr.rel (0) target = $region9
  $region8: #{gru_network_forward.13} parent=0 // pred_region
    _
  $region9: #{gru_network_forward.13} parent=0 // pred_fallthru
    _
  // Predicated region
  $region10: #{gru_network_forward.13} parent=0 // pred_check
    _
  $region11: #{gru_network_forward.13} parent=0 // pred_check_branch
    %17 = sbr.rel (0) target = $region13
  $region12: #{gru_network_forward.13} parent=0 // pred_region
    _
  $region13: #{gru_network_forward.13} parent=0 // pred_fallthru
    _
  // Predicated region
  $region14: #{gru_network_forward.13} parent=0 // pred_check
    _
  $region15: #{gru_network_forward.13} parent=0 // pred_check_branch
    %19 = sbr.rel (0) target = $region17
  $region16: #{gru_network_forward.13} parent=0 // pred_region
    _
  $region17: #{gru_network_forward.13} parent=0 // pred_fallthru
    _
  // Predicated region
  $region18: #{gru_network_forward.13} parent=0 // pred_check
    _
  $region19: #{gru_network_forward.13} parent=0 // pred_check_branch
    %21 = sbr.rel (0) target = $region21
  $region20: #{gru_network_forward.13} parent=0 // pred_region
    _
  $region21: #{gru_network_forward.13} parent=0 // pred_fallthru
    _
  // Predicated region
  $region22: #{gru_network_forward.13} parent=0 // pred_check
    _
  $region23: #{gru_network_forward.13} parent=0 // pred_check_branch
    %23 = sbr.rel (0) target = $region25
  $region24: #{gru_network_forward.13} parent=0 // pred_region
    _
  $region25: #{gru_network_forward.13} parent=0 // pred_fallthru
    _
  // Predicated region
  $region26: #{gru_network_forward.13} parent=0 // pred_check
    _
  $region27: #{gru_network_forward.13} parent=0 // pred_check_branch
    %25 = sbr.rel (0) target = $region29
  $region28: #{gru_network_forward.13} parent=0 // pred_region
    _
  $region29: #{gru_network_forward.13} parent=0 // pred_fallthru
    _
  %v26 = vld [vmem:[%s0] sm:$0xff]
  %v27 = vld [vmem:[%s0 + $0x8] sm:$0xff]
  %v28 = vld [vmem:[%s2] sm:$0xff]
  %v29 = vld [vmem:[%s2 + $0x8] sm:$0xff]
  %v30 = vld [vmem:[%s2 + $0x10] sm:$0xff]
  %v31 = vld [vmem:[%s2 + $0x18] sm:$0xff]
  %v32 = vld [vmem:[%s1] sm:$0xff]
  %v33 = vld [vmem:[%s1 + $0x8] sm:$0xff]
  %v34 = vld [vmem:[%s3] sm:$0xff]
  %v35 = vld [vmem:[%s3 + $0x8] sm:$0xff]
  %v36 = vld [vmem:[%s3 + $0x10] sm:$0xff]
  %v37 = vld [vmem:[%s3 + $0x18] sm:$0xff]
  %vm38 = vcmask 261120
  %v40 = vsel %vm38, %v32, 0
  %v43 = vsel %vm38, %v33, 0
  %45 = vmatprep.subr.mxu0 0.0
  %46 = vmatpush1.msra.mxu0 %v34
  %47 = vmatprep.subr.mxu0 0.0
  %48 = vmatpush1.msra.mxu0 %v35
  %49 = vmatprep.subr.mxu0 0.0
  %50 = vmatpush1.msra.mxu0 %v36
  %51 = vmatprep.subr.mxu0 0.0
  %52 = vmatpush1.msra.mxu0 %v37
  %53 = vmatprep.subr.mxu0 0.0
  %54 = vmatpush1.msra.mxu0 0.0
  %55 = vmatprep.subr.mxu0 0.0
  %56 = vmatpush1.msra.mxu0 0.0
  %57 = vmatprep.subr.mxu0 0.0
  %58 = vmatpush1.msra.mxu0 0.0
  %59 = vmatprep.subr.mxu0 0.0
  %60 = vmatpush1.msra.mxu0 0.0
  %61 = vmatprep.subr.mxu0 0.0
  %62 = vmatpush1.msra.mxu0 0.0
  %63 = vmatprep.subr.mxu0 0.0
  %64 = vmatpush1.msra.mxu0 0.0
  %65 = vmatprep.subr.mxu0 0.0
  %66 = vmatpush1.msra.mxu0 0.0
  %67 = vmatprep.subr.mxu0 0.0
  %68 = vmatpush1.msra.mxu0 0.0
  %69 = vmatprep.subr.mxu0 0.0
  %70 = vmatpush1.msra.mxu0 0.0
  %71 = vmatprep.subr.mxu0 0.0
  %72 = vmatpush1.msra.mxu0 0.0
  %73 = vmatprep.subr.mxu0 0.0
  %74 = vmatpush1.msra.mxu0 0.0
  %75 = vmatprep.subr.mxu0 0.0
  %76 = vmatpush1.msra.mxu0 0.0
  %77 = vmatprep.subr.mxu0 0.0
  %78 = vmatpush1.msra.mxu0 0.0
  %79 = vmatprep.subr.mxu0 0.0
  %80 = vmatpush1.msra.mxu0 0.0
  %81 = vmatprep.subr.mxu0 0.0
  %82 = vmatpush1.msra.mxu0 0.0
  %83 = vmatprep.subr.mxu0 0.0
  %84 = vmatpush1.msra.mxu0 0.0
  %85 = vmatprep.subr.mxu0 0.0
  %86 = vmatpush1.msra.mxu0 0.0
  %87 = vmatprep.subr.mxu0 0.0
  %88 = vmatpush1.msra.mxu0 0.0
  %89 = vmatprep.subr.mxu0 0.0
  %90 = vmatpush1.msra.mxu0 0.0
  %91 = vmatprep.subr.mxu0 0.0
  %92 = vmatpush1.msra.mxu0 0.0
  %93 = vmatprep.subr.mxu0 0.0
  %94 = vmatpush1.msra.mxu0 0.0
  %95 = vmatprep.subr.mxu0 0.0
  %96 = vmatpush1.msra.mxu0 0.0
  %97 = vmatprep.subr.mxu0 0.0
  %98 = vmatpush1.msra.mxu0 0.0
  %99 = vmatprep.subr.mxu0 0.0
  %100 = vmatpush1.msra.mxu0 0.0
  %101 = vmatprep.subr.mxu0 0.0
  %102 = vmatpush1.msra.mxu0 0.0
  %103 = vmatprep.subr.mxu0 0.0
  %104 = vmatpush1.msra.mxu0 0.0
  %105 = vmatprep.subr.mxu0 0.0
  %106 = vmatpush1.msra.mxu0 0.0
  %107 = vmatprep.subr.mxu0 0.0
  %108 = vmatpush1.msra.mxu0 0.0
  %109 = vmatprep.mubr.f32.mxu0 0.0
  %110 = vmatmul.mubr.f32.gmra.mrb[0].mxu0 %v40
  %v111 = vpop.f32.mrb[0].mxu0
  %v112 = vadd.f32 0.0, %v111
  %v113 = vpop.f32.mrb[0].mxu0
  %114 = vmatprep.mubr.f32.mxu0 0.0
  %115 = vmatmul.mubr.f32.gmra.mrb[0].mxu0 %v43
  %v116 = vpop.f32.mrb[0].mxu0
  %v117 = vadd.f32 0.0, %v116
  %v118 = vpop.f32.mrb[0].mxu0
  %119 = vdwg.mxu0
  %v121 = vsel %vm38, %v26, 0
  %v124 = vsel %vm38, %v27, 0
  %126 = vmatprep.subr.mxu0 0.0
  %127 = vmatpush1.msra.mxu0 %v28
  %128 = vmatprep.subr.mxu0 0.0
  %129 = vmatpush1.msra.mxu0 %v29
  %130 = vmatprep.subr.mxu0 0.0
  %131 = vmatpush1.msra.mxu0 %v30
  %132 = vmatprep.subr.mxu0 0.0
  %133 = vmatpush1.msra.mxu0 %v31
  %134 = vmatprep.subr.mxu0 0.0
  %135 = vmatpush1.msra.mxu0 0.0
  %136 = vmatprep.subr.mxu0 0.0
  %137 = vmatpush1.msra.mxu0 0.0
  %138 = vmatprep.subr.mxu0 0.0
  %139 = vmatpush1.msra.mxu0 0.0
  %140 = vmatprep.subr.mxu0 0.0
  %141 = vmatpush1.msra.mxu0 0.0
  %142 = vmatprep.subr.mxu0 0.0
  %143 = vmatpush1.msra.mxu0 0.0
  %144 = vmatprep.subr.mxu0 0.0
  %145 = vmatpush1.msra.mxu0 0.0
  %146 = vmatprep.subr.mxu0 0.0
  %147 = vmatpush1.msra.mxu0 0.0
  %148 = vmatprep.subr.mxu0 0.0
  %149 = vmatpush1.msra.mxu0 0.0
  %150 = vmatprep.subr.mxu0 0.0
  %151 = vmatpush1.msra.mxu0 0.0
  %152 = vmatprep.subr.mxu0 0.0
  %153 = vmatpush1.msra.mxu0 0.0
  %154 = vmatprep.subr.mxu0 0.0
  %155 = vmatpush1.msra.mxu0 0.0
  %156 = vmatprep.subr.mxu0 0.0
  %157 = vmatpush1.msra.mxu0 0.0
  %158 = vmatprep.subr.mxu0 0.0
  %159 = vmatpush1.msra.mxu0 0.0
  %160 = vmatprep.subr.mxu0 0.0
  %161 = vmatpush1.msra.mxu0 0.0
  %162 = vmatprep.subr.mxu0 0.0
  %163 = vmatpush1.msra.mxu0 0.0
  %164 = vmatprep.subr.mxu0 0.0
  %165 = vmatpush1.msra.mxu0 0.0
  %166 = vmatprep.subr.mxu0 0.0
  %167 = vmatpush1.msra.mxu0 0.0
  %168 = vmatprep.subr.mxu0 0.0
  %169 = vmatpush1.msra.mxu0 0.0
  %170 = vmatprep.subr.mxu0 0.0
  %171 = vmatpush1.msra.mxu0 0.0
  %172 = vmatprep.subr.mxu0 0.0
  %173 = vmatpush1.msra.mxu0 0.0
  %174 = vmatprep.subr.mxu0 0.0
  %175 = vmatpush1.msra.mxu0 0.0
  %176 = vmatprep.subr.mxu0 0.0
  %177 = vmatpush1.msra.mxu0 0.0
  %178 = vmatprep.subr.mxu0 0.0
  %179 = vmatpush1.msra.mxu0 0.0
  %180 = vmatprep.subr.mxu0 0.0
  %181 = vmatpush1.msra.mxu0 0.0
  %182 = vmatprep.subr.mxu0 0.0
  %183 = vmatpush1.msra.mxu0 0.0
  %184 = vmatprep.subr.mxu0 0.0
  %185 = vmatpush1.msra.mxu0 0.0
  %186 = vmatprep.subr.mxu0 0.0
  %187 = vmatpush1.msra.mxu0 0.0
  %188 = vmatprep.subr.mxu0 0.0
  %189 = vmatpush1.msra.mxu0 0.0
  %190 = vmatprep.mubr.f32.mxu0 0.0
  %191 = vmatmul.mubr.f32.gmra.mrb[0].mxu0 %v121
  %v192 = vpop.f32.mrb[0].mxu0
  %v193 = vadd.f32 %v112, %v192
  %v194 = vpop.f32.mrb[0].mxu0
  %195 = vmatprep.mubr.f32.mxu0 0.0
  %196 = vmatmul.mubr.f32.gmra.mrb[0].mxu0 %v124
  %v197 = vpop.f32.mrb[0].mxu0
  %v198 = vadd.f32 %v117, %v197
  %v199 = vpop.f32.mrb[0].mxu0
  %200 = vdwg.mxu0
  %v201 = vld [vmem:[%s4] sm:$0x1]
  %v203 = vlaneseq
  %v204 = vshrl.u32 %v203, 7
  %v205 = vsub.s32 0, %v204
  %v206 = vrot.slane %v201, %v205
  %v208 = vadd.f32 %v193, %v206
  %v209 = vadd.f32 %v198, %v206
  %v210 = vmax.f32 %v208, 0.0
  %v211 = vmax.f32 %v209, 0.0
  %v212 = vld [vmem:[%s5] sm:$0xff]
  %v213 = vld [vmem:[%s5 + $0x8] sm:$0xff]
  %v214 = vld [vmem:[%s5 + $0x10] sm:$0xff]
  %v215 = vld [vmem:[%s5 + $0x18] sm:$0xff]
  %v216 = vld [vmem:[%s6] sm:$0x1]
  %v218 = vlaneseq
  %v219 = vshrl.u32 %v218, 7
  %v220 = vsub.s32 0, %v219
  %v221 = vrot.slane %v216, %v220
  %v224 = vsel %vm38, %v210, 0
  %v227 = vsel %vm38, %v211, 0
  %229 = vmatprep.subr.mxu0 0.0
  %230 = vmatpush1.msra.mxu0 %v212
  %231 = vmatprep.subr.mxu0 0.0
  %232 = vmatpush1.msra.mxu0 %v213
  %233 = vmatprep.subr.mxu0 0.0
  %234 = vmatpush1.msra.mxu0 %v214
  %235 = vmatprep.subr.mxu0 0.0
  %236 = vmatpush1.msra.mxu0 %v215
  %237 = vmatprep.subr.mxu0 0.0
  %238 = vmatpush1.msra.mxu0 0.0
  %239 = vmatprep.subr.mxu0 0.0
  %240 = vmatpush1.msra.mxu0 0.0
  %241 = vmatprep.subr.mxu0 0.0
  %242 = vmatpush1.msra.mxu0 0.0
  %243 = vmatprep.subr.mxu0 0.0
  %244 = vmatpush1.msra.mxu0 0.0
  %245 = vmatprep.subr.mxu0 0.0
  %246 = vmatpush1.msra.mxu0 0.0
  %247 = vmatprep.subr.mxu0 0.0
  %248 = vmatpush1.msra.mxu0 0.0
  %249 = vmatprep.subr.mxu0 0.0
  %250 = vmatpush1.msra.mxu0 0.0
  %251 = vmatprep.subr.mxu0 0.0
  %252 = vmatpush1.msra.mxu0 0.0
  %253 = vmatprep.subr.mxu0 0.0
  %254 = vmatpush1.msra.mxu0 0.0
  %255 = vmatprep.subr.mxu0 0.0
  %256 = vmatpush1.msra.mxu0 0.0
  %257 = vmatprep.subr.mxu0 0.0
  %258 = vmatpush1.msra.mxu0 0.0
  %259 = vmatprep.subr.mxu0 0.0
  %260 = vmatpush1.msra.mxu0 0.0
  %261 = vmatprep.subr.mxu0 0.0
  %262 = vmatpush1.msra.mxu0 0.0
  %263 = vmatprep.subr.mxu0 0.0
  %264 = vmatpush1.msra.mxu0 0.0
  %265 = vmatprep.subr.mxu0 0.0
  %266 = vmatpush1.msra.mxu0 0.0
  %267 = vmatprep.subr.mxu0 0.0
  %268 = vmatpush1.msra.mxu0 0.0
  %269 = vmatprep.subr.mxu0 0.0
  %270 = vmatpush1.msra.mxu0 0.0
  %271 = vmatprep.subr.mxu0 0.0
  %272 = vmatpush1.msra.mxu0 0.0
  %273 = vmatprep.subr.mxu0 0.0
  %274 = vmatpush1.msra.mxu0 0.0
  %275 = vmatprep.subr.mxu0 0.0
  %276 = vmatpush1.msra.mxu0 0.0
  %277 = vmatprep.subr.mxu0 0.0
  %278 = vmatpush1.msra.mxu0 0.0
  %279 = vmatprep.subr.mxu0 0.0
  %280 = vmatpush1.msra.mxu0 0.0
  %281 = vmatprep.subr.mxu0 0.0
  %282 = vmatpush1.msra.mxu0 0.0
  %283 = vmatprep.subr.mxu0 0.0
  %284 = vmatpush1.msra.mxu0 0.0
  %285 = vmatprep.subr.mxu0 0.0
  %286 = vmatpush1.msra.mxu0 0.0
  %287 = vmatprep.subr.mxu0 0.0
  %288 = vmatpush1.msra.mxu0 0.0
  %289 = vmatprep.subr.mxu0 0.0
  %290 = vmatpush1.msra.mxu0 0.0
  %291 = vmatprep.subr.mxu0 0.0
  %292 = vmatpush1.msra.mxu0 0.0
  %293 = vmatprep.mubr.f32.mxu0 0.0
  %294 = vmatmul.mubr.f32.gmra.mrb[0].mxu0 %v224
  %v295 = vpop.f32.mrb[0].mxu0
  %v296 = vadd.f32 %v221, %v295
  %v297 = vpop.f32.mrb[0].mxu0
  %298 = vmatprep.mubr.f32.mxu0 0.0
  %299 = vmatmul.mubr.f32.gmra.mrb[0].mxu0 %v227
  %v300 = vpop.f32.mrb[0].mxu0
  %v301 = vadd.f32 %v221, %v300
  %v302 = vpop.f32.mrb[0].mxu0
  %303 = vdwg.mxu0
  %vm304 = vcmask 64512
  %305 = vst.msk [vmem:[%s7] sm:$0xff] %vm304, %v296
  %306 = vst.msk [vmem:[%s7 + $0x8] sm:$0xff] %vm304, %v301
  // Predicated region
  $region30: #{gru_network_forward.13} parent=0 // pred_check
    _
  $region31: #{gru_network_forward.13} parent=0 // pred_check_branch
    %308 = sbr.rel (0) target = $region33
  $region32: #{gru_network_forward.13} parent=0 // pred_region
    _
  $region33: #{gru_network_forward.13} parent=0 // pred_fallthru
    _
  // Predicated region
  $region34: #{gru_network_forward.13} parent=0 // pred_check
    _
  $region35: #{gru_network_forward.13} parent=0 // pred_check_branch
    %310 = sbr.rel (0) target = $region37
  $region36: #{gru_network_forward.13} parent=0 // pred_region
    _
  $region37: #{gru_network_forward.13} parent=0 // pred_fallthru
    _

// kernel: gru_network_forward.9
$region0: #{gru_network_forward.9}
  #allocation0 [shape = 'u32[]', space=smem, size = 0x4, offset = 0x4, fixed_abs, tag = 'smem constant byte address 0x4 - core index']
  #allocation1 [shape = 'u32[144,128]{1,0:T(1,128)}', space=vmem, size = 0x12000, scoped, tag = 'internal scratch']
  #allocation2 [shape = 'f32[2,32]{1,0:T(2,128)}', space=vmem, size = 0x400, scoped, tag = 'scratch operand']
  #allocation3 [shape = 'f32[2,32]{1,0:T(2,128)}', space=vmem, size = 0x400, scoped, tag = 'scratch operand']
  %s0 = inlined_call_operand.vmem [shape: f32[8,2,96], index: 0, kind: input, shape index: {}]
  %s1 = inlined_call_operand.vmem [shape: f32[8,2,96], index: 1, kind: input, shape index: {}]
  %s2 = inlined_call_operand.vmem [shape: f32[32,96], index: 2, kind: input, shape index: {}]
  %s3 = inlined_call_operand.vmem [shape: f32[32,96], index: 3, kind: input, shape index: {}]
  %s4 = inlined_call_operand.vmem [shape: f32[1,96], index: 4, kind: input, shape index: {}]
  %s5 = inlined_call_operand.vmem [shape: f32[1,96], index: 5, kind: input, shape index: {}]
  %s6 = inlined_call_operand.vmem [shape: f32[8,2,32], index: 6, kind: output, shape index: {0}]
  %s7 = inlined_call_operand.vmem [shape: f32[8,2,32], index: 7, kind: output, shape index: {1}]
  %8 = xla_tuple %s6, %s7
  %s9 = sld [smem:[#allocation0]]
  $region46: #{gru_network_forward.9} parent=0
    _
  %s11 = ssub.s32 1, %s9
  %s12 = scalar_select 0, %s11, %s9
  // Predicated region
  $region2: #{gru_network_forward.9} parent=0 // pred_check
    _
  $region3: #{gru_network_forward.9} parent=0 // pred_check_branch
    %14 = sbr.rel (0) target = $region5
  $region4: #{gru_network_forward.9} parent=0 // pred_region
    _
  $region5: #{gru_network_forward.9} parent=0 // pred_fallthru
    _
  // Predicated region
  $region6: #{gru_network_forward.9} parent=0 // pred_check
    _
  $region7: #{gru_network_forward.9} parent=0 // pred_check_branch
    %16 = sbr.rel (0) target = $region9
  $region8: #{gru_network_forward.9} parent=0 // pred_region
    %s17 = ssub.s32 0, 0
    %s18 = smul.u32 8, %s17
    %p19 = scmp.lt.s32.totalorder %s18, 7
    %s20 = scalar_select %p19, %s18, 7
    %s21 = smul.addr %s20, 2
    %s22 = scalar_lea.vmem %s1, %s21
    %s23 = ssub.s32 0, 0
    %s24 = smul.u32 8, %s23
  $region9: #{gru_network_forward.9} parent=0 // pred_fallthru
    _
  // Predicated region
  $region10: #{gru_network_forward.9} parent=0 // pred_check
    _
  $region11: #{gru_network_forward.9} parent=0 // pred_check_branch
    %26 = sbr.rel (0) target = $region13
  $region12: #{gru_network_forward.9} parent=0 // pred_region
    _
  $region13: #{gru_network_forward.9} parent=0 // pred_fallthru
    _
  // Predicated region
  $region14: #{gru_network_forward.9} parent=0 // pred_check
    _
  $region15: #{gru_network_forward.9} parent=0 // pred_check_branch
    %28 = sbr.rel (0) target = $region17
  $region16: #{gru_network_forward.9} parent=0 // pred_region
    _
  $region17: #{gru_network_forward.9} parent=0 // pred_fallthru
    _
  // Predicated region
  $region18: #{gru_network_forward.9} parent=0 // pred_check
    _
  $region19: #{gru_network_forward.9} parent=0 // pred_check_branch
    %30 = sbr.rel (0) target = $region21
  $region20: #{gru_network_forward.9} parent=0 // pred_region
    _
  $region21: #{gru_network_forward.9} parent=0 // pred_fallthru
    _
  // Predicated region
  $region22: #{gru_network_forward.9} parent=0 // pred_check
    _
  $region23: #{gru_network_forward.9} parent=0 // pred_check_branch
    %32 = sbr.rel (0) target = $region25
  $region24: #{gru_network_forward.9} parent=0 // pred_region
    _
  $region25: #{gru_network_forward.9} parent=0 // pred_fallthru
    _
  %s33 = ssub.s32 0, 0
  %s34 = smul.u32 8, %s33
  %p35 = scmp.lt.s32.totalorder %s34, 7
  %s36 = scalar_select %p35, %s34, 7
  %s37 = smul.addr %s36, 2
  %s38 = scalar_lea.vmem %s1, %s37
  %s39 = ssub.s32 0, 0
  %s40 = smul.u32 8, %s39
  %p41 = scmp.lt.s32.totalorder %s40, 7
  %s42 = scalar_select %p41, %s40, 7
  %s43 = smul.addr %s42, 2
  %s44 = scalar_lea.vmem %s7, %s43
  %s45 = ssub.s32 0, 0
  %s46 = smul.u32 8, %s45
  %p47 = scmp.lt.s32.totalorder %s46, 7
  %s48 = scalar_select %p47, %s46, 7
  %s49 = smul.addr %s48, 2
  %s50 = scalar_lea.vmem %s1, %s49
  %s51 = ssub.s32 0, 0
  %s52 = smul.u32 8, %s51
  %s53 = ssub.s32 0, 0
  %s54 = smul.u32 8, %s53
  %p55 = scmp.lt.s32.totalorder %s54, 7
  %s56 = scalar_select %p55, %s54, 7
  %s57 = smul.addr %s56, 2
  %s58 = scalar_lea.vmem %s7, %s57
  %s59 = ssub.s32 0, 0
  %s60 = smul.u32 8, %s59
  %p61 = scmp.eq.s32.totalorder 0, 0
  // Predicated region
  $region26: #{gru_network_forward.9} parent=0 // pred_check
    %p62 = pneg %p61
  $region27: #{gru_network_forward.9} parent=0 // pred_check_branch
    %64 = sbr.rel (%p62) target = $region29
  $region28: #{gru_network_forward.9} parent=0 // pred_region
    %vm65 = vcmask 254976
    %66 = vst.msk [vmem:[#allocation2] sm:$0x3] %vm65, 0.0
    %67 = vst.msk [vmem:[#allocation3] sm:$0x3] %vm65, 0.0
  $region29: #{gru_network_forward.9} parent=0 // pred_fallthru
    _
  %v68 = vld [vmem:[%s2] sm:$0xff]
  %v69 = vld [vmem:[%s2 + $0x8] sm:$0xff]
  %v70 = vld [vmem:[%s2 + $0x10] sm:$0xff]
  %v71 = vld [vmem:[%s2 + $0x18] sm:$0xff]
  %v72 = vld [vmem:[%s3] sm:$0xff]
  %v73 = vld [vmem:[%s3 + $0x8] sm:$0xff]
  %v74 = vld [vmem:[%s3 + $0x10] sm:$0xff]
  %v75 = vld [vmem:[%s3 + $0x18] sm:$0xff]
  %v76 = vld [vmem:[%s4] sm:$0x1]
  %v77 = vld [vmem:[%s5] sm:$0x1]
  %v78 = vld [vmem:[#allocation2] sm:$0x3]
  %v79 = vld [vmem:[#allocation3] sm:$0x3]
  %v80 = vld [vmem:[%s0] sm:$0x3]
  %v82 = vlaneseq
  %v83 = vshrl.u32 %v82, 7
  %v84 = vsub.s32 0, %v83
  %v85 = vrot.slane %v76, %v84
  %vm87 = vcmask 261120
  %v89 = vsel %vm87, %v78, 0
  %91 = vmatprep.subr.mxu0 0.0
  %92 = vmatpush1.msra.mxu0 %v68
  %93 = vmatprep.subr.mxu0 0.0
  %94 = vmatpush1.msra.mxu0 %v69
  %95 = vmatprep.subr.mxu0 0.0
  %96 = vmatpush1.msra.mxu0 %v70
  %97 = vmatprep.subr.mxu0 0.0
  %98 = vmatpush1.msra.mxu0 %v71
  %99 = vmatprep.subr.mxu0 0.0
  %100 = vmatpush1.msra.mxu0 0.0
  %101 = vmatprep.subr.mxu0 0.0
  %102 = vmatpush1.msra.mxu0 0.0
  %103 = vmatprep.subr.mxu0 0.0
  %104 = vmatpush1.msra.mxu0 0.0
  %105 = vmatprep.subr.mxu0 0.0
  %106 = vmatpush1.msra.mxu0 0.0
  %107 = vmatprep.subr.mxu0 0.0
  %108 = vmatpush1.msra.mxu0 0.0
  %109 = vmatprep.subr.mxu0 0.0
  %110 = vmatpush1.msra.mxu0 0.0
  %111 = vmatprep.subr.mxu0 0.0
  %112 = vmatpush1.msra.mxu0 0.0
  %113 = vmatprep.subr.mxu0 0.0
  %114 = vmatpush1.msra.mxu0 0.0
  %115 = vmatprep.subr.mxu0 0.0
  %116 = vmatpush1.msra.mxu0 0.0
  %117 = vmatprep.subr.mxu0 0.0
  %118 = vmatpush1.msra.mxu0 0.0
  %119 = vmatprep.subr.mxu0 0.0
  %120 = vmatpush1.msra.mxu0 0.0
  %121 = vmatprep.subr.mxu0 0.0
  %122 = vmatpush1.msra.mxu0 0.0
  %123 = vmatprep.subr.mxu0 0.0
  %124 = vmatpush1.msra.mxu0 0.0
  %125 = vmatprep.subr.mxu0 0.0
  %126 = vmatpush1.msra.mxu0 0.0
  %127 = vmatprep.subr.mxu0 0.0
  %128 = vmatpush1.msra.mxu0 0.0
  %129 = vmatprep.subr.mxu0 0.0
  %130 = vmatpush1.msra.mxu0 0.0
  %131 = vmatprep.subr.mxu0 0.0
  %132 = vmatpush1.msra.mxu0 0.0
  %133 = vmatprep.subr.mxu0 0.0
  %134 = vmatpush1.msra.mxu0 0.0
  %135 = vmatprep.subr.mxu0 0.0
  %136 = vmatpush1.msra.mxu0 0.0
  %137 = vmatprep.subr.mxu0 0.0
  %138 = vmatpush1.msra.mxu0 0.0
  %139 = vmatprep.subr.mxu0 0.0
  %140 = vmatpush1.msra.mxu0 0.0
  %141 = vmatprep.subr.mxu0 0.0
  %142 = vmatpush1.msra.mxu0 0.0
  %143 = vmatprep.subr.mxu0 0.0
  %144 = vmatpush1.msra.mxu0 0.0
  %145 = vmatprep.subr.mxu0 0.0
  %146 = vmatpush1.msra.mxu0 0.0
  %147 = vmatprep.subr.mxu0 0.0
  %148 = vmatpush1.msra.mxu0 0.0
  %149 = vmatprep.subr.mxu0 0.0
  %150 = vmatpush1.msra.mxu0 0.0
  %151 = vmatprep.subr.mxu0 0.0
  %152 = vmatpush1.msra.mxu0 0.0
  %153 = vmatprep.subr.mxu0 0.0
  %154 = vmatpush1.msra.mxu0 0.0
  %155 = vmatprep.mubr.f32.mxu0 0.0
  %156 = vmatmul.mubr.f32.gmra.mrb[0].mxu0 %v89
  %v157 = vpop.f32.mrb[0].mxu0
  %v158 = vadd.f32 %v85, %v157
  %v159 = vpop.f32.mrb[0].mxu0
  %160 = vdwg.mxu0
  %v161 = vadd.f32 %v80, %v158
  %v162 = vxor.u32 %v161, 2147483648
  %v163 = vmul.f32 %v162, 1.442695
  %v164 = vpow.pop %v163
  %v165 = vadd.f32 %v164, 1.0
  %v166 = vrcp.pop %v165
  %v167 = vmul.f32 1.0, %v166
  %169 = vrot.lane.b32.xlu0 %v158, 64
  %v170 = vpop.permute.xlu0 %169
  %v172 = vmul.f32 %v167, %v170
  %174 = vrot.lane.b32.xlu0 %v172, 64
  %v175 = vpop.permute.xlu0 %174
  %v177 = vadd.f32 %v80, %v175
  %v178 = vtanh.pop %v177
  %v179 = vsub.f32 1.0, %v167
  %181 = vrot.lane.b32.xlu0 %v178, 96
  %v182 = vpop.permute.xlu0 %181
  %v184 = vmul.f32 %v179, %v182
  %185 = vrot.lane.b32.xlu0 %v78, 32
  %v186 = vpop.permute.xlu0 %185
  %v188 = vmul.f32 %v167, %v186
  %v189 = vadd.f32 %v184, %v188
  %191 = vrot.lane.b32.xlu0 %v189, 96
  %v192 = vpop.permute.xlu0 %191
  %vm194 = vcmask 254976
  %195 = vst.msk [vmem:[%s6] sm:$0x3] %vm194, %v192
  %s196 = scalar_lea.vmem %s50, 14
  %v197 = vld [vmem:[%s196] sm:$0x3]
  %v199 = vlaneseq
  %v200 = vshrl.u32 %v199, 7
  %v201 = vsub.s32 0, %v200
  %v202 = vrot.slane %v77, %v201
  %v205 = vsel %vm87, %v79, 0
  %207 = vmatprep.subr.mxu0 0.0
  %208 = vmatpush1.msra.mxu0 %v72
  %209 = vmatprep.subr.mxu0 0.0
  %210 = vmatpush1.msra.mxu0 %v73
  %211 = vmatprep.subr.mxu0 0.0
  %212 = vmatpush1.msra.mxu0 %v74
  %213 = vmatprep.subr.mxu0 0.0
  %214 = vmatpush1.msra.mxu0 %v75
  %215 = vmatprep.subr.mxu0 0.0
  %216 = vmatpush1.msra.mxu0 0.0
  %217 = vmatprep.subr.mxu0 0.0
  %218 = vmatpush1.msra.mxu0 0.0
  %219 = vmatprep.subr.mxu0 0.0
  %220 = vmatpush1.msra.mxu0 0.0
  %221 = vmatprep.subr.mxu0 0.0
  %222 = vmatpush1.msra.mxu0 0.0
  %223 = vmatprep.subr.mxu0 0.0
  %224 = vmatpush1.msra.mxu0 0.0
  %225 = vmatprep.subr.mxu0 0.0
  %226 = vmatpush1.msra.mxu0 0.0
  %227 = vmatprep.subr.mxu0 0.0
  %228 = vmatpush1.msra.mxu0 0.0
  %229 = vmatprep.subr.mxu0 0.0
  %230 = vmatpush1.msra.mxu0 0.0
  %231 = vmatprep.subr.mxu0 0.0
  %232 = vmatpush1.msra.mxu0 0.0
  %233 = vmatprep.subr.mxu0 0.0
  %234 = vmatpush1.msra.mxu0 0.0
  %235 = vmatprep.subr.mxu0 0.0
  %236 = vmatpush1.msra.mxu0 0.0
  %237 = vmatprep.subr.mxu0 0.0
  %238 = vmatpush1.msra.mxu0 0.0
  %239 = vmatprep.subr.mxu0 0.0
  %240 = vmatpush1.msra.mxu0 0.0
  %241 = vmatprep.subr.mxu0 0.0
  %242 = vmatpush1.msra.mxu0 0.0
  %243 = vmatprep.subr.mxu0 0.0
  %244 = vmatpush1.msra.mxu0 0.0
  %245 = vmatprep.subr.mxu0 0.0
  %246 = vmatpush1.msra.mxu0 0.0
  %247 = vmatprep.subr.mxu0 0.0
  %248 = vmatpush1.msra.mxu0 0.0
  %249 = vmatprep.subr.mxu0 0.0
  %250 = vmatpush1.msra.mxu0 0.0
  %251 = vmatprep.subr.mxu0 0.0
  %252 = vmatpush1.msra.mxu0 0.0
  %253 = vmatprep.subr.mxu0 0.0
  %254 = vmatpush1.msra.mxu0 0.0
  %255 = vmatprep.subr.mxu0 0.0
  %256 = vmatpush1.msra.mxu0 0.0
  %257 = vmatprep.subr.mxu0 0.0
  %258 = vmatpush1.msra.mxu0 0.0
  %259 = vmatprep.subr.mxu0 0.0
  %260 = vmatpush1.msra.mxu0 0.0
  %261 = vmatprep.subr.mxu0 0.0
  %262 = vmatpush1.msra.mxu0 0.0
  %263 = vmatprep.subr.mxu0 0.0
  %264 = vmatpush1.msra.mxu0 0.0
  %265 = vmatprep.subr.mxu0 0.0
  %266 = vmatpush1.msra.mxu0 0.0
  %267 = vmatprep.subr.mxu0 0.0
  %268 = vmatpush1.msra.mxu0 0.0
  %269 = vmatprep.subr.mxu0 0.0
  %270 = vmatpush1.msra.mxu0 0.0
  %271 = vmatprep.mubr.f32.mxu0 0.0
  %272 = vmatmul.mubr.f32.gmra.mrb[0].mxu0 %v205
  %v273 = vpop.f32.mrb[0].mxu0
  %v274 = vadd.f32 %v202, %v273
  %v275 = vpop.f32.mrb[0].mxu0
  %276 = vdwg.mxu0
  %v277 = vadd.f32 %v197, %v274
  %v278 = vxor.u32 %v277, 2147483648
  %v279 = vmul.f32 %v278, 1.442695
  %v280 = vpow.pop %v279
  %v281 = vadd.f32 %v280, 1.0
  %v282 = vrcp.pop %v281
  %v283 = vmul.f32 1.0, %v282
  %285 = vrot.lane.b32.xlu0 %v274, 64
  %v286 = vpop.permute.xlu0 %285
  %v288 = vmul.f32 %v283, %v286
  %290 = vrot.lane.b32.xlu0 %v288, 64
  %v291 = vpop.permute.xlu0 %290
  %v293 = vadd.f32 %v197, %v291
  %v294 = vtanh.pop %v293
  %v295 = vsub.f32 1.0, %v283
  %297 = vrot.lane.b32.xlu0 %v294, 96
  %v298 = vpop.permute.xlu0 %297
  %v300 = vmul.f32 %v295, %v298
  %301 = vrot.lane.b32.xlu0 %v79, 32
  %v302 = vpop.permute.xlu0 %301
  %v304 = vmul.f32 %v283, %v302
  %v305 = vadd.f32 %v300, %v304
  %307 = vrot.lane.b32.xlu0 %v305, 96
  %v308 = vpop.permute.xlu0 %307
  %s310 = scalar_lea.vmem %s58, 14
  %311 = vst.msk [vmem:[%s310] sm:$0x3] %vm194, %v308
  %s312 = scalar_lea.vmem %s0, 2
  %v313 = vld [vmem:[%s312] sm:$0x3]
  %v314 = vsel %vm87, %v192, 0
  %316 = vmatprep.subr.mxu0 0.0
  %317 = vmatpush1.msra.mxu0 %v68
  %318 = vmatprep.subr.mxu0 0.0
  %319 = vmatpush1.msra.mxu0 %v69
  %320 = vmatprep.subr.mxu0 0.0
  %321 = vmatpush1.msra.mxu0 %v70
  %322 = vmatprep.subr.mxu0 0.0
  %323 = vmatpush1.msra.mxu0 %v71
  %324 = vmatprep.subr.mxu0 0.0
  %325 = vmatpush1.msra.mxu0 0.0
  %326 = vmatprep.subr.mxu0 0.0
  %327 = vmatpush1.msra.mxu0 0.0
  %328 = vmatprep.subr.mxu0 0.0
  %329 = vmatpush1.msra.mxu0 0.0
  %330 = vmatprep.subr.mxu0 0.0
  %331 = vmatpush1.msra.mxu0 0.0
  %332 = vmatprep.subr.mxu0 0.0
  %333 = vmatpush1.msra.mxu0 0.0
  %334 = vmatprep.subr.mxu0 0.0
  %335 = vmatpush1.msra.mxu0 0.0
  %336 = vmatprep.subr.mxu0 0.0
  %337 = vmatpush1.msra.mxu0 0.0
  %338 = vmatprep.subr.mxu0 0.0
  %339 = vmatpush1.msra.mxu0 0.0
  %340 = vmatprep.subr.mxu0 0.0
  %341 = vmatpush1.msra.mxu0 0.0
  %342 = vmatprep.subr.mxu0 0.0
  %343 = vmatpush1.msra.mxu0 0.0
  %344 = vmatprep.subr.mxu0 0.0
  %345 = vmatpush1.msra.mxu0 0.0
  %346 = vmatprep.subr.mxu0 0.0
  %347 = vmatpush1.msra.mxu0 0.0
  %348 = vmatprep.subr.mxu0 0.0
  %349 = vmatpush1.msra.mxu0 0.0
  %350 = vmatprep.subr.mxu0 0.0
  %351 = vmatpush1.msra.mxu0 0.0
  %352 = vmatprep.subr.mxu0 0.0
  %353 = vmatpush1.msra.mxu0 0.0
  %354 = vmatprep.subr.mxu0 0.0
  %355 = vmatpush1.msra.mxu0 0.0
  %356 = vmatprep.subr.mxu0 0.0
  %357 = vmatpush1.msra.mxu0 0.0
  %358 = vmatprep.subr.mxu0 0.0
  %359 = vmatpush1.msra.mxu0 0.0
  %360 = vmatprep.subr.mxu0 0.0
  %361 = vmatpush1.msra.mxu0 0.0
  %362 = vmatprep.subr.mxu0 0.0
  %363 = vmatpush1.msra.mxu0 0.0
  %364 = vmatprep.subr.mxu0 0.0
  %365 = vmatpush1.msra.mxu0 0.0
  %366 = vmatprep.subr.mxu0 0.0
  %367 = vmatpush1.msra.mxu0 0.0
  %368 = vmatprep.subr.mxu0 0.0
  %369 = vmatpush1.msra.mxu0 0.0
  %370 = vmatprep.subr.mxu0 0.0
  %371 = vmatpush1.msra.mxu0 0.0
  %372 = vmatprep.subr.mxu0 0.0
  %373 = vmatpush1.msra.mxu0 0.0
  %374 = vmatprep.subr.mxu0 0.0
  %375 = vmatpush1.msra.mxu0 0.0
  %376 = vmatprep.subr.mxu0 0.0
  %377 = vmatpush1.msra.mxu0 0.0
  %378 = vmatprep.subr.mxu0 0.0
  %379 = vmatpush1.msra.mxu0 0.0
  %380 = vmatprep.mubr.f32.mxu0 0.0
  %381 = vmatmul.mubr.f32.gmra.mrb[0].mxu0 %v314
  %v382 = vpop.f32.mrb[0].mxu0
  %v383 = vadd.f32 %v85, %v382
  %v384 = vpop.f32.mrb[0].mxu0
  %385 = vdwg.mxu0
  %v386 = vadd.f32 %v313, %v383
  %v387 = vxor.u32 %v386, 2147483648
  %v388 = vmul.f32 %v387, 1.442695
  %v389 = vpow.pop %v388
  %v390 = vadd.f32 %v389, 1.0
  %v391 = vrcp.pop %v390
  %v392 = vmul.f32 1.0, %v391
  %394 = vrot.lane.b32.xlu0 %v383, 64
  %v395 = vpop.permute.xlu0 %394
  %v397 = vmul.f32 %v392, %v395
  %399 = vrot.lane.b32.xlu0 %v397, 64
  %v400 = vpop.permute.xlu0 %399
  %v402 = vadd.f32 %v313, %v400
  %v403 = vtanh.pop %v402
  %v404 = vsub.f32 1.0, %v392
  %406 = vrot.lane.b32.xlu0 %v403, 96
  %v407 = vpop.permute.xlu0 %406
  %v409 = vmul.f32 %v404, %v407
  %v410 = vmul.f32 %v392, %v189
  %v411 = vadd.f32 %v409, %v410
  %413 = vrot.lane.b32.xlu0 %v411, 96
  %v414 = vpop.permute.xlu0 %413
  %s416 = scalar_lea.vmem %s6, 2
  %417 = vst.msk [vmem:[%s416] sm:$0x3] %vm194, %v414
  %s418 = scalar_lea.vmem %s50, 12
  %v419 = vld [vmem:[%s418] sm:$0x3]
  %v420 = vsel %vm87, %v308, 0
  %422 = vmatprep.subr.mxu0 0.0
  %423 = vmatpush1.msra.mxu0 %v72
  %424 = vmatprep.subr.mxu0 0.0
  %425 = vmatpush1.msra.mxu0 %v73
  %426 = vmatprep.subr.mxu0 0.0
  %427 = vmatpush1.msra.mxu0 %v74
  %428 = vmatprep.subr.mxu0 0.0
  %429 = vmatpush1.msra.mxu0 %v75
  %430 = vmatprep.subr.mxu0 0.0
  %431 = vmatpush1.msra.mxu0 0.0
  %432 = vmatprep.subr.mxu0 0.0
  %433 = vmatpush1.msra.mxu0 0.0
  %434 = vmatprep.subr.mxu0 0.0
  %435 = vmatpush1.msra.mxu0 0.0
  %436 = vmatprep.subr.mxu0 0.0
  %437 = vmatpush1.msra.mxu0 0.0
  %438 = vmatprep.subr.mxu0 0.0
  %439 = vmatpush1.msra.mxu0 0.0
  %440 = vmatprep.subr.mxu0 0.0
  %441 = vmatpush1.msra.mxu0 0.0
  %442 = vmatprep.subr.mxu0 0.0
  %443 = vmatpush1.msra.mxu0 0.0
  %444 = vmatprep.subr.mxu0 0.0
  %445 = vmatpush1.msra.mxu0 0.0
  %446 = vmatprep.subr.mxu0 0.0
  %447 = vmatpush1.msra.mxu0 0.0
  %448 = vmatprep.subr.mxu0 0.0
  %449 = vmatpush1.msra.mxu0 0.0
  %450 = vmatprep.subr.mxu0 0.0
  %451 = vmatpush1.msra.mxu0 0.0
  %452 = vmatprep.subr.mxu0 0.0
  %453 = vmatpush1.msra.mxu0 0.0
  %454 = vmatprep.subr.mxu0 0.0
  %455 = vmatpush1.msra.mxu0 0.0
  %456 = vmatprep.subr.mxu0 0.0
  %457 = vmatpush1.msra.mxu0 0.0
  %458 = vmatprep.subr.mxu0 0.0
  %459 = vmatpush1.msra.mxu0 0.0
  %460 = vmatprep.subr.mxu0 0.0
  %461 = vmatpush1.msra.mxu0 0.0
  %462 = vmatprep.subr.mxu0 0.0
  %463 = vmatpush1.msra.mxu0 0.0
  %464 = vmatprep.subr.mxu0 0.0
  %465 = vmatpush1.msra.mxu0 0.0
  %466 = vmatprep.subr.mxu0 0.0
  %467 = vmatpush1.msra.mxu0 0.0
  %468 = vmatprep.subr.mxu0 0.0
  %469 = vmatpush1.msra.mxu0 0.0
  %470 = vmatprep.subr.mxu0 0.0
  %471 = vmatpush1.msra.mxu0 0.0
  %472 = vmatprep.subr.mxu0 0.0
  %473 = vmatpush1.msra.mxu0 0.0
  %474 = vmatprep.subr.mxu0 0.0
  %475 = vmatpush1.msra.mxu0 0.0
  %476 = vmatprep.subr.mxu0 0.0
  %477 = vmatpush1.msra.mxu0 0.0
  %478 = vmatprep.subr.mxu0 0.0
  %479 = vmatpush1.msra.mxu0 0.0
  %480 = vmatprep.subr.mxu0 0.0
  %481 = vmatpush1.msra.mxu0 0.0
  %482 = vmatprep.subr.mxu0 0.0
  %483 = vmatpush1.msra.mxu0 0.0
  %484 = vmatprep.subr.mxu0 0.0
  %485 = vmatpush1.msra.mxu0 0.0
  %486 = vmatprep.mubr.f32.mxu0 0.0
  %487 = vmatmul.mubr.f32.gmra.mrb[0].mxu0 %v420
  %v488 = vpop.f32.mrb[0].mxu0
  %v489 = vadd.f32 %v202, %v488
  %v490 = vpop.f32.mrb[0].mxu0
  %491 = vdwg.mxu0
  %v492 = vadd.f32 %v419, %v489
  %v493 = vxor.u32 %v492, 2147483648
  %v494 = vmul.f32 %v493, 1.442695
  %v495 = vpow.pop %v494
  %v496 = vadd.f32 %v495, 1.0
  %v497 = vrcp.pop %v496
  %v498 = vmul.f32 1.0, %v497
  %500 = vrot.lane.b32.xlu0 %v489, 64
  %v501 = vpop.permute.xlu0 %500
  %v503 = vmul.f32 %v498, %v501
  %505 = vrot.lane.b32.xlu0 %v503, 64
  %v506 = vpop.permute.xlu0 %505
  %v508 = vadd.f32 %v419, %v506
  %v509 = vtanh.pop %v508
  %v510 = vsub.f32 1.0, %v498
  %512 = vrot.lane.b32.xlu0 %v509, 96
  %v513 = vpop.permute.xlu0 %512
  %v515 = vmul.f32 %v510, %v513
  %v516 = vmul.f32 %v498, %v305
  %v517 = vadd.f32 %v515, %v516
  %519 = vrot.lane.b32.xlu0 %v517, 96
  %v520 = vpop.permute.xlu0 %519
  %s522 = scalar_lea.vmem %s58, 12
  %523 = vst.msk [vmem:[%s522] sm:$0x3] %vm194, %v520
  %s524 = scalar_lea.vmem %s0, 4
  %v525 = vld [vmem:[%s524] sm:$0x3]
  %v526 = vsel %vm87, %v414, 0
  %528 = vmatprep.subr.mxu0 0.0
  %529 = vmatpush1.msra.mxu0 %v68
  %530 = vmatprep.subr.mxu0 0.0
  %531 = vmatpush1.msra.mxu0 %v69
  %532 = vmatprep.subr.mxu0 0.0
  %533 = vmatpush1.msra.mxu0 %v70
  %534 = vmatprep.subr.mxu0 0.0
  %535 = vmatpush1.msra.mxu0 %v71
  %536 = vmatprep.subr.mxu0 0.0
  %537 = vmatpush1.msra.mxu0 0.0
  %538 = vmatprep.subr.mxu0 0.0
  %539 = vmatpush1.msra.mxu0 0.0
  %540 = vmatprep.subr.mxu0 0.0
  %541 = vmatpush1.msra.mxu0 0.0
  %542 = vmatprep.subr.mxu0 0.0
  %543 = vmatpush1.msra.mxu0 0.0
  %544 = vmatprep.subr.mxu0 0.0
  %545 = vmatpush1.msra.mxu0 0.0
  %546 = vmatprep.subr.mxu0 0.0
  %547 = vmatpush1.msra.mxu0 0.0
  %548 = vmatprep.subr.mxu0 0.0
  %549 = vmatpush1.msra.mxu0 0.0
  %550 = vmatprep.subr.mxu0 0.0
  %551 = vmatpush1.msra.mxu0 0.0
  %552 = vmatprep.subr.mxu0 0.0
  %553 = vmatpush1.msra.mxu0 0.0
  %554 = vmatprep.subr.mxu0 0.0
  %555 = vmatpush1.msra.mxu0 0.0
  %556 = vmatprep.subr.mxu0 0.0
  %557 = vmatpush1.msra.mxu0 0.0
  %558 = vmatprep.subr.mxu0 0.0
  %559 = vmatpush1.msra.mxu0 0.0
  %560 = vmatprep.subr.mxu0 0.0
  %561 = vmatpush1.msra.mxu0 0.0
  %562 = vmatprep.subr.mxu0 0.0
  %563 = vmatpush1.msra.mxu0 0.0
  %564 = vmatprep.subr.mxu0 0.0
  %565 = vmatpush1.msra.mxu0 0.0
  %566 = vmatprep.subr.mxu0 0.0
  %567 = vmatpush1.msra.mxu0 0.0
  %568 = vmatprep.subr.mxu0 0.0
  %569 = vmatpush1.msra.mxu0 0.0
  %570 = vmatprep.subr.mxu0 0.0
  %571 = vmatpush1.msra.mxu0 0.0
  %572 = vmatprep.subr.mxu0 0.0
  %573 = vmatpush1.msra.mxu0 0.0
  %574 = vmatprep.subr.mxu0 0.0
  %575 = vmatpush1.msra.mxu0 0.0
  %576 = vmatprep.subr.mxu0 0.0
  %577 = vmatpush1.msra.mxu0 0.0
  %578 = vmatprep.subr.mxu0 0.0
  %579 = vmatpush1.msra.mxu0 0.0
  %580 = vmatprep.subr.mxu0 0.0
  %581 = vmatpush1.msra.mxu0 0.0
  %582 = vmatprep.subr.mxu0 0.0
  %583 = vmatpush1.msra.mxu0 0.0
  %584 = vmatprep.subr.mxu0 0.0
  %585 = vmatpush1.msra.mxu0 0.0
  %586 = vmatprep.subr.mxu0 0.0
  %587 = vmatpush1.msra.mxu0 0.0
  %588 = vmatprep.subr.mxu0 0.0
  %589 = vmatpush1.msra.mxu0 0.0
  %590 = vmatprep.subr.mxu0 0.0
  %591 = vmatpush1.msra.mxu0 0.0
  %592 = vmatprep.mubr.f32.mxu0 0.0
  %593 = vmatmul.mubr.f32.gmra.mrb[0].mxu0 %v526
  %v594 = vpop.f32.mrb[0].mxu0
  %v595 = vadd.f32 %v85, %v594
  %v596 = vpop.f32.mrb[0].mxu0
  %597 = vdwg.mxu0
  %v598 = vadd.f32 %v525, %v595
  %v599 = vxor.u32 %v598, 2147483648
  %v600 = vmul.f32 %v599, 1.442695
  %v601 = vpow.pop %v600
  %v602 = vadd.f32 %v601, 1.0
  %v603 = vrcp.pop %v602
  %v604 = vmul.f32 1.0, %v603
  %606 = vrot.lane.b32.xlu0 %v595, 64
  %v607 = vpop.permute.xlu0 %606
  %v609 = vmul.f32 %v604, %v607
  %611 = vrot.lane.b32.xlu0 %v609, 64
  %v612 = vpop.permute.xlu0 %611
  %v614 = vadd.f32 %v525, %v612
  %v615 = vtanh.pop %v614
  %v616 = vsub.f32 1.0, %v604
  %618 = vrot.lane.b32.xlu0 %v615, 96
  %v619 = vpop.permute.xlu0 %618
  %v621 = vmul.f32 %v616, %v619
  %v622 = vmul.f32 %v604, %v411
  %v623 = vadd.f32 %v621, %v622
  %625 = vrot.lane.b32.xlu0 %v623, 96
  %v626 = vpop.permute.xlu0 %625
  %s628 = scalar_lea.vmem %s6, 4
  %629 = vst.msk [vmem:[%s628] sm:$0x3] %vm194, %v626
  %s630 = scalar_lea.vmem %s50, 10
  %v631 = vld [vmem:[%s630] sm:$0x3]
  %v632 = vsel %vm87, %v520, 0
  %634 = vmatprep.subr.mxu0 0.0
  %635 = vmatpush1.msra.mxu0 %v72
  %636 = vmatprep.subr.mxu0 0.0
  %637 = vmatpush1.msra.mxu0 %v73
  %638 = vmatprep.subr.mxu0 0.0
  %639 = vmatpush1.msra.mxu0 %v74
  %640 = vmatprep.subr.mxu0 0.0
  %641 = vmatpush1.msra.mxu0 %v75
  %642 = vmatprep.subr.mxu0 0.0
  %643 = vmatpush1.msra.mxu0 0.0
  %644 = vmatprep.subr.mxu0 0.0
  %645 = vmatpush1.msra.mxu0 0.0
  %646 = vmatprep.subr.mxu0 0.0
  %647 = vmatpush1.msra.mxu0 0.0
  %648 = vmatprep.subr.mxu0 0.0
  %649 = vmatpush1.msra.mxu0 0.0
  %650 = vmatprep.subr.mxu0 0.0
  %651 = vmatpush1.msra.mxu0 0.0
  %652 = vmatprep.subr.mxu0 0.0
  %653 = vmatpush1.msra.mxu0 0.0
  %654 = vmatprep.subr.mxu0 0.0
  %655 = vmatpush1.msra.mxu0 0.0
  %656 = vmatprep.subr.mxu0 0.0
  %657 = vmatpush1.msra.mxu0 0.0
  %658 = vmatprep.subr.mxu0 0.0
  %659 = vmatpush1.msra.mxu0 0.0
  %660 = vmatprep.subr.mxu0 0.0
  %661 = vmatpush1.msra.mxu0 0.0
  %662 = vmatprep.subr.mxu0 0.0
  %663 = vmatpush1.msra.mxu0 0.0
  %664 = vmatprep.subr.mxu0 0.0
  %665 = vmatpush1.msra.mxu0 0.0
  %666 = vmatprep.subr.mxu0 0.0
  %667 = vmatpush1.msra.mxu0 0.0
  %668 = vmatprep.subr.mxu0 0.0
  %669 = vmatpush1.msra.mxu0 0.0
  %670 = vmatprep.subr.mxu0 0.0
  %671 = vmatpush1.msra.mxu0 0.0
  %672 = vmatprep.subr.mxu0 0.0
  %673 = vmatpush1.msra.mxu0 0.0
  %674 = vmatprep.subr.mxu0 0.0
  %675 = vmatpush1.msra.mxu0 0.0
  %676 = vmatprep.subr.mxu0 0.0
  %677 = vmatpush1.msra.mxu0 0.0
  %678 = vmatprep.subr.mxu0 0.0
  %679 = vmatpush1.msra.mxu0 0.0
  %680 = vmatprep.subr.mxu0 0.0
  %681 = vmatpush1.msra.mxu0 0.0
  %682 = vmatprep.subr.mxu0 0.0
  %683 = vmatpush1.msra.mxu0 0.0
  %684 = vmatprep.subr.mxu0 0.0
  %685 = vmatpush1.msra.mxu0 0.0
  %686 = vmatprep.subr.mxu0 0.0
  %687 = vmatpush1.msra.mxu0 0.0
  %688 = vmatprep.subr.mxu0 0.0
  %689 = vmatpush1.msra.mxu0 0.0
  %690 = vmatprep.subr.mxu0 0.0
  %691 = vmatpush1.msra.mxu0 0.0
  %692 = vmatprep.subr.mxu0 0.0
  %693 = vmatpush1.msra.mxu0 0.0
  %694 = vmatprep.subr.mxu0 0.0
  %695 = vmatpush1.msra.mxu0 0.0
  %696 = vmatprep.subr.mxu0 0.0
  %697 = vmatpush1.msra.mxu0 0.0
  %698 = vmatprep.mubr.f32.mxu0 0.0
  %699 = vmatmul.mubr.f32.gmra.mrb[0].mxu0 %v632
  %v700 = vpop.f32.mrb[0].mxu0
  %v701 = vadd.f32 %v202, %v700
  %v702 = vpop.f32.mrb[0].mxu0
  %703 = vdwg.mxu0
  %v704 = vadd.f32 %v631, %v701
  %v705 = vxor.u32 %v704, 2147483648
  %v706 = vmul.f32 %v705, 1.442695
  %v707 = vpow.pop %v706
  %v708 = vadd.f32 %v707, 1.0
  %v709 = vrcp.pop %v708
  %v710 = vmul.f32 1.0, %v709
  %712 = vrot.lane.b32.xlu0 %v701, 64
  %v713 = vpop.permute.xlu0 %712
  %v715 = vmul.f32 %v710, %v713
  %717 = vrot.lane.b32.xlu0 %v715, 64
  %v718 = vpop.permute.xlu0 %717
  %v720 = vadd.f32 %v631, %v718
  %v721 = vtanh.pop %v720
  %v722 = vsub.f32 1.0, %v710
  %724 = vrot.lane.b32.xlu0 %v721, 96
  %v725 = vpop.permute.xlu0 %724
  %v727 = vmul.f32 %v722, %v725
  %v728 = vmul.f32 %v710, %v517
  %v729 = vadd.f32 %v727, %v728
  %731 = vrot.lane.b32.xlu0 %v729, 96
  %v732 = vpop.permute.xlu0 %731
  %s734 = scalar_lea.vmem %s58, 10
  %735 = vst.msk [vmem:[%s734] sm:$0x3] %vm194, %v732
  %s736 = scalar_lea.vmem %s0, 6
  %v737 = vld [vmem:[%s736] sm:$0x3]
  %v738 = vsel %vm87, %v626, 0
  %740 = vmatprep.subr.mxu0 0.0
  %741 = vmatpush1.msra.mxu0 %v68
  %742 = vmatprep.subr.mxu0 0.0
  %743 = vmatpush1.msra.mxu0 %v69
  %744 = vmatprep.subr.mxu0 0.0
  %745 = vmatpush1.msra.mxu0 %v70
  %746 = vmatprep.subr.mxu0 0.0
  %747 = vmatpush1.msra.mxu0 %v71
  %748 = vmatprep.subr.mxu0 0.0
  %749 = vmatpush1.msra.mxu0 0.0
  %750 = vmatprep.subr.mxu0 0.0
  %751 = vmatpush1.msra.mxu0 0.0
  %752 = vmatprep.subr.mxu0 0.0
  %753 = vmatpush1.msra.mxu0 0.0
  %754 = vmatprep.subr.mxu0 0.0
  %755 = vmatpush1.msra.mxu0 0.0
  %756 = vmatprep.subr.mxu0 0.0
  %757 = vmatpush1.msra.mxu0 0.0
  %758 = vmatprep.subr.mxu0 0.0
  %759 = vmatpush1.msra.mxu0 0.0
  %760 = vmatprep.subr.mxu0 0.0
  %761 = vmatpush1.msra.mxu0 0.0
  %762 = vmatprep.subr.mxu0 0.0
  %763 = vmatpush1.msra.mxu0 0.0
  %764 = vmatprep.subr.mxu0 0.0
  %765 = vmatpush1.msra.mxu0 0.0
  %766 = vmatprep.subr.mxu0 0.0
  %767 = vmatpush1.msra.mxu0 0.0
  %768 = vmatprep.subr.mxu0 0.0
  %769 = vmatpush1.msra.mxu0 0.0
  %770 = vmatprep.subr.mxu0 0.0
  %771 = vmatpush1.msra.mxu0 0.0
  %772 = vmatprep.subr.mxu0 0.0
  %773 = vmatpush1.msra.mxu0 0.0
  %774 = vmatprep.subr.mxu0 0.0
  %775 = vmatpush1.msra.mxu0 0.0
  %776 = vmatprep.subr.mxu0 0.0
  %777 = vmatpush1.msra.mxu0 0.0
  %778 = vmatprep.subr.mxu0 0.0
  %779 = vmatpush1.msra.mxu0 0.0
  %780 = vmatprep.subr.mxu0 0.0
  %781 = vmatpush1.msra.mxu0 0.0
  %782 = vmatprep.subr.mxu0 0.0
  %783 = vmatpush1.msra.mxu0 0.0
  %784 = vmatprep.subr.mxu0 0.0
  %785 = vmatpush1.msra.mxu0 0.0
  %786 = vmatprep.subr.mxu0 0.0
  %787 = vmatpush1.msra.mxu0 0.0
  %788 = vmatprep.subr.mxu0 0.0
  %789 = vmatpush1.msra.mxu0 0.0
  %790 = vmatprep.subr.mxu0 0.0
  %791 = vmatpush1.msra.mxu0 0.0
  %792 = vmatprep.subr.mxu0 0.0
  %793 = vmatpush1.msra.mxu0 0.0
  %794 = vmatprep.subr.mxu0 0.0
  %795 = vmatpush1.msra.mxu0 0.0
  %796 = vmatprep.subr.mxu0 0.0
  %797 = vmatpush1.msra.mxu0 0.0
  %798 = vmatprep.subr.mxu0 0.0
  %799 = vmatpush1.msra.mxu0 0.0
  %800 = vmatprep.subr.mxu0 0.0
  %801 = vmatpush1.msra.mxu0 0.0
  %802 = vmatprep.subr.mxu0 0.0
  %803 = vmatpush1.msra.mxu0 0.0
  %804 = vmatprep.mubr.f32.mxu0 0.0
  %805 = vmatmul.mubr.f32.gmra.mrb[0].mxu0 %v738
  %v806 = vpop.f32.mrb[0].mxu0
  %v807 = vadd.f32 %v85, %v806
  %v808 = vpop.f32.mrb[0].mxu0
  %809 = vdwg.mxu0
  %v810 = vadd.f32 %v737, %v807
  %v811 = vxor.u32 %v810, 2147483648
  %v812 = vmul.f32 %v811, 1.442695
  %v813 = vpow.pop %v812
  %v814 = vadd.f32 %v813, 1.0
  %v815 = vrcp.pop %v814
  %v816 = vmul.f32 1.0, %v815
  %818 = vrot.lane.b32.xlu0 %v807, 64
  %v819 = vpop.permute.xlu0 %818
  %v821 = vmul.f32 %v816, %v819
  %823 = vrot.lane.b32.xlu0 %v821, 64
  %v824 = vpop.permute.xlu0 %823
  %v826 = vadd.f32 %v737, %v824
  %v827 = vtanh.pop %v826
  %v828 = vsub.f32 1.0, %v816
  %830 = vrot.lane.b32.xlu0 %v827, 96
  %v831 = vpop.permute.xlu0 %830
  %v833 = vmul.f32 %v828, %v831
  %v834 = vmul.f32 %v816, %v623
  %v835 = vadd.f32 %v833, %v834
  %837 = vrot.lane.b32.xlu0 %v835, 96
  %v838 = vpop.permute.xlu0 %837
  %s840 = scalar_lea.vmem %s6, 6
  %841 = vst.msk [vmem:[%s840] sm:$0x3] %vm194, %v838
  %s842 = scalar_lea.vmem %s50, 8
  %v843 = vld [vmem:[%s842] sm:$0x3]
  %v844 = vsel %vm87, %v732, 0
  %846 = vmatprep.subr.mxu0 0.0
  %847 = vmatpush1.msra.mxu0 %v72
  %848 = vmatprep.subr.mxu0 0.0
  %849 = vmatpush1.msra.mxu0 %v73
  %850 = vmatprep.subr.mxu0 0.0
  %851 = vmatpush1.msra.mxu0 %v74
  %852 = vmatprep.subr.mxu0 0.0
  %853 = vmatpush1.msra.mxu0 %v75
  %854 = vmatprep.subr.mxu0 0.0
  %855 = vmatpush1.msra.mxu0 0.0
  %856 = vmatprep.subr.mxu0 0.0
  %857 = vmatpush1.msra.mxu0 0.0
  %858 = vmatprep.subr.mxu0 0.0
  %859 = vmatpush1.msra.mxu0 0.0
  %860 = vmatprep.subr.mxu0 0.0
  %861 = vmatpush1.msra.mxu0 0.0
  %862 = vmatprep.subr.mxu0 0.0
  %863 = vmatpush1.msra.mxu0 0.0
  %864 = vmatprep.subr.mxu0 0.0
  %865 = vmatpush1.msra.mxu0 0.0
  %866 = vmatprep.subr.mxu0 0.0
  %867 = vmatpush1.msra.mxu0 0.0
  %868 = vmatprep.subr.mxu0 0.0
  %869 = vmatpush1.msra.mxu0 0.0
  %870 = vmatprep.subr.mxu0 0.0
  %871 = vmatpush1.msra.mxu0 0.0
  %872 = vmatprep.subr.mxu0 0.0
  %873 = vmatpush1.msra.mxu0 0.0
  %874 = vmatprep.subr.mxu0 0.0
  %875 = vmatpush1.msra.mxu0 0.0
  %876 = vmatprep.subr.mxu0 0.0
  %877 = vmatpush1.msra.mxu0 0.0
  %878 = vmatprep.subr.mxu0 0.0
  %879 = vmatpush1.msra.mxu0 0.0
  %880 = vmatprep.subr.mxu0 0.0
  %881 = vmatpush1.msra.mxu0 0.0
  %882 = vmatprep.subr.mxu0 0.0
  %883 = vmatpush1.msra.mxu0 0.0
  %884 = vmatprep.subr.mxu0 0.0
  %885 = vmatpush1.msra.mxu0 0.0
  %886 = vmatprep.subr.mxu0 0.0
  %887 = vmatpush1.msra.mxu0 0.0
  %888 = vmatprep.subr.mxu0 0.0
  %889 = vmatpush1.msra.mxu0 0.0
  %890 = vmatprep.subr.mxu0 0.0
  %891 = vmatpush1.msra.mxu0 0.0
  %892 = vmatprep.subr.mxu0 0.0
  %893 = vmatpush1.msra.mxu0 0.0
  %894 = vmatprep.subr.mxu0 0.0
  %895 = vmatpush1.msra.mxu0 0.0
  %896 = vmatprep.subr.mxu0 0.0
  %897 = vmatpush1.msra.mxu0 0.0
  %898 = vmatprep.subr.mxu0 0.0
  %899 = vmatpush1.msra.mxu0 0.0
  %900 = vmatprep.subr.mxu0 0.0
  %901 = vmatpush1.msra.mxu0 0.0
  %902 = vmatprep.subr.mxu0 0.0
  %903 = vmatpush1.msra.mxu0 0.0
  %904 = vmatprep.subr.mxu0 0.0
  %905 = vmatpush1.msra.mxu0 0.0
  %906 = vmatprep.subr.mxu0 0.0
  %907 = vmatpush1.msra.mxu0 0.0
  %908 = vmatprep.subr.mxu0 0.0
  %909 = vmatpush1.msra.mxu0 0.0
  %910 = vmatprep.mubr.f32.mxu0 0.0
  %911 = vmatmul.mubr.f32.gmra.mrb[0].mxu0 %v844
  %v912 = vpop.f32.mrb[0].mxu0
  %v913 = vadd.f32 %v202, %v912
  %v914 = vpop.f32.mrb[0].mxu0
  %915 = vdwg.mxu0
  %v916 = vadd.f32 %v843, %v913
  %v917 = vxor.u32 %v916, 2147483648
  %v918 = vmul.f32 %v917, 1.442695
  %v919 = vpow.pop %v918
  %v920 = vadd.f32 %v919, 1.0
  %v921 = vrcp.pop %v920
  %v922 = vmul.f32 1.0, %v921
  %924 = vrot.lane.b32.xlu0 %v913, 64
  %v925 = vpop.permute.xlu0 %924
  %v927 = vmul.f32 %v922, %v925
  %929 = vrot.lane.b32.xlu0 %v927, 64
  %v930 = vpop.permute.xlu0 %929
  %v932 = vadd.f32 %v843, %v930
  %v933 = vtanh.pop %v932
  %v934 = vsub.f32 1.0, %v922
  %936 = vrot.lane.b32.xlu0 %v933, 96
  %v937 = vpop.permute.xlu0 %936
  %v939 = vmul.f32 %v934, %v937
  %v940 = vmul.f32 %v922, %v729
  %v941 = vadd.f32 %v939, %v940
  %943 = vrot.lane.b32.xlu0 %v941, 96
  %v944 = vpop.permute.xlu0 %943
  %s946 = scalar_lea.vmem %s58, 8
  %947 = vst.msk [vmem:[%s946] sm:$0x3] %vm194, %v944
  %s948 = scalar_lea.vmem %s0, 8
  %v949 = vld [vmem:[%s948] sm:$0x3]
  %v950 = vsel %vm87, %v838, 0
  %952 = vmatprep.subr.mxu0 0.0
  %953 = vmatpush1.msra.mxu0 %v68
  %954 = vmatprep.subr.mxu0 0.0
  %955 = vmatpush1.msra.mxu0 %v69
  %956 = vmatprep.subr.mxu0 0.0
  %957 = vmatpush1.msra.mxu0 %v70
  %958 = vmatprep.subr.mxu0 0.0
  %959 = vmatpush1.msra.mxu0 %v71
  %960 = vmatprep.subr.mxu0 0.0
  %961 = vmatpush1.msra.mxu0 0.0
  %962 = vmatprep.subr.mxu0 0.0
  %963 = vmatpush1.msra.mxu0 0.0
  %964 = vmatprep.subr.mxu0 0.0
  %965 = vmatpush1.msra.mxu0 0.0
  %966 = vmatprep.subr.mxu0 0.0
  %967 = vmatpush1.msra.mxu0 0.0
  %968 = vmatprep.subr.mxu0 0.0
  %969 = vmatpush1.msra.mxu0 0.0
  %970 = vmatprep.subr.mxu0 0.0
  %971 = vmatpush1.msra.mxu0 0.0
  %972 = vmatprep.subr.mxu0 0.0
  %973 = vmatpush1.msra.mxu0 0.0
  %974 = vmatprep.subr.mxu0 0.0
  %975 = vmatpush1.msra.mxu0 0.0
  %976 = vmatprep.subr.mxu0 0.0
  %977 = vmatpush1.msra.mxu0 0.0
  %978 = vmatprep.subr.mxu0 0.0
  %979 = vmatpush1.msra.mxu0 0.0
  %980 = vmatprep.subr.mxu0 0.0
  %981 = vmatpush1.msra.mxu0 0.0
  %982 = vmatprep.subr.mxu0 0.0
  %983 = vmatpush1.msra.mxu0 0.0
  %984 = vmatprep.subr.mxu0 0.0
  %985 = vmatpush1.msra.mxu0 0.0
  %986 = vmatprep.subr.mxu0 0.0
  %987 = vmatpush1.msra.mxu0 0.0
  %988 = vmatprep.subr.mxu0 0.0
  %989 = vmatpush1.msra.mxu0 0.0
  %990 = vmatprep.subr.mxu0 0.0
  %991 = vmatpush1.msra.mxu0 0.0
  %992 = vmatprep.subr.mxu0 0.0
  %993 = vmatpush1.msra.mxu0 0.0
  %994 = vmatprep.subr.mxu0 0.0
  %995 = vmatpush1.msra.mxu0 0.0
  %996 = vmatprep.subr.mxu0 0.0
  %997 = vmatpush1.msra.mxu0 0.0
  %998 = vmatprep.subr.mxu0 0.0
  %999 = vmatpush1.msra.mxu0 0.0
  %1000 = vmatprep.subr.mxu0 0.0
  %1001 = vmatpush1.msra.mxu0 0.0
  %1002 = vmatprep.subr.mxu0 0.0
  %1003 = vmatpush1.msra.mxu0 0.0
  %1004 = vmatprep.subr.mxu0 0.0
  %1005 = vmatpush1.msra.mxu0 0.0
  %1006 = vmatprep.subr.mxu0 0.0
  %1007 = vmatpush1.msra.mxu0 0.0
  %1008 = vmatprep.subr.mxu0 0.0
  %1009 = vmatpush1.msra.mxu0 0.0
  %1010 = vmatprep.subr.mxu0 0.0
  %1011 = vmatpush1.msra.mxu0 0.0
  %1012 = vmatprep.subr.mxu0 0.0
  %1013 = vmatpush1.msra.mxu0 0.0
  %1014 = vmatprep.subr.mxu0 0.0
  %1015 = vmatpush1.msra.mxu0 0.0
  %1016 = vmatprep.mubr.f32.mxu0 0.0
  %1017 = vmatmul.mubr.f32.gmra.mrb[0].mxu0 %v950
  %v1018 = vpop.f32.mrb[0].mxu0
  %v1019 = vadd.f32 %v85, %v1018
  %v1020 = vpop.f32.mrb[0].mxu0
  %1021 = vdwg.mxu0
  %v1022 = vadd.f32 %v949, %v1019
  %v1023 = vxor.u32 %v1022, 2147483648
  %v1024 = vmul.f32 %v1023, 1.442695
  %v1025 = vpow.pop %v1024
  %v1026 = vadd.f32 %v1025, 1.0
  %v1027 = vrcp.pop %v1026
  %v1028 = vmul.f32 1.0, %v1027
  %1030 = vrot.lane.b32.xlu0 %v1019, 64
  %v1031 = vpop.permute.xlu0 %1030
  %v1033 = vmul.f32 %v1028, %v1031
  %1035 = vrot.lane.b32.xlu0 %v1033, 64
  %v1036 = vpop.permute.xlu0 %1035
  %v1038 = vadd.f32 %v949, %v1036
  %v1039 = vtanh.pop %v1038
  %v1040 = vsub.f32 1.0, %v1028
  %1042 = vrot.lane.b32.xlu0 %v1039, 96
  %v1043 = vpop.permute.xlu0 %1042
  %v1045 = vmul.f32 %v1040, %v1043
  %v1046 = vmul.f32 %v1028, %v835
  %v1047 = vadd.f32 %v1045, %v1046
  %1049 = vrot.lane.b32.xlu0 %v1047, 96
  %v1050 = vpop.permute.xlu0 %1049
  %s1052 = scalar_lea.vmem %s6, 8
  %1053 = vst.msk [vmem:[%s1052] sm:$0x3] %vm194, %v1050
  %s1054 = scalar_lea.vmem %s50, 6
  %v1055 = vld [vmem:[%s1054] sm:$0x3]
  %v1056 = vsel %vm87, %v944, 0
  %1058 = vmatprep.subr.mxu0 0.0
  %1059 = vmatpush1.msra.mxu0 %v72
  %1060 = vmatprep.subr.mxu0 0.0
  %1061 = vmatpush1.msra.mxu0 %v73
  %1062 = vmatprep.subr.mxu0 0.0
  %1063 = vmatpush1.msra.mxu0 %v74
  %1064 = vmatprep.subr.mxu0 0.0
  %1065 = vmatpush1.msra.mxu0 %v75
  %1066 = vmatprep.subr.mxu0 0.0
  %1067 = vmatpush1.msra.mxu0 0.0
  %1068 = vmatprep.subr.mxu0 0.0
  %1069 = vmatpush1.msra.mxu0 0.0
  %1070 = vmatprep.subr.mxu0 0.0
  %1071 = vmatpush1.msra.mxu0 0.0
  %1072 = vmatprep.subr.mxu0 0.0
  %1073 = vmatpush1.msra.mxu0 0.0
  %1074 = vmatprep.subr.mxu0 0.0
  %1075 = vmatpush1.msra.mxu0 0.0
  %1076 = vmatprep.subr.mxu0 0.0
  %1077 = vmatpush1.msra.mxu0 0.0
  %1078 = vmatprep.subr.mxu0 0.0
  %1079 = vmatpush1.msra.mxu0 0.0
  %1080 = vmatprep.subr.mxu0 0.0
  %1081 = vmatpush1.msra.mxu0 0.0
  %1082 = vmatprep.subr.mxu0 0.0
  %1083 = vmatpush1.msra.mxu0 0.0
  %1084 = vmatprep.subr.mxu0 0.0
  %1085 = vmatpush1.msra.mxu0 0.0
  %1086 = vmatprep.subr.mxu0 0.0
  %1087 = vmatpush1.msra.mxu0 0.0
  %1088 = vmatprep.subr.mxu0 0.0
  %1089 = vmatpush1.msra.mxu0 0.0
  %1090 = vmatprep.subr.mxu0 0.0
  %1091 = vmatpush1.msra.mxu0 0.0
  %1092 = vmatprep.subr.mxu0 0.0
  %1093 = vmatpush1.msra.mxu0 0.0
  %1094 = vmatprep.subr.mxu0 0.0
  %1095 = vmatpush1.msra.mxu0 0.0
  %1096 = vmatprep.subr.mxu0 0.0
  %1097 = vmatpush1.msra.mxu0 0.0
  %1098 = vmatprep.subr.mxu0 0.0
  %1099 = vmatpush1.msra.mxu0 0.0
  %1100 = vmatprep.subr.mxu0 0.0
  %1101 = vmatpush1.msra.mxu0 0.0
  %1102 = vmatprep.subr.mxu0 0.0
  %1103 = vmatpush1.msra.mxu0 0.0
  %1104 = vmatprep.subr.mxu0 0.0
  %1105 = vmatpush1.msra.mxu0 0.0
  %1106 = vmatprep.subr.mxu0 0.0
  %1107 = vmatpush1.msra.mxu0 0.0
  %1108 = vmatprep.subr.mxu0 0.0
  %1109 = vmatpush1.msra.mxu0 0.0
  %1110 = vmatprep.subr.mxu0 0.0
  %1111 = vmatpush1.msra.mxu0 0.0
  %1112 = vmatprep.subr.mxu0 0.0
  %1113 = vmatpush1.msra.mxu0 0.0
  %1114 = vmatprep.subr.mxu0 0.0
  %1115 = vmatpush1.msra.mxu0 0.0
  %1116 = vmatprep.subr.mxu0 0.0
  %1117 = vmatpush1.msra.mxu0 0.0
  %1118 = vmatprep.subr.mxu0 0.0
  %1119 = vmatpush1.msra.mxu0 0.0
  %1120 = vmatprep.subr.mxu0 0.0
  %1121 = vmatpush1.msra.mxu0 0.0
  %1122 = vmatprep.mubr.f32.mxu0 0.0
  %1123 = vmatmul.mubr.f32.gmra.mrb[0].mxu0 %v1056
  %v1124 = vpop.f32.mrb[0].mxu0
  %v1125 = vadd.f32 %v202, %v1124
  %v1126 = vpop.f32.mrb[0].mxu0
  %1127 = vdwg.mxu0
  %v1128 = vadd.f32 %v1055, %v1125
  %v1129 = vxor.u32 %v1128, 2147483648
  %v1130 = vmul.f32 %v1129, 1.442695
  %v1131 = vpow.pop %v1130
  %v1132 = vadd.f32 %v1131, 1.0
  %v1133 = vrcp.pop %v1132
  %v1134 = vmul.f32 1.0, %v1133
  %1136 = vrot.lane.b32.xlu0 %v1125, 64
  %v1137 = vpop.permute.xlu0 %1136
  %v1139 = vmul.f32 %v1134, %v1137
  %1141 = vrot.lane.b32.xlu0 %v1139, 64
  %v1142 = vpop.permute.xlu0 %1141
  %v1144 = vadd.f32 %v1055, %v1142
  %v1145 = vtanh.pop %v1144
  %v1146 = vsub.f32 1.0, %v1134
  %1148 = vrot.lane.b32.xlu0 %v1145, 96
  %v1149 = vpop.permute.xlu0 %1148
  %v1151 = vmul.f32 %v1146, %v1149
  %v1152 = vmul.f32 %v1134, %v941
  %v1153 = vadd.f32 %v1151, %v1152
  %1155 = vrot.lane.b32.xlu0 %v1153, 96
  %v1156 = vpop.permute.xlu0 %1155
  %s1158 = scalar_lea.vmem %s58, 6
  %1159 = vst.msk [vmem:[%s1158] sm:$0x3] %vm194, %v1156
  %s1160 = scalar_lea.vmem %s0, 10
  %v1161 = vld [vmem:[%s1160] sm:$0x3]
  %v1162 = vsel %vm87, %v1050, 0
  %1164 = vmatprep.subr.mxu0 0.0
  %1165 = vmatpush1.msra.mxu0 %v68
  %1166 = vmatprep.subr.mxu0 0.0
  %1167 = vmatpush1.msra.mxu0 %v69
  %1168 = vmatprep.subr.mxu0 0.0
  %1169 = vmatpush1.msra.mxu0 %v70
  %1170 = vmatprep.subr.mxu0 0.0
  %1171 = vmatpush1.msra.mxu0 %v71
  %1172 = vmatprep.subr.mxu0 0.0
  %1173 = vmatpush1.msra.mxu0 0.0
  %1174 = vmatprep.subr.mxu0 0.0
  %1175 = vmatpush1.msra.mxu0 0.0
  %1176 = vmatprep.subr.mxu0 0.0
  %1177 = vmatpush1.msra.mxu0 0.0
  %1178 = vmatprep.subr.mxu0 0.0
  %1179 = vmatpush1.msra.mxu0 0.0
  %1180 = vmatprep.subr.mxu0 0.0
  %1181 = vmatpush1.msra.mxu0 0.0
  %1182 = vmatprep.subr.mxu0 0.0
  %1183 = vmatpush1.msra.mxu0 0.0
  %1184 = vmatprep.subr.mxu0 0.0
  %1185 = vmatpush1.msra.mxu0 0.0
  %1186 = vmatprep.subr.mxu0 0.0
  %1187 = vmatpush1.msra.mxu0 0.0
  %1188 = vmatprep.subr.mxu0 0.0
  %1189 = vmatpush1.msra.mxu0 0.0
  %1190 = vmatprep.subr.mxu0 0.0
  %1191 = vmatpush1.msra.mxu0 0.0
  %1192 = vmatprep.subr.mxu0 0.0
  %1193 = vmatpush1.msra.mxu0 0.0
  %1194 = vmatprep.subr.mxu0 0.0
  %1195 = vmatpush1.msra.mxu0 0.0
  %1196 = vmatprep.subr.mxu0 0.0
  %1197 = vmatpush1.msra.mxu0 0.0
  %1198 = vmatprep.subr.mxu0 0.0
  %1199 = vmatpush1.msra.mxu0 0.0
  %1200 = vmatprep.subr.mxu0 0.0
  %1201 = vmatpush1.msra.mxu0 0.0
  %1202 = vmatprep.subr.mxu0 0.0
  %1203 = vmatpush1.msra.mxu0 0.0
  %1204 = vmatprep.subr.mxu0 0.0
  %1205 = vmatpush1.msra.mxu0 0.0
  %1206 = vmatprep.subr.mxu0 0.0
  %1207 = vmatpush1.msra.mxu0 0.0
  %1208 = vmatprep.subr.mxu0 0.0
  %1209 = vmatpush1.msra.mxu0 0.0
  %1210 = vmatprep.subr.mxu0 0.0
  %1211 = vmatpush1.msra.mxu0 0.0
  %1212 = vmatprep.subr.mxu0 0.0
  %1213 = vmatpush1.msra.mxu0 0.0
  %1214 = vmatprep.subr.mxu0 0.0
  %1215 = vmatpush1.msra.mxu0 0.0
  %1216 = vmatprep.subr.mxu0 0.0
  %1217 = vmatpush1.msra.mxu0 0.0
  %1218 = vmatprep.subr.mxu0 0.0
  %1219 = vmatpush1.msra.mxu0 0.0
  %1220 = vmatprep.subr.mxu0 0.0
  %1221 = vmatpush1.msra.mxu0 0.0
  %1222 = vmatprep.subr.mxu0 0.0
  %1223 = vmatpush1.msra.mxu0 0.0
  %1224 = vmatprep.subr.mxu0 0.0
  %1225 = vmatpush1.msra.mxu0 0.0
  %1226 = vmatprep.subr.mxu0 0.0
  %1227 = vmatpush1.msra.mxu0 0.0
  %1228 = vmatprep.mubr.f32.mxu0 0.0
  %1229 = vmatmul.mubr.f32.gmra.mrb[0].mxu0 %v1162
  %v1230 = vpop.f32.mrb[0].mxu0
  %v1231 = vadd.f32 %v85, %v1230
  %v1232 = vpop.f32.mrb[0].mxu0
  %1233 = vdwg.mxu0
  %v1234 = vadd.f32 %v1161, %v1231
  %v1235 = vxor.u32 %v1234, 2147483648
  %v1236 = vmul.f32 %v1235, 1.442695
  %v1237 = vpow.pop %v1236
  %v1238 = vadd.f32 %v1237, 1.0
  %v1239 = vrcp.pop %v1238
  %v1240 = vmul.f32 1.0, %v1239
  %1242 = vrot.lane.b32.xlu0 %v1231, 64
  %v1243 = vpop.permute.xlu0 %1242
  %v1245 = vmul.f32 %v1240, %v1243
  %1247 = vrot.lane.b32.xlu0 %v1245, 64
  %v1248 = vpop.permute.xlu0 %1247
  %v1250 = vadd.f32 %v1161, %v1248
  %v1251 = vtanh.pop %v1250
  %v1252 = vsub.f32 1.0, %v1240
  %1254 = vrot.lane.b32.xlu0 %v1251, 96
  %v1255 = vpop.permute.xlu0 %1254
  %v1257 = vmul.f32 %v1252, %v1255
  %v1258 = vmul.f32 %v1240, %v1047
  %v1259 = vadd.f32 %v1257, %v1258
  %1261 = vrot.lane.b32.xlu0 %v1259, 96
  %v1262 = vpop.permute.xlu0 %1261
  %s1264 = scalar_lea.vmem %s6, 10
  %1265 = vst.msk [vmem:[%s1264] sm:$0x3] %vm194, %v1262
  %s1266 = scalar_lea.vmem %s50, 4
  %v1267 = vld [vmem:[%s1266] sm:$0x3]
  %v1268 = vsel %vm87, %v1156, 0
  %1270 = vmatprep.subr.mxu0 0.0
  %1271 = vmatpush1.msra.mxu0 %v72
  %1272 = vmatprep.subr.mxu0 0.0
  %1273 = vmatpush1.msra.mxu0 %v73
  %1274 = vmatprep.subr.mxu0 0.0
  %1275 = vmatpush1.msra.mxu0 %v74
  %1276 = vmatprep.subr.mxu0 0.0
  %1277 = vmatpush1.msra.mxu0 %v75
  %1278 = vmatprep.subr.mxu0 0.0
  %1279 = vmatpush1.msra.mxu0 0.0
  %1280 = vmatprep.subr.mxu0 0.0
  %1281 = vmatpush1.msra.mxu0 0.0
  %1282 = vmatprep.subr.mxu0 0.0
  %1283 = vmatpush1.msra.mxu0 0.0
  %1284 = vmatprep.subr.mxu0 0.0
  %1285 = vmatpush1.msra.mxu0 0.0
  %1286 = vmatprep.subr.mxu0 0.0
  %1287 = vmatpush1.msra.mxu0 0.0
  %1288 = vmatprep.subr.mxu0 0.0
  %1289 = vmatpush1.msra.mxu0 0.0
  %1290 = vmatprep.subr.mxu0 0.0
  %1291 = vmatpush1.msra.mxu0 0.0
  %1292 = vmatprep.subr.mxu0 0.0
  %1293 = vmatpush1.msra.mxu0 0.0
  %1294 = vmatprep.subr.mxu0 0.0
  %1295 = vmatpush1.msra.mxu0 0.0
  %1296 = vmatprep.subr.mxu0 0.0
  %1297 = vmatpush1.msra.mxu0 0.0
  %1298 = vmatprep.subr.mxu0 0.0
  %1299 = vmatpush1.msra.mxu0 0.0
  %1300 = vmatprep.subr.mxu0 0.0
  %1301 = vmatpush1.msra.mxu0 0.0
  %1302 = vmatprep.subr.mxu0 0.0
  %1303 = vmatpush1.msra.mxu0 0.0
  %1304 = vmatprep.subr.mxu0 0.0
  %1305 = vmatpush1.msra.mxu0 0.0
  %1306 = vmatprep.subr.mxu0 0.0
  %1307 = vmatpush1.msra.mxu0 0.0
  %1308 = vmatprep.subr.mxu0 0.0
  %1309 = vmatpush1.msra.mxu0 0.0
  %1310 = vmatprep.subr.mxu0 0.0
  %1311 = vmatpush1.msra.mxu0 0.0
  %1312 = vmatprep.subr.mxu0 0.0
  %1313 = vmatpush1.msra.mxu0 0.0
  %1314 = vmatprep.subr.mxu0 0.0
  %1315 = vmatpush1.msra.mxu0 0.0
  %1316 = vmatprep.subr.mxu0 0.0
  %1317 = vmatpush1.msra.mxu0 0.0
  %1318 = vmatprep.subr.mxu0 0.0
  %1319 = vmatpush1.msra.mxu0 0.0
  %1320 = vmatprep.subr.mxu0 0.0
  %1321 = vmatpush1.msra.mxu0 0.0
  %1322 = vmatprep.subr.mxu0 0.0
  %1323 = vmatpush1.msra.mxu0 0.0
  %1324 = vmatprep.subr.mxu0 0.0
  %1325 = vmatpush1.msra.mxu0 0.0
  %1326 = vmatprep.subr.mxu0 0.0
  %1327 = vmatpush1.msra.mxu0 0.0
  %1328 = vmatprep.subr.mxu0 0.0
  %1329 = vmatpush1.msra.mxu0 0.0
  %1330 = vmatprep.subr.mxu0 0.0
  %1331 = vmatpush1.msra.mxu0 0.0
  %1332 = vmatprep.subr.mxu0 0.0
  %1333 = vmatpush1.msra.mxu0 0.0
  %1334 = vmatprep.mubr.f32.mxu0 0.0
  %1335 = vmatmul.mubr.f32.gmra.mrb[0].mxu0 %v1268
  %v1336 = vpop.f32.mrb[0].mxu0
  %v1337 = vadd.f32 %v202, %v1336
  %v1338 = vpop.f32.mrb[0].mxu0
  %1339 = vdwg.mxu0
  %v1340 = vadd.f32 %v1267, %v1337
  %v1341 = vxor.u32 %v1340, 2147483648
  %v1342 = vmul.f32 %v1341, 1.442695
  %v1343 = vpow.pop %v1342
  %v1344 = vadd.f32 %v1343, 1.0
  %v1345 = vrcp.pop %v1344
  %v1346 = vmul.f32 1.0, %v1345
  %1348 = vrot.lane.b32.xlu0 %v1337, 64
  %v1349 = vpop.permute.xlu0 %1348
  %v1351 = vmul.f32 %v1346, %v1349
  %1353 = vrot.lane.b32.xlu0 %v1351, 64
  %v1354 = vpop.permute.xlu0 %1353
  %v1356 = vadd.f32 %v1267, %v1354
  %v1357 = vtanh.pop %v1356
  %v1358 = vsub.f32 1.0, %v1346
  %1360 = vrot.lane.b32.xlu0 %v1357, 96
  %v1361 = vpop.permute.xlu0 %1360
  %v1363 = vmul.f32 %v1358, %v1361
  %v1364 = vmul.f32 %v1346, %v1153
  %v1365 = vadd.f32 %v1363, %v1364
  %1367 = vrot.lane.b32.xlu0 %v1365, 96
  %v1368 = vpop.permute.xlu0 %1367
  %s1370 = scalar_lea.vmem %s58, 4
  %1371 = vst.msk [vmem:[%s1370] sm:$0x3] %vm194, %v1368
  %s1372 = scalar_lea.vmem %s0, 12
  %v1373 = vld [vmem:[%s1372] sm:$0x3]
  %v1374 = vsel %vm87, %v1262, 0
  %1376 = vmatprep.subr.mxu0 0.0
  %1377 = vmatpush1.msra.mxu0 %v68
  %1378 = vmatprep.subr.mxu0 0.0
  %1379 = vmatpush1.msra.mxu0 %v69
  %1380 = vmatprep.subr.mxu0 0.0
  %1381 = vmatpush1.msra.mxu0 %v70
  %1382 = vmatprep.subr.mxu0 0.0
  %1383 = vmatpush1.msra.mxu0 %v71
  %1384 = vmatprep.subr.mxu0 0.0
  %1385 = vmatpush1.msra.mxu0 0.0
  %1386 = vmatprep.subr.mxu0 0.0
  %1387 = vmatpush1.msra.mxu0 0.0
  %1388 = vmatprep.subr.mxu0 0.0
  %1389 = vmatpush1.msra.mxu0 0.0
  %1390 = vmatprep.subr.mxu0 0.0
  %1391 = vmatpush1.msra.mxu0 0.0
  %1392 = vmatprep.subr.mxu0 0.0
  %1393 = vmatpush1.msra.mxu0 0.0
  %1394 = vmatprep.subr.mxu0 0.0
  %1395 = vmatpush1.msra.mxu0 0.0
  %1396 = vmatprep.subr.mxu0 0.0
  %1397 = vmatpush1.msra.mxu0 0.0
  %1398 = vmatprep.subr.mxu0 0.0
  %1399 = vmatpush1.msra.mxu0 0.0
  %1400 = vmatprep.subr.mxu0 0.0
  %1401 = vmatpush1.msra.mxu0 0.0
  %1402 = vmatprep.subr.mxu0 0.0
  %1403 = vmatpush1.msra.mxu0 0.0
  %1404 = vmatprep.subr.mxu0 0.0
  %1405 = vmatpush1.msra.mxu0 0.0
  %1406 = vmatprep.subr.mxu0 0.0
  %1407 = vmatpush1.msra.mxu0 0.0
  %1408 = vmatprep.subr.mxu0 0.0
  %1409 = vmatpush1.msra.mxu0 0.0
  %1410 = vmatprep.subr.mxu0 0.0
  %1411 = vmatpush1.msra.mxu0 0.0
  %1412 = vmatprep.subr.mxu0 0.0
  %1413 = vmatpush1.msra.mxu0 0.0
  %1414 = vmatprep.subr.mxu0 0.0
  %1415 = vmatpush1.msra.mxu0 0.0
  %1416 = vmatprep.subr.mxu0 0.0
  %1417 = vmatpush1.msra.mxu0 0.0
  %1418 = vmatprep.subr.mxu0 0.0
  %1419 = vmatpush1.msra.mxu0 0.0
  %1420 = vmatprep.subr.mxu0 0.0
  %1421 = vmatpush1.msra.mxu0 0.0
  %1422 = vmatprep.subr.mxu0 0.0
  %1423 = vmatpush1.msra.mxu0 0.0
  %1424 = vmatprep.subr.mxu0 0.0
  %1425 = vmatpush1.msra.mxu0 0.0
  %1426 = vmatprep.subr.mxu0 0.0
  %1427 = vmatpush1.msra.mxu0 0.0
  %1428 = vmatprep.subr.mxu0 0.0
  %1429 = vmatpush1.msra.mxu0 0.0
  %1430 = vmatprep.subr.mxu0 0.0
  %1431 = vmatpush1.msra.mxu0 0.0
  %1432 = vmatprep.subr.mxu0 0.0
  %1433 = vmatpush1.msra.mxu0 0.0
  %1434 = vmatprep.subr.mxu0 0.0
  %1435 = vmatpush1.msra.mxu0 0.0
  %1436 = vmatprep.subr.mxu0 0.0
  %1437 = vmatpush1.msra.mxu0 0.0
  %1438 = vmatprep.subr.mxu0 0.0
  %1439 = vmatpush1.msra.mxu0 0.0
  %1440 = vmatprep.mubr.f32.mxu0 0.0
  %1441 = vmatmul.mubr.f32.gmra.mrb[0].mxu0 %v1374
  %v1442 = vpop.f32.mrb[0].mxu0
  %v1443 = vadd.f32 %v85, %v1442
  %v1444 = vpop.f32.mrb[0].mxu0
  %1445 = vdwg.mxu0
  %v1446 = vadd.f32 %v1373, %v1443
  %v1447 = vxor.u32 %v1446, 2147483648
  %v1448 = vmul.f32 %v1447, 1.442695
  %v1449 = vpow.pop %v1448
  %v1450 = vadd.f32 %v1449, 1.0
  %v1451 = vrcp.pop %v1450
  %v1452 = vmul.f32 1.0, %v1451
  %1454 = vrot.lane.b32.xlu0 %v1443, 64
  %v1455 = vpop.permute.xlu0 %1454
  %v1457 = vmul.f32 %v1452, %v1455
  %1459 = vrot.lane.b32.xlu0 %v1457, 64
  %v1460 = vpop.permute.xlu0 %1459
  %v1462 = vadd.f32 %v1373, %v1460
  %v1463 = vtanh.pop %v1462
  %v1464 = vsub.f32 1.0, %v1452
  %1466 = vrot.lane.b32.xlu0 %v1463, 96
  %v1467 = vpop.permute.xlu0 %1466
  %v1469 = vmul.f32 %v1464, %v1467
  %v1470 = vmul.f32 %v1452, %v1259
  %v1471 = vadd.f32 %v1469, %v1470
  %1473 = vrot.lane.b32.xlu0 %v1471, 96
  %v1474 = vpop.permute.xlu0 %1473
  %s1476 = scalar_lea.vmem %s6, 12
  %1477 = vst.msk [vmem:[%s1476] sm:$0x3] %vm194, %v1474
  %s1478 = scalar_lea.vmem %s50, 2
  %v1479 = vld [vmem:[%s1478] sm:$0x3]
  %v1480 = vsel %vm87, %v1368, 0
  %1482 = vmatprep.subr.mxu0 0.0
  %1483 = vmatpush1.msra.mxu0 %v72
  %1484 = vmatprep.subr.mxu0 0.0
  %1485 = vmatpush1.msra.mxu0 %v73
  %1486 = vmatprep.subr.mxu0 0.0
  %1487 = vmatpush1.msra.mxu0 %v74
  %1488 = vmatprep.subr.mxu0 0.0
  %1489 = vmatpush1.msra.mxu0 %v75
  %1490 = vmatprep.subr.mxu0 0.0
  %1491 = vmatpush1.msra.mxu0 0.0
  %1492 = vmatprep.subr.mxu0 0.0
  %1493 = vmatpush1.msra.mxu0 0.0
  %1494 = vmatprep.subr.mxu0 0.0
  %1495 = vmatpush1.msra.mxu0 0.0
  %1496 = vmatprep.subr.mxu0 0.0
  %1497 = vmatpush1.msra.mxu0 0.0
  %1498 = vmatprep.subr.mxu0 0.0
  %1499 = vmatpush1.msra.mxu0 0.0
  %1500 = vmatprep.subr.mxu0 0.0
  %1501 = vmatpush1.msra.mxu0 0.0
  %1502 = vmatprep.subr.mxu0 0.0
  %1503 = vmatpush1.msra.mxu0 0.0
  %1504 = vmatprep.subr.mxu0 0.0
  %1505 = vmatpush1.msra.mxu0 0.0
  %1506 = vmatprep.subr.mxu0 0.0
  %1507 = vmatpush1.msra.mxu0 0.0
  %1508 = vmatprep.subr.mxu0 0.0
  %1509 = vmatpush1.msra.mxu0 0.0
  %1510 = vmatprep.subr.mxu0 0.0
  %1511 = vmatpush1.msra.mxu0 0.0
  %1512 = vmatprep.subr.mxu0 0.0
  %1513 = vmatpush1.msra.mxu0 0.0
  %1514 = vmatprep.subr.mxu0 0.0
  %1515 = vmatpush1.msra.mxu0 0.0
  %1516 = vmatprep.subr.mxu0 0.0
  %1517 = vmatpush1.msra.mxu0 0.0
  %1518 = vmatprep.subr.mxu0 0.0
  %1519 = vmatpush1.msra.mxu0 0.0
  %1520 = vmatprep.subr.mxu0 0.0
  %1521 = vmatpush1.msra.mxu0 0.0
  %1522 = vmatprep.subr.mxu0 0.0
  %1523 = vmatpush1.msra.mxu0 0.0
  %1524 = vmatprep.subr.mxu0 0.0
  %1525 = vmatpush1.msra.mxu0 0.0
  %1526 = vmatprep.subr.mxu0 0.0
  %1527 = vmatpush1.msra.mxu0 0.0
  %1528 = vmatprep.subr.mxu0 0.0
  %1529 = vmatpush1.msra.mxu0 0.0
  %1530 = vmatprep.subr.mxu0 0.0
  %1531 = vmatpush1.msra.mxu0 0.0
  %1532 = vmatprep.subr.mxu0 0.0
  %1533 = vmatpush1.msra.mxu0 0.0
  %1534 = vmatprep.subr.mxu0 0.0
  %1535 = vmatpush1.msra.mxu0 0.0
  %1536 = vmatprep.subr.mxu0 0.0
  %1537 = vmatpush1.msra.mxu0 0.0
  %1538 = vmatprep.subr.mxu0 0.0
  %1539 = vmatpush1.msra.mxu0 0.0
  %1540 = vmatprep.subr.mxu0 0.0
  %1541 = vmatpush1.msra.mxu0 0.0
  %1542 = vmatprep.subr.mxu0 0.0
  %1543 = vmatpush1.msra.mxu0 0.0
  %1544 = vmatprep.subr.mxu0 0.0
  %1545 = vmatpush1.msra.mxu0 0.0
  %1546 = vmatprep.mubr.f32.mxu0 0.0
  %1547 = vmatmul.mubr.f32.gmra.mrb[0].mxu0 %v1480
  %v1548 = vpop.f32.mrb[0].mxu0
  %v1549 = vadd.f32 %v202, %v1548
  %v1550 = vpop.f32.mrb[0].mxu0
  %1551 = vdwg.mxu0
  %v1552 = vadd.f32 %v1479, %v1549
  %v1553 = vxor.u32 %v1552, 2147483648
  %v1554 = vmul.f32 %v1553, 1.442695
  %v1555 = vpow.pop %v1554
  %v1556 = vadd.f32 %v1555, 1.0
  %v1557 = vrcp.pop %v1556
  %v1558 = vmul.f32 1.0, %v1557
  %1560 = vrot.lane.b32.xlu0 %v1549, 64
  %v1561 = vpop.permute.xlu0 %1560
  %v1563 = vmul.f32 %v1558, %v1561
  %1565 = vrot.lane.b32.xlu0 %v1563, 64
  %v1566 = vpop.permute.xlu0 %1565
  %v1568 = vadd.f32 %v1479, %v1566
  %v1569 = vtanh.pop %v1568
  %v1570 = vsub.f32 1.0, %v1558
  %1572 = vrot.lane.b32.xlu0 %v1569, 96
  %v1573 = vpop.permute.xlu0 %1572
  %v1575 = vmul.f32 %v1570, %v1573
  %v1576 = vmul.f32 %v1558, %v1365
  %v1577 = vadd.f32 %v1575, %v1576
  %1579 = vrot.lane.b32.xlu0 %v1577, 96
  %v1580 = vpop.permute.xlu0 %1579
  %s1582 = scalar_lea.vmem %s58, 2
  %1583 = vst.msk [vmem:[%s1582] sm:$0x3] %vm194, %v1580
  %s1584 = scalar_lea.vmem %s0, 14
  %v1585 = vld [vmem:[%s1584] sm:$0x3]
  %v1586 = vsel %vm87, %v1474, 0
  %1588 = vmatprep.subr.mxu0 0.0
  %1589 = vmatpush1.msra.mxu0 %v68
  %1590 = vmatprep.subr.mxu0 0.0
  %1591 = vmatpush1.msra.mxu0 %v69
  %1592 = vmatprep.subr.mxu0 0.0
  %1593 = vmatpush1.msra.mxu0 %v70
  %1594 = vmatprep.subr.mxu0 0.0
  %1595 = vmatpush1.msra.mxu0 %v71
  %1596 = vmatprep.subr.mxu0 0.0
  %1597 = vmatpush1.msra.mxu0 0.0
  %1598 = vmatprep.subr.mxu0 0.0
  %1599 = vmatpush1.msra.mxu0 0.0
  %1600 = vmatprep.subr.mxu0 0.0
  %1601 = vmatpush1.msra.mxu0 0.0
  %1602 = vmatprep.subr.mxu0 0.0
  %1603 = vmatpush1.msra.mxu0 0.0
  %1604 = vmatprep.subr.mxu0 0.0
  %1605 = vmatpush1.msra.mxu0 0.0
  %1606 = vmatprep.subr.mxu0 0.0
  %1607 = vmatpush1.msra.mxu0 0.0
  %1608 = vmatprep.subr.mxu0 0.0
  %1609 = vmatpush1.msra.mxu0 0.0
  %1610 = vmatprep.subr.mxu0 0.0
  %1611 = vmatpush1.msra.mxu0 0.0
  %1612 = vmatprep.subr.mxu0 0.0
  %1613 = vmatpush1.msra.mxu0 0.0
  %1614 = vmatprep.subr.mxu0 0.0
  %1615 = vmatpush1.msra.mxu0 0.0
  %1616 = vmatprep.subr.mxu0 0.0
  %1617 = vmatpush1.msra.mxu0 0.0
  %1618 = vmatprep.subr.mxu0 0.0
  %1619 = vmatpush1.msra.mxu0 0.0
  %1620 = vmatprep.subr.mxu0 0.0
  %1621 = vmatpush1.msra.mxu0 0.0
  %1622 = vmatprep.subr.mxu0 0.0
  %1623 = vmatpush1.msra.mxu0 0.0
  %1624 = vmatprep.subr.mxu0 0.0
  %1625 = vmatpush1.msra.mxu0 0.0
  %1626 = vmatprep.subr.mxu0 0.0
  %1627 = vmatpush1.msra.mxu0 0.0
  %1628 = vmatprep.subr.mxu0 0.0
  %1629 = vmatpush1.msra.mxu0 0.0
  %1630 = vmatprep.subr.mxu0 0.0
  %1631 = vmatpush1.msra.mxu0 0.0
  %1632 = vmatprep.subr.mxu0 0.0
  %1633 = vmatpush1.msra.mxu0 0.0
  %1634 = vmatprep.subr.mxu0 0.0
  %1635 = vmatpush1.msra.mxu0 0.0
  %1636 = vmatprep.subr.mxu0 0.0
  %1637 = vmatpush1.msra.mxu0 0.0
  %1638 = vmatprep.subr.mxu0 0.0
  %1639 = vmatpush1.msra.mxu0 0.0
  %1640 = vmatprep.subr.mxu0 0.0
  %1641 = vmatpush1.msra.mxu0 0.0
  %1642 = vmatprep.subr.mxu0 0.0
  %1643 = vmatpush1.msra.mxu0 0.0
  %1644 = vmatprep.subr.mxu0 0.0
  %1645 = vmatpush1.msra.mxu0 0.0
  %1646 = vmatprep.subr.mxu0 0.0
  %1647 = vmatpush1.msra.mxu0 0.0
  %1648 = vmatprep.subr.mxu0 0.0
  %1649 = vmatpush1.msra.mxu0 0.0
  %1650 = vmatprep.subr.mxu0 0.0
  %1651 = vmatpush1.msra.mxu0 0.0
  %1652 = vmatprep.mubr.f32.mxu0 0.0
  %1653 = vmatmul.mubr.f32.gmra.mrb[0].mxu0 %v1586
  %v1654 = vpop.f32.mrb[0].mxu0
  %v1655 = vadd.f32 %v85, %v1654
  %v1656 = vpop.f32.mrb[0].mxu0
  %1657 = vdwg.mxu0
  %v1658 = vadd.f32 %v1585, %v1655
  %v1659 = vxor.u32 %v1658, 2147483648
  %v1660 = vmul.f32 %v1659, 1.442695
  %v1661 = vpow.pop %v1660
  %v1662 = vadd.f32 %v1661, 1.0
  %v1663 = vrcp.pop %v1662
  %v1664 = vmul.f32 1.0, %v1663
  %1666 = vrot.lane.b32.xlu0 %v1655, 64
  %v1667 = vpop.permute.xlu0 %1666
  %v1669 = vmul.f32 %v1664, %v1667
  %1671 = vrot.lane.b32.xlu0 %v1669, 64
  %v1672 = vpop.permute.xlu0 %1671
  %v1674 = vadd.f32 %v1585, %v1672
  %v1675 = vtanh.pop %v1674
  %v1676 = vsub.f32 1.0, %v1664
  %1678 = vrot.lane.b32.xlu0 %v1675, 96
  %v1679 = vpop.permute.xlu0 %1678
  %v1681 = vmul.f32 %v1676, %v1679
  %v1682 = vmul.f32 %v1664, %v1471
  %v1683 = vadd.f32 %v1681, %v1682
  %1685 = vrot.lane.b32.xlu0 %v1683, 96
  %v1686 = vpop.permute.xlu0 %1685
  %s1688 = scalar_lea.vmem %s6, 14
  %1689 = vst.msk [vmem:[%s1688] sm:$0x3] %vm194, %v1686
  %v1690 = vld [vmem:[%s50] sm:$0x3]
  %v1691 = vsel %vm87, %v1580, 0
  %1693 = vmatprep.subr.mxu0 0.0
  %1694 = vmatpush1.msra.mxu0 %v72
  %1695 = vmatprep.subr.mxu0 0.0
  %1696 = vmatpush1.msra.mxu0 %v73
  %1697 = vmatprep.subr.mxu0 0.0
  %1698 = vmatpush1.msra.mxu0 %v74
  %1699 = vmatprep.subr.mxu0 0.0
  %1700 = vmatpush1.msra.mxu0 %v75
  %1701 = vmatprep.subr.mxu0 0.0
  %1702 = vmatpush1.msra.mxu0 0.0
  %1703 = vmatprep.subr.mxu0 0.0
  %1704 = vmatpush1.msra.mxu0 0.0
  %1705 = vmatprep.subr.mxu0 0.0
  %1706 = vmatpush1.msra.mxu0 0.0
  %1707 = vmatprep.subr.mxu0 0.0
  %1708 = vmatpush1.msra.mxu0 0.0
  %1709 = vmatprep.subr.mxu0 0.0
  %1710 = vmatpush1.msra.mxu0 0.0
  %1711 = vmatprep.subr.mxu0 0.0
  %1712 = vmatpush1.msra.mxu0 0.0
  %1713 = vmatprep.subr.mxu0 0.0
  %1714 = vmatpush1.msra.mxu0 0.0
  %1715 = vmatprep.subr.mxu0 0.0
  %1716 = vmatpush1.msra.mxu0 0.0
  %1717 = vmatprep.subr.mxu0 0.0
  %1718 = vmatpush1.msra.mxu0 0.0
  %1719 = vmatprep.subr.mxu0 0.0
  %1720 = vmatpush1.msra.mxu0 0.0
  %1721 = vmatprep.subr.mxu0 0.0
  %1722 = vmatpush1.msra.mxu0 0.0
  %1723 = vmatprep.subr.mxu0 0.0
  %1724 = vmatpush1.msra.mxu0 0.0
  %1725 = vmatprep.subr.mxu0 0.0
  %1726 = vmatpush1.msra.mxu0 0.0
  %1727 = vmatprep.subr.mxu0 0.0
  %1728 = vmatpush1.msra.mxu0 0.0
  %1729 = vmatprep.subr.mxu0 0.0
  %1730 = vmatpush1.msra.mxu0 0.0
  %1731 = vmatprep.subr.mxu0 0.0
  %1732 = vmatpush1.msra.mxu0 0.0
  %1733 = vmatprep.subr.mxu0 0.0
  %1734 = vmatpush1.msra.mxu0 0.0
  %1735 = vmatprep.subr.mxu0 0.0
  %1736 = vmatpush1.msra.mxu0 0.0
  %1737 = vmatprep.subr.mxu0 0.0
  %1738 = vmatpush1.msra.mxu0 0.0
  %1739 = vmatprep.subr.mxu0 0.0
  %1740 = vmatpush1.msra.mxu0 0.0
  %1741 = vmatprep.subr.mxu0 0.0
  %1742 = vmatpush1.msra.mxu0 0.0
  %1743 = vmatprep.subr.mxu0 0.0
  %1744 = vmatpush1.msra.mxu0 0.0
  %1745 = vmatprep.subr.mxu0 0.0
  %1746 = vmatpush1.msra.mxu0 0.0
  %1747 = vmatprep.subr.mxu0 0.0
  %1748 = vmatpush1.msra.mxu0 0.0
  %1749 = vmatprep.subr.mxu0 0.0
  %1750 = vmatpush1.msra.mxu0 0.0
  %1751 = vmatprep.subr.mxu0 0.0
  %1752 = vmatpush1.msra.mxu0 0.0
  %1753 = vmatprep.subr.mxu0 0.0
  %1754 = vmatpush1.msra.mxu0 0.0
  %1755 = vmatprep.subr.mxu0 0.0
  %1756 = vmatpush1.msra.mxu0 0.0
  %1757 = vmatprep.mubr.f32.mxu0 0.0
  %1758 = vmatmul.mubr.f32.gmra.mrb[0].mxu0 %v1691
  %v1759 = vpop.f32.mrb[0].mxu0
  %v1760 = vadd.f32 %v202, %v1759
  %v1761 = vpop.f32.mrb[0].mxu0
  %1762 = vdwg.mxu0
  %v1763 = vadd.f32 %v1690, %v1760
  %v1764 = vxor.u32 %v1763, 2147483648
  %v1765 = vmul.f32 %v1764, 1.442695
  %v1766 = vpow.pop %v1765
  %v1767 = vadd.f32 %v1766, 1.0
  %v1768 = vrcp.pop %v1767
  %v1769 = vmul.f32 1.0, %v1768
  %1771 = vrot.lane.b32.xlu0 %v1760, 64
  %v1772 = vpop.permute.xlu0 %1771
  %v1774 = vmul.f32 %v1769, %v1772
  %1776 = vrot.lane.b32.xlu0 %v1774, 64
  %v1777 = vpop.permute.xlu0 %1776
  %v1779 = vadd.f32 %v1690, %v1777
  %v1780 = vtanh.pop %v1779
  %v1781 = vsub.f32 1.0, %v1769
  %1783 = vrot.lane.b32.xlu0 %v1780, 96
  %v1784 = vpop.permute.xlu0 %1783
  %v1786 = vmul.f32 %v1781, %v1784
  %v1787 = vmul.f32 %v1769, %v1577
  %v1788 = vadd.f32 %v1786, %v1787
  %1790 = vrot.lane.b32.xlu0 %v1788, 96
  %v1791 = vpop.permute.xlu0 %1790
  %1793 = vst.msk [vmem:[%s58] sm:$0x3] %vm194, %v1791
  %1794 = vst.msk [vmem:[#allocation2] sm:$0x3] %vm194, %v1686
  %1795 = vst.msk [vmem:[#allocation3] sm:$0x3] %vm194, %v1791
  %s1796 = ssub.s32 0, 0
  %s1797 = smul.u32 8, %s1796
  %p1798 = scmp.lt.s32.totalorder %s1797, 7
  %s1799 = scalar_select %p1798, %s1797, 7
  %s1800 = smul.addr %s1799, 2
  %s1801 = scalar_lea.vmem %s7, %s1800
  // Predicated region
  $region30: #{gru_network_forward.9} parent=0 // pred_check
    _
  $region31: #{gru_network_forward.9} parent=0 // pred_check_branch
    %1803 = sbr.rel (0) target = $region33
  $region32: #{gru_network_forward.9} parent=0 // pred_region
    _
  $region33: #{gru_network_forward.9} parent=0 // pred_fallthru
    _
  // Predicated region
  $region34: #{gru_network_forward.9} parent=0 // pred_check
    _
  $region35: #{gru_network_forward.9} parent=0 // pred_check_branch
    %1805 = sbr.rel (0) target = $region37
  $region36: #{gru_network_forward.9} parent=0 // pred_region
    %s1806 = ssub.s32 0, 0
    %s1807 = smul.u32 8, %s1806
  $region37: #{gru_network_forward.9} parent=0 // pred_fallthru
    _
  // Predicated region
  $region38: #{gru_network_forward.9} parent=0 // pred_check
    _
  $region39: #{gru_network_forward.9} parent=0 // pred_check_branch
    %1809 = sbr.rel (0) target = $region41
  $region40: #{gru_network_forward.9} parent=0 // pred_region
    _
  $region41: #{gru_network_forward.9} parent=0 // pred_fallthru
    _
  // Predicated region
  $region42: #{gru_network_forward.9} parent=0 // pred_check
    _
  $region43: #{gru_network_forward.9} parent=0 // pred_check_branch
    %1811 = sbr.rel (0) target = $region45
  $region44: #{gru_network_forward.9} parent=0 // pred_region
    %s1812 = ssub.s32 0, 0
    %s1813 = smul.u32 8, %s1812
    %p1814 = scmp.lt.s32.totalorder %s1813, 7
    %s1815 = scalar_select %p1814, %s1813, 7
    %s1816 = smul.addr %s1815, 2
    %s1817 = scalar_lea.vmem %s7, %s1816
  $region45: #{gru_network_forward.9} parent=0 // pred_fallthru
    _

</llo_original>
